<compile_context>
chip_gen: v5e
topology: v5e:2x2
jax: 0.10.0
libtpu: 0.0.40
codegen_flags: <defaults>
</compile_context>

<pallas_src>
import functools
import math

import numpy as np
import jax
import jax.numpy as jnp
from jax.experimental import pallas as pl
from jax.experimental.pallas import tpu as pltpu

_EPS = 1e-5
_CIN = 166                      # Conv2d(166, ...) fixes the input channel count
_K = 9 * _CIN                   # 1494: im2col K at native channels
_KP = 1536                      # single K pad -> multiple of 128 (v5e) and 256 (v6e/v7x)
_C1 = 256                       # conv1 output channels
_C2 = 128                       # conv2 output channels
_VMEM_LIMIT = 32 * 1024 * 1024  # safe on v7x (64 MiB physical) as well as v5e/v6e


# --------------------------------- kernels -----------------------------------
def _conv1_kernel(cols_ref, w1_ref, y1_ref, stats_ref):
    """conv1 (3x3 as one MXU matmul over packed im2col) + per-tile BN1 partials."""
    y1 = jnp.dot(cols_ref[...], w1_ref[...], preferred_element_type=jnp.float32)
    y1_ref[...] = y1
    s = jnp.sum(y1, axis=0, keepdims=True)          # (1, C1)
    ss = jnp.sum(y1 * y1, axis=0, keepdims=True)    # (1, C1)
    stats_ref[...] = jnp.concatenate([s, ss], axis=0)[None]   # (1, 2, C1)


def _conv2_kernel(y1_ref, sc1_ref, sh1_ref, w2_ref, y2_ref, stats_ref):
    """bn1+relu (folded scale/shift) -> conv2 (1x1 matmul) + per-tile BN2 partials."""
    h1 = jnp.maximum(y1_ref[...] * sc1_ref[...] + sh1_ref[...], 0.0)
    y2 = jnp.dot(h1.astype(jnp.bfloat16), w2_ref[...],
                 preferred_element_type=jnp.float32)
    y2_ref[...] = y2
    s = jnp.sum(y2, axis=0, keepdims=True)
    ss = jnp.sum(y2 * y2, axis=0, keepdims=True)
    stats_ref[...] = jnp.concatenate([s, ss], axis=0)[None]   # (1, 2, C2)


def _bn2_pool_kernel(y2_ref, sc2_ref, sh2_ref, out_ref, *, tm, w):
    """bn2+relu then 2x2 max pool, entirely in registers (no VMEM scratch)."""
    h2 = jnp.maximum(y2_ref[...] * sc2_ref[...] + sh2_ref[...], 0.0)       # (tm, C2)
    # W direction: rows are (..., h, w) with w fastest -> adjacent row pairs.
    wmax = jnp.max(h2.reshape(tm // 2, 2, _C2), axis=1)                    # (tm//2, C2)
    # H direction: pairs of consecutive image rows (tile start is 2*W aligned).
    hmax = jnp.max(wmax.reshape(tm // (2 * w), 2, w // 2, _C2), axis=1)
    out_ref[...] = hmax.reshape(tm // 4, _C2)


# ------------------------------ wrapper helpers -------------------------------
def _fold_bn(stats, gamma, beta, count):
    """Reduce per-tile partials and fold BN into a (1,C) scale/shift pair."""
    s = jnp.sum(stats[:, 0, :], axis=0)
    ss = jnp.sum(stats[:, 1, :], axis=0)
    mean = s / count
    var = jnp.maximum(ss / count - mean * mean, 0.0)        # biased var, training mode
    rstd = jax.lax.rsqrt(var + _EPS)
    scale = gamma.reshape(-1) * rstd
    shift = beta.reshape(-1) - mean * scale
    return (scale.reshape(1, -1).astype(jnp.float32),
            shift.reshape(1, -1).astype(jnp.float32))


def _row_tile(n, h, w, target_rows=256):
    """Rows per tile: a multiple of 2*W (whole image-row pairs) dividing N*H*W."""
    pair = 2 * w
    pairs = (n * h) // 2
    best = 1
    for k in range(1, pairs + 1):
        if pairs % k == 0 and k * pair <= target_rows and (pairs // k >= 2 or pairs == 1):
            best = k
    return best * pair


# --------------------------------- forward ------------------------------------
def simple_cnn_branch_forward(x_nchw, params):
    """(N, 166, H, W) f32 -> (N, 128 * H//2 * W//2) f32 in PyTorch flatten order."""
    n, cin, h, w = x_nchw.shape
    assert cin == _CIN and h % 2 == 0 and w % 2 == 0, "expects Cin=166, even H/W"
    nhw = n * h * w
    tm = _row_tile(n, h, w)
    nt = nhw // tm

    # ---- layout prep (XLA, one time): NCHW -> NHWC, spatial zero-pad, im2col at
    # native 166 channels per tap, single K pad 1494 -> 1536, bf16.
    x = jnp.transpose(x_nchw, (0, 2, 3, 1)).astype(jnp.bfloat16)        # (N,H,W,166)
    xp = jnp.pad(x, ((0, 0), (1, 1), (1, 1), (0, 0)))
    cols = jnp.concatenate(
        [xp[:, dy:dy + h, dx:dx + w, :] for dy in range(3) for dx in range(3)],
        axis=-1).reshape(nhw, _K)
    cols = jnp.pad(cols, ((0, 0), (0, _KP - _K)))                       # (NHW, 1536) bf16

    # conv1 weight (3,3,166,256) HWIO -> (1494,256) tap-major (same ordering as
    # the cols concat above) -> pad K once -> bf16.
    w1m = jnp.pad(params["w1"].reshape(_K, _C1),
                  ((0, _KP - _K), (0, 0))).astype(jnp.bfloat16)
    w2m = params["w2"].astype(jnp.bfloat16)                             # (256, 128)
    # conv biases b1/b2 intentionally NOT passed: training-mode BN mean
    # subtraction cancels a per-channel constant bias exactly.

    cparams = pltpu.CompilerParams(dimension_semantics=("parallel",),
                                   vmem_limit_bytes=_VMEM_LIMIT)

    # ---- call 1: conv1 (one MXU matmul per row tile) + per-tile BN1 partials.
    y1, stats1 = pl.pallas_call(
        _conv1_kernel,
        grid=(nt,),
        in_specs=[pl.BlockSpec((tm, _KP), lambda t: (t, 0)),
                  pl.BlockSpec((_KP, _C1), lambda t: (0, 0))],   # resident weights
        out_specs=[pl.BlockSpec((tm, _C1), lambda t: (t, 0)),
                   pl.BlockSpec((1, 2, _C1), lambda t: (t, 0, 0))],
        out_shape=[jax.ShapeDtypeStruct((nhw, _C1), jnp.float32),
                   jax.ShapeDtypeStruct((nt, 2, _C1), jnp.float32)],
        compiler_params=cparams,
        cost_estimate=pl.CostEstimate(
            flops=2 * nhw * _KP * _C1, transcendentals=0,
            bytes_accessed=nhw * _KP * 2 + _KP * _C1 * 2 + nhw * _C1 * 4),
    )(cols, w1m)
    sc1, sh1 = _fold_bn(stats1, params["g1"], params["be1"], nhw)

    # ---- call 2: bn1+relu (folded) -> conv2 (1x1) + per-tile BN2 partials.
    y2, stats2 = pl.pallas_call(
        _conv2_kernel,
        grid=(nt,),
        in_specs=[pl.BlockSpec((tm, _C1), lambda t: (t, 0)),
                  pl.BlockSpec((1, _C1), lambda t: (0, 0)),
                  pl.BlockSpec((1, _C1), lambda t: (0, 0)),
                  pl.BlockSpec((_C1, _C2), lambda t: (0, 0))],
        out_specs=[pl.BlockSpec((tm, _C2), lambda t: (t, 0)),
                   pl.BlockSpec((1, 2, _C2), lambda t: (t, 0, 0))],
        out_shape=[jax.ShapeDtypeStruct((nhw, _C2), jnp.float32),
                   jax.ShapeDtypeStruct((nt, 2, _C2), jnp.float32)],
        compiler_params=cparams,
        cost_estimate=pl.CostEstimate(
            flops=2 * nhw * _C1 * _C2 + 4 * nhw * _C1, transcendentals=0,
            bytes_accessed=nhw * _C1 * 4 + _C1 * _C2 * 2 + nhw * _C2 * 4),
    )(y1, sc1, sh1, w2m)
    sc2, sh2 = _fold_bn(stats2, params["g2"], params["be2"], nhw)

    # ---- call 3: bn2+relu + 2x2 max-pool (in registers).
    pooled = pl.pallas_call(
        functools.partial(_bn2_pool_kernel, tm=tm, w=w),
        grid=(nt,),
        in_specs=[pl.BlockSpec((tm, _C2), lambda t: (t, 0)),
                  pl.BlockSpec((1, _C2), lambda t: (0, 0)),
                  pl.BlockSpec((1, _C2), lambda t: (0, 0))],
        out_specs=pl.BlockSpec((tm // 4, _C2), lambda t: (t, 0)),
        out_shape=jax.ShapeDtypeStruct((nhw // 4, _C2), jnp.float32),
        compiler_params=cparams,
        cost_estimate=pl.CostEstimate(
            flops=5 * nhw * _C2, transcendentals=0,
            bytes_accessed=nhw * _C2 * 4 + (nhw // 4) * _C2 * 4),
    )(y2, sc2, sh2)

    # NHWC pooled -> PyTorch's NCHW .view(N, -1) flatten order.
    pooled = pooled.reshape(n, h // 2, w // 2, _C2)
    return jnp.transpose(pooled, (0, 3, 1, 2)).reshape(n, -1)


# --------------------------- deterministic params -----------------------------
def init_params(key):
    ks = jax.random.split(key, 8)

    def u(k, shape, fan_in):
        bnd = 1.0 / math.sqrt(fan_in)
        return jax.random.uniform(k, shape, jnp.float32, minval=-bnd, maxval=bnd)

    return {
        # conv1: Conv2d(166, 256, 3, padding=1) — HWIO weight layout.
        "w1": u(ks[0], (3, 3, _CIN, _C1), _CIN * 9),
        "b1": u(ks[1], (_C1,), _CIN * 9),
        # bn1 (gamma/beta randomized so the affine path is actually exercised).
        "g1": jax.random.uniform(ks[2], (1, _C1), jnp.float32, 0.5, 1.5),
        "be1": jax.random.uniform(ks[3], (1, _C1), jnp.float32, -0.1, 0.1),
        # conv2: Conv2d(256, 128, 1).
        "w2": u(ks[4], (_C1, _C2), _C1),
        "b2": u(ks[5], (_C2,), _C1),
        "g2": jax.random.uniform(ks[6], (1, _C2), jnp.float32, 0.5, 1.5),
        "be2": jax.random.uniform(ks[7], (1, _C2), jnp.float32, -0.1, 0.1),
    }


# ------------------------------ pure-JAX reference -----------------------------
def ref_forward(x_nchw, p):
    dn = ("NCHW", "HWIO", "NCHW")
    hp = jax.lax.Precision.HIGHEST

    def conv(y, wgt, b):
        out = jax.lax.conv_general_dilated(y, wgt, (1, 1), "SAME",
                                           dimension_numbers=dn, precision=hp)
        return out + b.reshape(1, -1, 1, 1)

    def bn(y, g, bt):
        m = jnp.mean(y, axis=(0, 2, 3), keepdims=True)
        v = jnp.mean(jnp.square(y - m), axis=(0, 2, 3), keepdims=True)  # biased
        return (y - m) * jax.lax.rsqrt(v + _EPS) * g.reshape(1, -1, 1, 1) \
            + bt.reshape(1, -1, 1, 1)

    relu = lambda t: jnp.maximum(t, 0.0)
    h1 = relu(bn(conv(x_nchw, p["w1"], p["b1"]), p["g1"], p["be1"]))
    h2 = relu(bn(conv(h1, p["w2"].reshape(1, 1, _C1, _C2), p["b2"]), p["g2"], p["be2"]))
    pooled = jax.lax.reduce_window(h2, -jnp.inf, jax.lax.max,
                                   (1, 1, 2, 2), (1, 1, 2, 2), "VALID")
    return pooled.reshape(pooled.shape[0], -1)


if __name__ == "__main__":
    key = jax.random.PRNGKey(0)
    kx, kp = jax.random.split(key)
    n, cin, h, w = 2, _CIN, 16, 16          # Conv2d(166, ...) fixes Cin = 166
    x = jax.random.normal(kx, (n, cin, h, w), jnp.float32)
    params = init_params(kp)

    out = jax.block_until_ready(simple_cnn_branch_forward(x, params))
    assert out.shape == (n, _C2 * (h // 2) * (w // 2)), out.shape

    ref = jax.block_until_ready(ref_forward(x, params))
    if not np.allclose(np.asarray(out), np.asarray(ref), atol=5e-2, rtol=5e-2):
        err = float(jnp.max(jnp.abs(out - ref)))
        raise AssertionError(f"kernel/reference mismatch, max abs err={err}")

    print("KERNEL_OK")
</pallas_src>

<mosaic_0001>
module attributes {stable_mosaic.version = 11 : i64} {
  func.func @_conv1_kernel(%arg0: i32, %arg1: memref<256x1536xbf16, #tpu.memory_space<vmem>>, %arg2: memref<1536x256xbf16, #tpu.memory_space<vmem>>, %arg3: memref<256x256xf32, #tpu.memory_space<vmem>>, %arg4: memref<1x2x256xf32, #tpu.memory_space<vmem>>) attributes {dimension_semantics = [#tpu.dimension_semantics<parallel>], iteration_bounds = array<i64: 2>, scalar_prefetch = 0 : i64, scratch_operands = 0 : i64, tpu.core_type = #tpu.core_type<tc>, window_params = [{transform_indices = @transform_0, window_bounds = array<i64: 256, 1536>}, {pipeline_mode = #tpu.pipeline_mode<synchronous>, transform_indices = @transform_1, window_bounds = array<i64: 1536, 256>}, {transform_indices = @transform_2, window_bounds = array<i64: 256, 256>}, {transform_indices = @transform_3, window_bounds = array<i64: 1, 2, 256>}]} {
    %c0 = arith.constant 0 : index
    %c0_0 = arith.constant 0 : index
    %0 = vector.load %arg1[%c0, %c0_0] : memref<256x1536xbf16, #tpu.memory_space<vmem>>, vector<256x1536xbf16>
    %c0_1 = arith.constant 0 : index
    %c0_2 = arith.constant 0 : index
    %1 = vector.load %arg2[%c0_1, %c0_2] : memref<1536x256xbf16, #tpu.memory_space<vmem>>, vector<1536x256xbf16>
    %cst = arith.constant dense<0.000000e+00> : vector<256x256xf32>
    %2 = tpu.matmul %0, %1, %cst {dimension_numbers = #tpu.dot_dimension_numbers<[1], [0], [0], [1], [0, 0, 1, 1], [], []>} : vector<256x1536xbf16>, vector<1536x256xbf16>, vector<256x256xf32> -> vector<256x256xf32>
    %c0_3 = arith.constant 0 : index
    %c0_4 = arith.constant 0 : index
    %3 = vector.load %arg3[%c0_3, %c0_4] : memref<256x256xf32, #tpu.memory_space<vmem>>, vector<256x256xf32>
    tpu.vector_store %arg3[%c0_3, %c0_4], %2 {strides = array<i32>} : memref<256x256xf32, #tpu.memory_space<vmem>>, vector<256x256xf32>,
    %cst_5 = arith.constant dense<0.000000e+00> : vector<256xf32>
    %4 = vector.multi_reduction <add>, %2, %cst_5 [0] : vector<256x256xf32> to vector<256xf32>
    %5 = vector.shape_cast %4 : vector<256xf32> to vector<1x256xf32>
    %6 = arith.mulf %2, %2 : vector<256x256xf32>
    %cst_6 = arith.constant dense<0.000000e+00> : vector<256xf32>
    %7 = vector.multi_reduction <add>, %6, %cst_6 [0] : vector<256x256xf32> to vector<256xf32>
    %8 = vector.shape_cast %7 : vector<256xf32> to vector<1x256xf32>
    %9 = tpu.concatenate %5, %8 in 0 : vector<1x256xf32>, vector<1x256xf32> -> vector<2x256xf32>
    %10 = vector.shape_cast %9 : vector<2x256xf32> to vector<1x2x256xf32>
    %c0_7 = arith.constant 0 : index
    %c0_8 = arith.constant 0 : index
    %c0_9 = arith.constant 0 : index
    %11 = vector.load %arg4[%c0_7, %c0_8, %c0_9] : memref<1x2x256xf32, #tpu.memory_space<vmem>>, vector<1x2x256xf32>
    tpu.vector_store %arg4[%c0_7, %c0_8, %c0_9], %10 {strides = array<i32>} : memref<1x2x256xf32, #tpu.memory_space<vmem>>, vector<1x2x256xf32>,
    return
  }
  func.func @transform_0(%arg0: i32) -> (i32, i32) {
    %c0_i32 = arith.constant 0 : i32
    %c0_i32_0 = arith.constant 0 : i32
    return %arg0, %c0_i32 : i32, i32
  }
  func.func @transform_1(%arg0: i32) -> (i32, i32) {
    %c0_i32 = arith.constant 0 : i32
    %c0_i32_0 = arith.constant 0 : i32
    %c0_i32_1 = arith.constant 0 : i32
    return %c0_i32, %c0_i32_0 : i32, i32
  }
  func.func @transform_2(%arg0: i32) -> (i32, i32) {
    %c0_i32 = arith.constant 0 : i32
    %c0_i32_0 = arith.constant 0 : i32
    return %arg0, %c0_i32 : i32, i32
  }
  func.func @transform_3(%arg0: i32) -> (i32, i32, i32) {
    %c0_i32 = arith.constant 0 : i32
    %c0_i32_0 = arith.constant 0 : i32
    %c0_i32_1 = arith.constant 0 : i32
    return %arg0, %c0_i32, %c0_i32_0 : i32, i32, i32
  }
}

</mosaic_0001>

<llo_original>
// kernel: tpu_custom_call.1
$region0: #{tpu_custom_call.1}
  #allocation0 [shape = 'u32[]', space=smem, size = 0x4, offset = 0x4, fixed_abs, tag = 'smem constant byte address 0x4 - core index']
  #allocation1 [shape = 'u32[72,128]{1,0:T(1,128)}', space=vmem, size = 0x9000, scoped, tag = 'internal scratch']
  %s0 = inlined_call_operand.hbm [shape: bf16[512,1536], index: 0, kind: input, shape index: {}]
  %s1 = inlined_call_operand.hbm [shape: bf16[1536,256], index: 1, kind: input, shape index: {}]
  %s2 = inlined_call_operand.hbm [shape: f32[512,256], index: 2, kind: output, shape index: {0}]
  %s3 = inlined_call_operand.hbm [shape: f32[2,2,256], index: 3, kind: output, shape index: {1}]
  %4 = xla_tuple %s2, %s3
  %s5 = sld [smem:[#allocation0]]
  $region57: #{tpu_custom_call.1} parent=0
    _
  %s7 = ssub.s32 1, %s5
  %s8 = scalar_select 0, %s7, %s5
  $region1: #{tpu_custom_call.1} parent=0
    #allocation2 [shape = 'u8[1572864]{0}', space=vmem, size = 0x180000, scoped, tag = 'input window, operand 0']
    #allocation3 [shape = 's32[2]{0}', space=sflag, size = 0x8, scoped, tag = 'scoped memory for tpu_custom_call.1']
    #allocation4 [shape = 's32[2]{0}', space=sflag, size = 0x8, scoped, tag = 'scoped memory for tpu_custom_call.1']
    #allocation5 [shape = 'u8[786432]{0}', space=vmem, size = 0xc0000, scoped, tag = 'input window, operand 1, single buffered']
    #allocation6 [shape = 's32[1]{0}', space=sflag, size = 0x4, scoped, tag = 'scoped memory for tpu_custom_call.1']
    #allocation7 [shape = 'u8[524288]{0}', space=vmem, size = 0x80000, scoped, tag = 'output window, operand 0']
    #allocation8 [shape = 'u8[4096]{0}', space=vmem, size = 0x1000, scoped, tag = 'output window, operand 1']
    #allocation9 [shape = 's32[2]{0}', space=sflag, size = 0x8, scoped, tag = 'scoped memory for tpu_custom_call.1']
    %9 = vsyncpa [#allocation3], 0
    %s10 = scalar_lea.sflag [#allocation3], 1
    %11 = vsyncpa %s10, 0
    %12 = vsyncpa [#allocation6], 0
    %13 = vsyncpa [#allocation4], 0
    %s14 = scalar_lea.sflag [#allocation4], 1
    %15 = vsyncpa %s14, 0
    %16 = vsyncpa [#allocation9], 0
    %s17 = scalar_lea.sflag [#allocation9], 1
    %18 = vsyncpa %s17, 0
    loop: start=0, step=1, limit=4
    $region2: #{tpu_custom_call.1} parent=1 // loop_pre_header
      _
    $region3: #{tpu_custom_call.1} parent=1 // loop_header
      %s20 = sphi 0, %s24
      %p21 = scmp.ge.s32.totalorder %s20, 4
      %s30 = sphi 0, %s32
      %s33 = sphi 0, %s30
      %s34 = sphi 0, %s33
      %s50 = sphi 0, %s34
      %s54 = sphi 0, %s54
      %s56 = sphi 0, %s54
      %s57 = sphi 0, %s56
      %s71 = sphi 0, %s57
      %s77 = sphi 0, %s79
      %s80 = sphi 0, %s77
      %s81 = sphi 0, %s80
      %s97 = sphi 0, %s81
      %s103 = sphi 0, %s105
      %s106 = sphi 0, %s103
      %s107 = sphi 0, %s106
      %s123 = sphi 0, %s107
    $region4: #{tpu_custom_call.1} parent=1 // loop_header_branch
      %23 = sbr.rel (%p21) target = $region8
    $region5: #{tpu_custom_call.1} parent=1 // loop_body
      %s25 = ssub.s32 %s20, 1
      %s26 = ssub.s32 %s20, 2
      %s27 = sadd.s32 %s20, 1
      %s28 = ssub.s32 %s20, %s27
      %p29 = scmp.eq.s32.totalorder %s28, 0
      %s31 = sadd.s32 %s30, 1
      %s32 = scalar_select %p29, %s30, %s31
      %p35 = pneg %p29
      %p36 = scmp.eq.s32.totalorder %s20, 1
      %p37 = por %p35, %p36
      %p38 = scmp.ne.s32.totalorder %s30, %s33
      %p39 = scmp.eq.s32.totalorder %s20, 0
      %p40 = por %p38, %p39
      %p41 = scmp.ne.s32.totalorder %s30, %s33
      %p42 = scmp.eq.s32.totalorder %s25, 1
      %p43 = por %p41, %p42
      %p44 = scmp.ne.s32.totalorder %s33, %s34
      %p45 = scmp.eq.s32.totalorder %s25, 0
      %p46 = por %p44, %p45
      %p47 = scmp.ne.s32.totalorder %s33, %s34
      %p48 = scmp.eq.s32.totalorder %s26, 1
      %p49 = por %p47, %p48
      %p51 = scmp.ne.s32.totalorder %s34, %s50
      %p52 = scmp.eq.s32.totalorder %s26, 0
      %p53 = por %p51, %p52
      %s55 = sadd.s32 %s54, 1
      %p58 = scmp.eq.s32.totalorder %s20, 1
      %p59 = scmp.ne.s32.totalorder %s54, %s56
      %p60 = scmp.eq.s32.totalorder %s20, 0
      %p61 = por %p59, %p60
      %p62 = scmp.ne.s32.totalorder %s54, %s56
      %p63 = scmp.eq.s32.totalorder %s25, 1
      %p64 = por %p62, %p63
      %p65 = scmp.ne.s32.totalorder %s56, %s57
      %p66 = scmp.eq.s32.totalorder %s25, 0
      %p67 = por %p65, %p66
      %p68 = scmp.ne.s32.totalorder %s56, %s57
      %p69 = scmp.eq.s32.totalorder %s26, 1
      %p70 = por %p68, %p69
      %p72 = scmp.ne.s32.totalorder %s57, %s71
      %p73 = scmp.eq.s32.totalorder %s26, 0
      %p74 = por %p72, %p73
      %s75 = ssub.s32 %s20, %s27
      %p76 = scmp.eq.s32.totalorder %s75, 0
      %s78 = sadd.s32 %s77, 1
      %s79 = scalar_select %p76, %s77, %s78
      %p82 = pneg %p76
      %p83 = scmp.eq.s32.totalorder %s20, 1
      %p84 = por %p82, %p83
      %p85 = scmp.ne.s32.totalorder %s77, %s80
      %p86 = scmp.eq.s32.totalorder %s20, 0
      %p87 = por %p85, %p86
      %p88 = scmp.ne.s32.totalorder %s77, %s80
      %p89 = scmp.eq.s32.totalorder %s25, 1
      %p90 = por %p88, %p89
      %p91 = scmp.ne.s32.totalorder %s80, %s81
      %p92 = scmp.eq.s32.totalorder %s25, 0
      %p93 = por %p91, %p92
      %p94 = scmp.ne.s32.totalorder %s80, %s81
      %p95 = scmp.eq.s32.totalorder %s26, 1
      %p96 = por %p94, %p95
      %p98 = scmp.ne.s32.totalorder %s81, %s97
      %p99 = scmp.eq.s32.totalorder %s26, 0
      %p100 = por %p98, %p99
      %s101 = ssub.s32 %s20, %s27
      %p102 = scmp.eq.s32.totalorder %s101, 0
      %s104 = sadd.s32 %s103, 1
      %s105 = scalar_select %p102, %s103, %s104
      %p108 = pneg %p102
      %p109 = scmp.eq.s32.totalorder %s20, 1
      %p110 = por %p108, %p109
      %p111 = scmp.ne.s32.totalorder %s103, %s106
      %p112 = scmp.eq.s32.totalorder %s20, 0
      %p113 = por %p111, %p112
      %p114 = scmp.ne.s32.totalorder %s103, %s106
      %p115 = scmp.eq.s32.totalorder %s25, 1
      %p116 = por %p114, %p115
      %p117 = scmp.ne.s32.totalorder %s106, %s107
      %p118 = scmp.eq.s32.totalorder %s25, 0
      %p119 = por %p117, %p118
      %p120 = scmp.ne.s32.totalorder %s106, %s107
      %p121 = scmp.eq.s32.totalorder %s26, 1
      %p122 = por %p120, %p121
      %p124 = scmp.ne.s32.totalorder %s107, %s123
      %p125 = scmp.eq.s32.totalorder %s26, 0
      %p126 = por %p124, %p125
      %p127 = scmp.le.s32.totalorder 1, %s20
      %p128 = scmp.lt.s32.totalorder %s20, 3
      %p129 = pnand %p127, %p128
      %p130 = pneg %p129
      // Predicated region
      $region9: #{tpu_custom_call.1} parent=5 // pred_check
        _
      $region10: #{tpu_custom_call.1} parent=5 // pred_check_branch
        %132 = sbr.rel (%p129) target = $region12
      $region11: #{tpu_custom_call.1} parent=5 // pred_region
        %s133 = ssub.s32 %s20, 1
        // Predicated region
        $region13: #{tpu_custom_call.1} parent=11 // pred_check
          %p134 = pneg %p67
        $region14: #{tpu_custom_call.1} parent=11 // pred_check_branch
          %136 = sbr.rel (%p134) target = $region16
        $region15: #{tpu_custom_call.1} parent=11 // pred_region
          %138 = vsyncadd [#allocation6], 0
          %s139 = sshll.u32 %s1, 4
          %s140 = int_to_ptr.hbm [resolvable:$true] %s139
          %s141 = sshll.u32 [#allocation5], 4
          %s142 = int_to_ptr.vmem [resolvable:$true] %s141
          %147 = dma.hbm_to_vmem [thread:$0]  %s140, 24576, %s142, [#allocation6], 128, 128, 8
        $region16: #{tpu_custom_call.1} parent=11 // pred_fallthru
          _
      $region12: #{tpu_custom_call.1} parent=5 // pred_fallthru
        _
      %p148 = scmp.lt.s32.totalorder %s20, 2
      // Predicated region
      $region17: #{tpu_custom_call.1} parent=5 // pred_check
        %p149 = pneg %p148
      $region18: #{tpu_custom_call.1} parent=5 // pred_check_branch
        %151 = sbr.rel (%p149) target = $region20
      $region19: #{tpu_custom_call.1} parent=5 // pred_region
        // Predicated region
        $region21: #{tpu_custom_call.1} parent=19 // pred_check
          %p152 = pneg %p40
        $region22: #{tpu_custom_call.1} parent=19 // pred_check_branch
          %154 = sbr.rel (%p152) target = $region24
        $region23: #{tpu_custom_call.1} parent=19 // pred_region
          %s155 = sand.u32 %s30, 1
          %s156 = scalar_lea.sflag [#allocation3], %s155
          %s157 = sand.u32 %s30, 1
          %s158 = smul.addr %s157, 1536
          %s159 = scalar_lea.vmem [#allocation2], %s158
          %s160 = smul.u32 32, %s20
          %162 = vsyncadd %s156, 0
          %s163 = smul.addr %s160, 12
          %s164 = smul.addr %s163, 4
          %s165 = scalar_lea.hbm %s0, %s164
          %s166 = sshll.u32 %s165, 4
          %s167 = int_to_ptr.hbm [resolvable:$true] %s166
          %s168 = sshll.u32 %s159, 4
          %s169 = int_to_ptr.vmem [resolvable:$true] %s168
          %174 = dma.hbm_to_vmem [thread:$0]  %s167, 24576, %s169, %s156, 768, 768, 48
        $region24: #{tpu_custom_call.1} parent=19 // pred_fallthru
          _
      $region20: #{tpu_custom_call.1} parent=5 // pred_fallthru
        _
      %p175 = scmp.le.s32.totalorder 1, %s20
      %p176 = scmp.lt.s32.totalorder %s20, 3
      %p177 = pnand %p175, %p176
      %p178 = pneg %p177
      // Predicated region
      $region25: #{tpu_custom_call.1} parent=5 // pred_check
        _
      $region26: #{tpu_custom_call.1} parent=5 // pred_check_branch
        %180 = sbr.rel (%p177) target = $region28
      $region27: #{tpu_custom_call.1} parent=5 // pred_region
        %s181 = ssub.s32 %s20, 1
        %s182 = sand.u32 %s33, 1
        %s183 = scalar_lea.sflag [#allocation3], %s182
        %s184 = sand.u32 %s33, 1
        %s185 = smul.addr %s184, 1536
        %s186 = scalar_lea.vmem [#allocation2], %s185
        // Predicated region
        $region29: #{tpu_custom_call.1} parent=27 // pred_check
          %p187 = pneg %p46
        $region30: #{tpu_custom_call.1} parent=27 // pred_check_branch
          %189 = sbr.rel (%p187) target = $region32
        $region31: #{tpu_custom_call.1} parent=27 // pred_region
          %191 = dma.done %s183, 24576
        $region32: #{tpu_custom_call.1} parent=27 // pred_fallthru
          _
        // Predicated region
        $region33: #{tpu_custom_call.1} parent=27 // pred_check
          %p192 = pneg %p67
        $region34: #{tpu_custom_call.1} parent=27 // pred_check_branch
          %194 = sbr.rel (%p192) target = $region36
        $region35: #{tpu_custom_call.1} parent=27 // pred_region
          %196 = dma.done [#allocation6], 24576
        $region36: #{tpu_custom_call.1} parent=27 // pred_fallthru
          _
        %s197 = sand.u32 %s33, 1
        %s198 = scalar_lea.sflag [#allocation3], %s197
        %s199 = sand.u32 %s33, 1
        %s200 = smul.addr %s199, 1536
        %s201 = scalar_lea.vmem [#allocation2], %s200
        %p202 = pneg %p46
        %p203 = pneg %p43
        %p204 = pneg %p67
        %p205 = pneg %p64
        %p206 = pneg %p93
        %p207 = pneg %p90
        %s208 = sand.u32 %s80, 1
        %s209 = scalar_lea.sflag [#allocation4], %s208
        %s210 = sand.u32 %s80, 1
        %s211 = smul.addr %s210, 512
        %s212 = scalar_lea.vmem [#allocation7], %s211
        %p213 = pneg %p119
        %p214 = pneg %p116
        %s215 = sand.u32 %s106, 1
        %s216 = scalar_lea.sflag [#allocation9], %s215
        %s217 = sand.u32 %s106, 1
        %s218 = smul.addr %s217, 4
        %s219 = scalar_lea.vmem [#allocation8], %s218
        %s220 = smul.u32 32, %s25
        %s221 = smul.u32 32, %s25
        %v222 = vld [vmem:[%s186] sm:$0xff]
        %v223 = vld [vmem:[%s186 + $0x8] sm:$0xff]
        %v224 = vld [vmem:[%s186 + $0x10] sm:$0xff]
        %v225 = vld [vmem:[%s186 + $0x18] sm:$0xff]
        %v226 = vld [vmem:[%s186 + $0x20] sm:$0xff]
        %v227 = vld [vmem:[%s186 + $0x28] sm:$0xff]
        %v228 = vld [vmem:[%s186 + $0x30] sm:$0xff]
        %v229 = vld [vmem:[%s186 + $0x38] sm:$0xff]
        %v230 = vld [vmem:[%s186 + $0x40] sm:$0xff]
        %v231 = vld [vmem:[%s186 + $0x48] sm:$0xff]
        %v232 = vld [vmem:[%s186 + $0x50] sm:$0xff]
        %v233 = vld [vmem:[%s186 + $0x58] sm:$0xff]
        %v234 = vld [vmem:[%s186 + $0x60] sm:$0xff]
        %v235 = vld [vmem:[%s186 + $0x68] sm:$0xff]
        %v236 = vld [vmem:[%s186 + $0x70] sm:$0xff]
        %v237 = vld [vmem:[%s186 + $0x78] sm:$0xff]
        %v238 = vld [vmem:[%s186 + $0x80] sm:$0xff]
        %v239 = vld [vmem:[%s186 + $0x88] sm:$0xff]
        %v240 = vld [vmem:[%s186 + $0x90] sm:$0xff]
        %v241 = vld [vmem:[%s186 + $0x98] sm:$0xff]
        %v242 = vld [vmem:[%s186 + $0xa0] sm:$0xff]
        %v243 = vld [vmem:[%s186 + $0xa8] sm:$0xff]
        %v244 = vld [vmem:[%s186 + $0xb0] sm:$0xff]
        %v245 = vld [vmem:[%s186 + $0xb8] sm:$0xff]
        %v246 = vld [vmem:[%s186 + $0xc0] sm:$0xff]
        %v247 = vld [vmem:[%s186 + $0xc8] sm:$0xff]
        %v248 = vld [vmem:[%s186 + $0xd0] sm:$0xff]
        %v249 = vld [vmem:[%s186 + $0xd8] sm:$0xff]
        %v250 = vld [vmem:[%s186 + $0xe0] sm:$0xff]
        %v251 = vld [vmem:[%s186 + $0xe8] sm:$0xff]
        %v252 = vld [vmem:[%s186 + $0xf0] sm:$0xff]
        %v253 = vld [vmem:[%s186 + $0xf8] sm:$0xff]
        %v254 = vld [vmem:[%s186 + $0x100] sm:$0xff]
        %v255 = vld [vmem:[%s186 + $0x108] sm:$0xff]
        %v256 = vld [vmem:[%s186 + $0x110] sm:$0xff]
        %v257 = vld [vmem:[%s186 + $0x118] sm:$0xff]
        %v258 = vld [vmem:[%s186 + $0x120] sm:$0xff]
        %v259 = vld [vmem:[%s186 + $0x128] sm:$0xff]
        %v260 = vld [vmem:[%s186 + $0x130] sm:$0xff]
        %v261 = vld [vmem:[%s186 + $0x138] sm:$0xff]
        %v262 = vld [vmem:[%s186 + $0x140] sm:$0xff]
        %v263 = vld [vmem:[%s186 + $0x148] sm:$0xff]
        %v264 = vld [vmem:[%s186 + $0x150] sm:$0xff]
        %v265 = vld [vmem:[%s186 + $0x158] sm:$0xff]
        %v266 = vld [vmem:[%s186 + $0x160] sm:$0xff]
        %v267 = vld [vmem:[%s186 + $0x168] sm:$0xff]
        %v268 = vld [vmem:[%s186 + $0x170] sm:$0xff]
        %v269 = vld [vmem:[%s186 + $0x178] sm:$0xff]
        %v270 = vld [vmem:[%s186 + $0x180] sm:$0xff]
        %v271 = vld [vmem:[%s186 + $0x188] sm:$0xff]
        %v272 = vld [vmem:[%s186 + $0x190] sm:$0xff]
        %v273 = vld [vmem:[%s186 + $0x198] sm:$0xff]
        %v274 = vld [vmem:[%s186 + $0x1a0] sm:$0xff]
        %v275 = vld [vmem:[%s186 + $0x1a8] sm:$0xff]
        %v276 = vld [vmem:[%s186 + $0x1b0] sm:$0xff]
        %v277 = vld [vmem:[%s186 + $0x1b8] sm:$0xff]
        %v278 = vld [vmem:[%s186 + $0x1c0] sm:$0xff]
        %v279 = vld [vmem:[%s186 + $0x1c8] sm:$0xff]
        %v280 = vld [vmem:[%s186 + $0x1d0] sm:$0xff]
        %v281 = vld [vmem:[%s186 + $0x1d8] sm:$0xff]
        %v282 = vld [vmem:[%s186 + $0x1e0] sm:$0xff]
        %v283 = vld [vmem:[%s186 + $0x1e8] sm:$0xff]
        %v284 = vld [vmem:[%s186 + $0x1f0] sm:$0xff]
        %v285 = vld [vmem:[%s186 + $0x1f8] sm:$0xff]
        %v286 = vld [vmem:[%s186 + $0x200] sm:$0xff]
        %v287 = vld [vmem:[%s186 + $0x208] sm:$0xff]
        %v288 = vld [vmem:[%s186 + $0x210] sm:$0xff]
        %v289 = vld [vmem:[%s186 + $0x218] sm:$0xff]
        %v290 = vld [vmem:[%s186 + $0x220] sm:$0xff]
        %v291 = vld [vmem:[%s186 + $0x228] sm:$0xff]
        %v292 = vld [vmem:[%s186 + $0x230] sm:$0xff]
        %v293 = vld [vmem:[%s186 + $0x238] sm:$0xff]
        %v294 = vld [vmem:[%s186 + $0x240] sm:$0xff]
        %v295 = vld [vmem:[%s186 + $0x248] sm:$0xff]
        %v296 = vld [vmem:[%s186 + $0x250] sm:$0xff]
        %v297 = vld [vmem:[%s186 + $0x258] sm:$0xff]
        %v298 = vld [vmem:[%s186 + $0x260] sm:$0xff]
        %v299 = vld [vmem:[%s186 + $0x268] sm:$0xff]
        %v300 = vld [vmem:[%s186 + $0x270] sm:$0xff]
        %v301 = vld [vmem:[%s186 + $0x278] sm:$0xff]
        %v302 = vld [vmem:[%s186 + $0x280] sm:$0xff]
        %v303 = vld [vmem:[%s186 + $0x288] sm:$0xff]
        %v304 = vld [vmem:[%s186 + $0x290] sm:$0xff]
        %v305 = vld [vmem:[%s186 + $0x298] sm:$0xff]
        %v306 = vld [vmem:[%s186 + $0x2a0] sm:$0xff]
        %v307 = vld [vmem:[%s186 + $0x2a8] sm:$0xff]
        %v308 = vld [vmem:[%s186 + $0x2b0] sm:$0xff]
        %v309 = vld [vmem:[%s186 + $0x2b8] sm:$0xff]
        %v310 = vld [vmem:[%s186 + $0x2c0] sm:$0xff]
        %v311 = vld [vmem:[%s186 + $0x2c8] sm:$0xff]
        %v312 = vld [vmem:[%s186 + $0x2d0] sm:$0xff]
        %v313 = vld [vmem:[%s186 + $0x2d8] sm:$0xff]
        %v314 = vld [vmem:[%s186 + $0x2e0] sm:$0xff]
        %v315 = vld [vmem:[%s186 + $0x2e8] sm:$0xff]
        %v316 = vld [vmem:[%s186 + $0x2f0] sm:$0xff]
        %v317 = vld [vmem:[%s186 + $0x2f8] sm:$0xff]
        %v318 = vld [vmem:[%s186 + $0x300] sm:$0xff]
        %v319 = vld [vmem:[%s186 + $0x308] sm:$0xff]
        %v320 = vld [vmem:[%s186 + $0x310] sm:$0xff]
        %v321 = vld [vmem:[%s186 + $0x318] sm:$0xff]
        %v322 = vld [vmem:[%s186 + $0x320] sm:$0xff]
        %v323 = vld [vmem:[%s186 + $0x328] sm:$0xff]
        %v324 = vld [vmem:[%s186 + $0x330] sm:$0xff]
        %v325 = vld [vmem:[%s186 + $0x338] sm:$0xff]
        %v326 = vld [vmem:[%s186 + $0x340] sm:$0xff]
        %v327 = vld [vmem:[%s186 + $0x348] sm:$0xff]
        %v328 = vld [vmem:[%s186 + $0x350] sm:$0xff]
        %v329 = vld [vmem:[%s186 + $0x358] sm:$0xff]
        %v330 = vld [vmem:[%s186 + $0x360] sm:$0xff]
        %v331 = vld [vmem:[%s186 + $0x368] sm:$0xff]
        %v332 = vld [vmem:[%s186 + $0x370] sm:$0xff]
        %v333 = vld [vmem:[%s186 + $0x378] sm:$0xff]
        %v334 = vld [vmem:[%s186 + $0x380] sm:$0xff]
        %v335 = vld [vmem:[%s186 + $0x388] sm:$0xff]
        %v336 = vld [vmem:[%s186 + $0x390] sm:$0xff]
        %v337 = vld [vmem:[%s186 + $0x398] sm:$0xff]
        %v338 = vld [vmem:[%s186 + $0x3a0] sm:$0xff]
        %v339 = vld [vmem:[%s186 + $0x3a8] sm:$0xff]
        %v340 = vld [vmem:[%s186 + $0x3b0] sm:$0xff]
        %v341 = vld [vmem:[%s186 + $0x3b8] sm:$0xff]
        %v342 = vld [vmem:[%s186 + $0x3c0] sm:$0xff]
        %v343 = vld [vmem:[%s186 + $0x3c8] sm:$0xff]
        %v344 = vld [vmem:[%s186 + $0x3d0] sm:$0xff]
        %v345 = vld [vmem:[%s186 + $0x3d8] sm:$0xff]
        %v346 = vld [vmem:[%s186 + $0x3e0] sm:$0xff]
        %v347 = vld [vmem:[%s186 + $0x3e8] sm:$0xff]
        %v348 = vld [vmem:[%s186 + $0x3f0] sm:$0xff]
        %v349 = vld [vmem:[%s186 + $0x3f8] sm:$0xff]
        %v350 = vld [vmem:[%s186 + $0x400] sm:$0xff]
        %v351 = vld [vmem:[%s186 + $0x408] sm:$0xff]
        %v352 = vld [vmem:[%s186 + $0x410] sm:$0xff]
        %v353 = vld [vmem:[%s186 + $0x418] sm:$0xff]
        %v354 = vld [vmem:[%s186 + $0x420] sm:$0xff]
        %v355 = vld [vmem:[%s186 + $0x428] sm:$0xff]
        %v356 = vld [vmem:[%s186 + $0x430] sm:$0xff]
        %v357 = vld [vmem:[%s186 + $0x438] sm:$0xff]
        %v358 = vld [vmem:[%s186 + $0x440] sm:$0xff]
        %v359 = vld [vmem:[%s186 + $0x448] sm:$0xff]
        %v360 = vld [vmem:[%s186 + $0x450] sm:$0xff]
        %v361 = vld [vmem:[%s186 + $0x458] sm:$0xff]
        %v362 = vld [vmem:[%s186 + $0x460] sm:$0xff]
        %v363 = vld [vmem:[%s186 + $0x468] sm:$0xff]
        %v364 = vld [vmem:[%s186 + $0x470] sm:$0xff]
        %v365 = vld [vmem:[%s186 + $0x478] sm:$0xff]
        %v366 = vld [vmem:[%s186 + $0x480] sm:$0xff]
        %v367 = vld [vmem:[%s186 + $0x488] sm:$0xff]
        %v368 = vld [vmem:[%s186 + $0x490] sm:$0xff]
        %v369 = vld [vmem:[%s186 + $0x498] sm:$0xff]
        %v370 = vld [vmem:[%s186 + $0x4a0] sm:$0xff]
        %v371 = vld [vmem:[%s186 + $0x4a8] sm:$0xff]
        %v372 = vld [vmem:[%s186 + $0x4b0] sm:$0xff]
        %v373 = vld [vmem:[%s186 + $0x4b8] sm:$0xff]
        %v374 = vld [vmem:[%s186 + $0x4c0] sm:$0xff]
        %v375 = vld [vmem:[%s186 + $0x4c8] sm:$0xff]
        %v376 = vld [vmem:[%s186 + $0x4d0] sm:$0xff]
        %v377 = vld [vmem:[%s186 + $0x4d8] sm:$0xff]
        %v378 = vld [vmem:[%s186 + $0x4e0] sm:$0xff]
        %v379 = vld [vmem:[%s186 + $0x4e8] sm:$0xff]
        %v380 = vld [vmem:[%s186 + $0x4f0] sm:$0xff]
        %v381 = vld [vmem:[%s186 + $0x4f8] sm:$0xff]
        %v382 = vld [vmem:[%s186 + $0x500] sm:$0xff]
        %v383 = vld [vmem:[%s186 + $0x508] sm:$0xff]
        %v384 = vld [vmem:[%s186 + $0x510] sm:$0xff]
        %v385 = vld [vmem:[%s186 + $0x518] sm:$0xff]
        %v386 = vld [vmem:[%s186 + $0x520] sm:$0xff]
        %v387 = vld [vmem:[%s186 + $0x528] sm:$0xff]
        %v388 = vld [vmem:[%s186 + $0x530] sm:$0xff]
        %v389 = vld [vmem:[%s186 + $0x538] sm:$0xff]
        %v390 = vld [vmem:[%s186 + $0x540] sm:$0xff]
        %v391 = vld [vmem:[%s186 + $0x548] sm:$0xff]
        %v392 = vld [vmem:[%s186 + $0x550] sm:$0xff]
        %v393 = vld [vmem:[%s186 + $0x558] sm:$0xff]
        %v394 = vld [vmem:[%s186 + $0x560] sm:$0xff]
        %v395 = vld [vmem:[%s186 + $0x568] sm:$0xff]
        %v396 = vld [vmem:[%s186 + $0x570] sm:$0xff]
        %v397 = vld [vmem:[%s186 + $0x578] sm:$0xff]
        %v398 = vld [vmem:[%s186 + $0x580] sm:$0xff]
        %v399 = vld [vmem:[%s186 + $0x588] sm:$0xff]
        %v400 = vld [vmem:[%s186 + $0x590] sm:$0xff]
        %v401 = vld [vmem:[%s186 + $0x598] sm:$0xff]
        %v402 = vld [vmem:[%s186 + $0x5a0] sm:$0xff]
        %v403 = vld [vmem:[%s186 + $0x5a8] sm:$0xff]
        %v404 = vld [vmem:[%s186 + $0x5b0] sm:$0xff]
        %v405 = vld [vmem:[%s186 + $0x5b8] sm:$0xff]
        %v406 = vld [vmem:[%s186 + $0x5c0] sm:$0xff]
        %v407 = vld [vmem:[%s186 + $0x5c8] sm:$0xff]
        %v408 = vld [vmem:[%s186 + $0x5d0] sm:$0xff]
        %v409 = vld [vmem:[%s186 + $0x5d8] sm:$0xff]
        %v410 = vld [vmem:[%s186 + $0x5e0] sm:$0xff]
        %v411 = vld [vmem:[%s186 + $0x5e8] sm:$0xff]
        %v412 = vld [vmem:[%s186 + $0x5f0] sm:$0xff]
        %v413 = vld [vmem:[%s186 + $0x5f8] sm:$0xff]
        %v414 = vld [vmem:[#allocation5] sm:$0xff]
        %v415 = vld [vmem:[#allocation5 + $0x8] sm:$0xff]
        %v416 = vld [vmem:[#allocation5 + $0x10] sm:$0xff]
        %v417 = vld [vmem:[#allocation5 + $0x18] sm:$0xff]
        %v418 = vld [vmem:[#allocation5 + $0x20] sm:$0xff]
        %v419 = vld [vmem:[#allocation5 + $0x28] sm:$0xff]
        %v420 = vld [vmem:[#allocation5 + $0x30] sm:$0xff]
        %v421 = vld [vmem:[#allocation5 + $0x38] sm:$0xff]
        %v422 = vld [vmem:[#allocation5 + $0x40] sm:$0xff]
        %v423 = vld [vmem:[#allocation5 + $0x48] sm:$0xff]
        %v424 = vld [vmem:[#allocation5 + $0x50] sm:$0xff]
        %v425 = vld [vmem:[#allocation5 + $0x58] sm:$0xff]
        %v426 = vld [vmem:[#allocation5 + $0x60] sm:$0xff]
        %v427 = vld [vmem:[#allocation5 + $0x68] sm:$0xff]
        %v428 = vld [vmem:[#allocation5 + $0x70] sm:$0xff]
        %v429 = vld [vmem:[#allocation5 + $0x78] sm:$0xff]
        %v430 = vld [vmem:[#allocation5 + $0x80] sm:$0xff]
        %v431 = vld [vmem:[#allocation5 + $0x88] sm:$0xff]
        %v432 = vld [vmem:[#allocation5 + $0x90] sm:$0xff]
        %v433 = vld [vmem:[#allocation5 + $0x98] sm:$0xff]
        %v434 = vld [vmem:[#allocation5 + $0xa0] sm:$0xff]
        %v435 = vld [vmem:[#allocation5 + $0xa8] sm:$0xff]
        %v436 = vld [vmem:[#allocation5 + $0xb0] sm:$0xff]
        %v437 = vld [vmem:[#allocation5 + $0xb8] sm:$0xff]
        %v438 = vld [vmem:[#allocation5 + $0xc0] sm:$0xff]
        %v439 = vld [vmem:[#allocation5 + $0xc8] sm:$0xff]
        %v440 = vld [vmem:[#allocation5 + $0xd0] sm:$0xff]
        %v441 = vld [vmem:[#allocation5 + $0xd8] sm:$0xff]
        %v442 = vld [vmem:[#allocation5 + $0xe0] sm:$0xff]
        %v443 = vld [vmem:[#allocation5 + $0xe8] sm:$0xff]
        %v444 = vld [vmem:[#allocation5 + $0xf0] sm:$0xff]
        %v445 = vld [vmem:[#allocation5 + $0xf8] sm:$0xff]
        %v446 = vld [vmem:[#allocation5 + $0x100] sm:$0xff]
        %v447 = vld [vmem:[#allocation5 + $0x108] sm:$0xff]
        %v448 = vld [vmem:[#allocation5 + $0x110] sm:$0xff]
        %v449 = vld [vmem:[#allocation5 + $0x118] sm:$0xff]
        %v450 = vld [vmem:[#allocation5 + $0x120] sm:$0xff]
        %v451 = vld [vmem:[#allocation5 + $0x128] sm:$0xff]
        %v452 = vld [vmem:[#allocation5 + $0x130] sm:$0xff]
        %v453 = vld [vmem:[#allocation5 + $0x138] sm:$0xff]
        %v454 = vld [vmem:[#allocation5 + $0x140] sm:$0xff]
        %v455 = vld [vmem:[#allocation5 + $0x148] sm:$0xff]
        %v456 = vld [vmem:[#allocation5 + $0x150] sm:$0xff]
        %v457 = vld [vmem:[#allocation5 + $0x158] sm:$0xff]
        %v458 = vld [vmem:[#allocation5 + $0x160] sm:$0xff]
        %v459 = vld [vmem:[#allocation5 + $0x168] sm:$0xff]
        %v460 = vld [vmem:[#allocation5 + $0x170] sm:$0xff]
        %v461 = vld [vmem:[#allocation5 + $0x178] sm:$0xff]
        %v462 = vld [vmem:[#allocation5 + $0x180] sm:$0xff]
        %v463 = vld [vmem:[#allocation5 + $0x188] sm:$0xff]
        %v464 = vld [vmem:[#allocation5 + $0x190] sm:$0xff]
        %v465 = vld [vmem:[#allocation5 + $0x198] sm:$0xff]
        %v466 = vld [vmem:[#allocation5 + $0x1a0] sm:$0xff]
        %v467 = vld [vmem:[#allocation5 + $0x1a8] sm:$0xff]
        %v468 = vld [vmem:[#allocation5 + $0x1b0] sm:$0xff]
        %v469 = vld [vmem:[#allocation5 + $0x1b8] sm:$0xff]
        %v470 = vld [vmem:[#allocation5 + $0x1c0] sm:$0xff]
        %v471 = vld [vmem:[#allocation5 + $0x1c8] sm:$0xff]
        %v472 = vld [vmem:[#allocation5 + $0x1d0] sm:$0xff]
        %v473 = vld [vmem:[#allocation5 + $0x1d8] sm:$0xff]
        %v474 = vld [vmem:[#allocation5 + $0x1e0] sm:$0xff]
        %v475 = vld [vmem:[#allocation5 + $0x1e8] sm:$0xff]
        %v476 = vld [vmem:[#allocation5 + $0x1f0] sm:$0xff]
        %v477 = vld [vmem:[#allocation5 + $0x1f8] sm:$0xff]
        %v478 = vld [vmem:[#allocation5 + $0x200] sm:$0xff]
        %v479 = vld [vmem:[#allocation5 + $0x208] sm:$0xff]
        %v480 = vld [vmem:[#allocation5 + $0x210] sm:$0xff]
        %v481 = vld [vmem:[#allocation5 + $0x218] sm:$0xff]
        %v482 = vld [vmem:[#allocation5 + $0x220] sm:$0xff]
        %v483 = vld [vmem:[#allocation5 + $0x228] sm:$0xff]
        %v484 = vld [vmem:[#allocation5 + $0x230] sm:$0xff]
        %v485 = vld [vmem:[#allocation5 + $0x238] sm:$0xff]
        %v486 = vld [vmem:[#allocation5 + $0x240] sm:$0xff]
        %v487 = vld [vmem:[#allocation5 + $0x248] sm:$0xff]
        %v488 = vld [vmem:[#allocation5 + $0x250] sm:$0xff]
        %v489 = vld [vmem:[#allocation5 + $0x258] sm:$0xff]
        %v490 = vld [vmem:[#allocation5 + $0x260] sm:$0xff]
        %v491 = vld [vmem:[#allocation5 + $0x268] sm:$0xff]
        %v492 = vld [vmem:[#allocation5 + $0x270] sm:$0xff]
        %v493 = vld [vmem:[#allocation5 + $0x278] sm:$0xff]
        %v494 = vld [vmem:[#allocation5 + $0x280] sm:$0xff]
        %v495 = vld [vmem:[#allocation5 + $0x288] sm:$0xff]
        %v496 = vld [vmem:[#allocation5 + $0x290] sm:$0xff]
        %v497 = vld [vmem:[#allocation5 + $0x298] sm:$0xff]
        %v498 = vld [vmem:[#allocation5 + $0x2a0] sm:$0xff]
        %v499 = vld [vmem:[#allocation5 + $0x2a8] sm:$0xff]
        %v500 = vld [vmem:[#allocation5 + $0x2b0] sm:$0xff]
        %v501 = vld [vmem:[#allocation5 + $0x2b8] sm:$0xff]
        %v502 = vld [vmem:[#allocation5 + $0x2c0] sm:$0xff]
        %v503 = vld [vmem:[#allocation5 + $0x2c8] sm:$0xff]
        %v504 = vld [vmem:[#allocation5 + $0x2d0] sm:$0xff]
        %v505 = vld [vmem:[#allocation5 + $0x2d8] sm:$0xff]
        %v506 = vld [vmem:[#allocation5 + $0x2e0] sm:$0xff]
        %v507 = vld [vmem:[#allocation5 + $0x2e8] sm:$0xff]
        %v508 = vld [vmem:[#allocation5 + $0x2f0] sm:$0xff]
        %v509 = vld [vmem:[#allocation5 + $0x2f8] sm:$0xff]
        %v510 = vld [vmem:[#allocation5 + $0x300] sm:$0xff]
        %v511 = vld [vmem:[#allocation5 + $0x308] sm:$0xff]
        %v512 = vld [vmem:[#allocation5 + $0x310] sm:$0xff]
        %v513 = vld [vmem:[#allocation5 + $0x318] sm:$0xff]
        %v514 = vld [vmem:[#allocation5 + $0x320] sm:$0xff]
        %v515 = vld [vmem:[#allocation5 + $0x328] sm:$0xff]
        %v516 = vld [vmem:[#allocation5 + $0x330] sm:$0xff]
        %v517 = vld [vmem:[#allocation5 + $0x338] sm:$0xff]
        %v518 = vld [vmem:[#allocation5 + $0x340] sm:$0xff]
        %v519 = vld [vmem:[#allocation5 + $0x348] sm:$0xff]
        %v520 = vld [vmem:[#allocation5 + $0x350] sm:$0xff]
        %v521 = vld [vmem:[#allocation5 + $0x358] sm:$0xff]
        %v522 = vld [vmem:[#allocation5 + $0x360] sm:$0xff]
        %v523 = vld [vmem:[#allocation5 + $0x368] sm:$0xff]
        %v524 = vld [vmem:[#allocation5 + $0x370] sm:$0xff]
        %v525 = vld [vmem:[#allocation5 + $0x378] sm:$0xff]
        %v526 = vld [vmem:[#allocation5 + $0x380] sm:$0xff]
        %v527 = vld [vmem:[#allocation5 + $0x388] sm:$0xff]
        %v528 = vld [vmem:[#allocation5 + $0x390] sm:$0xff]
        %v529 = vld [vmem:[#allocation5 + $0x398] sm:$0xff]
        %v530 = vld [vmem:[#allocation5 + $0x3a0] sm:$0xff]
        %v531 = vld [vmem:[#allocation5 + $0x3a8] sm:$0xff]
        %v532 = vld [vmem:[#allocation5 + $0x3b0] sm:$0xff]
        %v533 = vld [vmem:[#allocation5 + $0x3b8] sm:$0xff]
        %v534 = vld [vmem:[#allocation5 + $0x3c0] sm:$0xff]
        %v535 = vld [vmem:[#allocation5 + $0x3c8] sm:$0xff]
        %v536 = vld [vmem:[#allocation5 + $0x3d0] sm:$0xff]
        %v537 = vld [vmem:[#allocation5 + $0x3d8] sm:$0xff]
        %v538 = vld [vmem:[#allocation5 + $0x3e0] sm:$0xff]
        %v539 = vld [vmem:[#allocation5 + $0x3e8] sm:$0xff]
        %v540 = vld [vmem:[#allocation5 + $0x3f0] sm:$0xff]
        %v541 = vld [vmem:[#allocation5 + $0x3f8] sm:$0xff]
        %v542 = vld [vmem:[#allocation5 + $0x400] sm:$0xff]
        %v543 = vld [vmem:[#allocation5 + $0x408] sm:$0xff]
        %v544 = vld [vmem:[#allocation5 + $0x410] sm:$0xff]
        %v545 = vld [vmem:[#allocation5 + $0x418] sm:$0xff]
        %v546 = vld [vmem:[#allocation5 + $0x420] sm:$0xff]
        %v547 = vld [vmem:[#allocation5 + $0x428] sm:$0xff]
        %v548 = vld [vmem:[#allocation5 + $0x430] sm:$0xff]
        %v549 = vld [vmem:[#allocation5 + $0x438] sm:$0xff]
        %v550 = vld [vmem:[#allocation5 + $0x440] sm:$0xff]
        %v551 = vld [vmem:[#allocation5 + $0x448] sm:$0xff]
        %v552 = vld [vmem:[#allocation5 + $0x450] sm:$0xff]
        %v553 = vld [vmem:[#allocation5 + $0x458] sm:$0xff]
        %v554 = vld [vmem:[#allocation5 + $0x460] sm:$0xff]
        %v555 = vld [vmem:[#allocation5 + $0x468] sm:$0xff]
        %v556 = vld [vmem:[#allocation5 + $0x470] sm:$0xff]
        %v557 = vld [vmem:[#allocation5 + $0x478] sm:$0xff]
        %v558 = vld [vmem:[#allocation5 + $0x480] sm:$0xff]
        %v559 = vld [vmem:[#allocation5 + $0x488] sm:$0xff]
        %v560 = vld [vmem:[#allocation5 + $0x490] sm:$0xff]
        %v561 = vld [vmem:[#allocation5 + $0x498] sm:$0xff]
        %v562 = vld [vmem:[#allocation5 + $0x4a0] sm:$0xff]
        %v563 = vld [vmem:[#allocation5 + $0x4a8] sm:$0xff]
        %v564 = vld [vmem:[#allocation5 + $0x4b0] sm:$0xff]
        %v565 = vld [vmem:[#allocation5 + $0x4b8] sm:$0xff]
        %v566 = vld [vmem:[#allocation5 + $0x4c0] sm:$0xff]
        %v567 = vld [vmem:[#allocation5 + $0x4c8] sm:$0xff]
        %v568 = vld [vmem:[#allocation5 + $0x4d0] sm:$0xff]
        %v569 = vld [vmem:[#allocation5 + $0x4d8] sm:$0xff]
        %v570 = vld [vmem:[#allocation5 + $0x4e0] sm:$0xff]
        %v571 = vld [vmem:[#allocation5 + $0x4e8] sm:$0xff]
        %v572 = vld [vmem:[#allocation5 + $0x4f0] sm:$0xff]
        %v573 = vld [vmem:[#allocation5 + $0x4f8] sm:$0xff]
        %v574 = vld [vmem:[#allocation5 + $0x500] sm:$0xff]
        %v575 = vld [vmem:[#allocation5 + $0x508] sm:$0xff]
        %v576 = vld [vmem:[#allocation5 + $0x510] sm:$0xff]
        %v577 = vld [vmem:[#allocation5 + $0x518] sm:$0xff]
        %v578 = vld [vmem:[#allocation5 + $0x520] sm:$0xff]
        %v579 = vld [vmem:[#allocation5 + $0x528] sm:$0xff]
        %v580 = vld [vmem:[#allocation5 + $0x530] sm:$0xff]
        %v581 = vld [vmem:[#allocation5 + $0x538] sm:$0xff]
        %v582 = vld [vmem:[#allocation5 + $0x540] sm:$0xff]
        %v583 = vld [vmem:[#allocation5 + $0x548] sm:$0xff]
        %v584 = vld [vmem:[#allocation5 + $0x550] sm:$0xff]
        %v585 = vld [vmem:[#allocation5 + $0x558] sm:$0xff]
        %v586 = vld [vmem:[#allocation5 + $0x560] sm:$0xff]
        %v587 = vld [vmem:[#allocation5 + $0x568] sm:$0xff]
        %v588 = vld [vmem:[#allocation5 + $0x570] sm:$0xff]
        %v589 = vld [vmem:[#allocation5 + $0x578] sm:$0xff]
        %v590 = vld [vmem:[#allocation5 + $0x580] sm:$0xff]
        %v591 = vld [vmem:[#allocation5 + $0x588] sm:$0xff]
        %v592 = vld [vmem:[#allocation5 + $0x590] sm:$0xff]
        %v593 = vld [vmem:[#allocation5 + $0x598] sm:$0xff]
        %v594 = vld [vmem:[#allocation5 + $0x5a0] sm:$0xff]
        %v595 = vld [vmem:[#allocation5 + $0x5a8] sm:$0xff]
        %v596 = vld [vmem:[#allocation5 + $0x5b0] sm:$0xff]
        %v597 = vld [vmem:[#allocation5 + $0x5b8] sm:$0xff]
        %v598 = vld [vmem:[#allocation5 + $0x5c0] sm:$0xff]
        %v599 = vld [vmem:[#allocation5 + $0x5c8] sm:$0xff]
        %v600 = vld [vmem:[#allocation5 + $0x5d0] sm:$0xff]
        %v601 = vld [vmem:[#allocation5 + $0x5d8] sm:$0xff]
        %v602 = vld [vmem:[#allocation5 + $0x5e0] sm:$0xff]
        %v603 = vld [vmem:[#allocation5 + $0x5e8] sm:$0xff]
        %v604 = vld [vmem:[#allocation5 + $0x5f0] sm:$0xff]
        %v605 = vld [vmem:[#allocation5 + $0x5f8] sm:$0xff]
        %v798 = vunpack.c.l.b16 %v222
        %v799 = vunpack.c.h.b16 %v222
        %v800 = vunpack.c.l.b16 %v223
        %v801 = vunpack.c.h.b16 %v223
        %v802 = vunpack.c.l.b16 %v224
        %v803 = vunpack.c.h.b16 %v224
        %v804 = vunpack.c.l.b16 %v225
        %v805 = vunpack.c.h.b16 %v225
        %v806 = vunpack.c.l.b16 %v226
        %v807 = vunpack.c.h.b16 %v226
        %v808 = vunpack.c.l.b16 %v227
        %v809 = vunpack.c.h.b16 %v227
        %v810 = vunpack.c.l.b16 %v228
        %v811 = vunpack.c.h.b16 %v228
        %v812 = vunpack.c.l.b16 %v229
        %v813 = vunpack.c.h.b16 %v229
        %v814 = vunpack.c.l.b16 %v230
        %v815 = vunpack.c.h.b16 %v230
        %v816 = vunpack.c.l.b16 %v231
        %v817 = vunpack.c.h.b16 %v231
        %v818 = vunpack.c.l.b16 %v232
        %v819 = vunpack.c.h.b16 %v232
        %v820 = vunpack.c.l.b16 %v233
        %v821 = vunpack.c.h.b16 %v233
        %v822 = vunpack.c.l.b16 %v234
        %v823 = vunpack.c.h.b16 %v234
        %v824 = vunpack.c.l.b16 %v235
        %v825 = vunpack.c.h.b16 %v235
        %v826 = vunpack.c.l.b16 %v236
        %v827 = vunpack.c.h.b16 %v236
        %v828 = vunpack.c.l.b16 %v237
        %v829 = vunpack.c.h.b16 %v237
        %v830 = vunpack.c.l.b16 %v238
        %v831 = vunpack.c.h.b16 %v238
        %v832 = vunpack.c.l.b16 %v239
        %v833 = vunpack.c.h.b16 %v239
        %v834 = vunpack.c.l.b16 %v240
        %v835 = vunpack.c.h.b16 %v240
        %v836 = vunpack.c.l.b16 %v241
        %v837 = vunpack.c.h.b16 %v241
        %v838 = vunpack.c.l.b16 %v242
        %v839 = vunpack.c.h.b16 %v242
        %v840 = vunpack.c.l.b16 %v243
        %v841 = vunpack.c.h.b16 %v243
        %v842 = vunpack.c.l.b16 %v244
        %v843 = vunpack.c.h.b16 %v244
        %v844 = vunpack.c.l.b16 %v245
        %v845 = vunpack.c.h.b16 %v245
        %v846 = vunpack.c.l.b16 %v246
        %v847 = vunpack.c.h.b16 %v246
        %v848 = vunpack.c.l.b16 %v247
        %v849 = vunpack.c.h.b16 %v247
        %v850 = vunpack.c.l.b16 %v248
        %v851 = vunpack.c.h.b16 %v248
        %v852 = vunpack.c.l.b16 %v249
        %v853 = vunpack.c.h.b16 %v249
        %v854 = vunpack.c.l.b16 %v250
        %v855 = vunpack.c.h.b16 %v250
        %v856 = vunpack.c.l.b16 %v251
        %v857 = vunpack.c.h.b16 %v251
        %v858 = vunpack.c.l.b16 %v252
        %v859 = vunpack.c.h.b16 %v252
        %v860 = vunpack.c.l.b16 %v253
        %v861 = vunpack.c.h.b16 %v253
        %v862 = vunpack.c.l.b16 %v254
        %v863 = vunpack.c.h.b16 %v254
        %v864 = vunpack.c.l.b16 %v255
        %v865 = vunpack.c.h.b16 %v255
        %v866 = vunpack.c.l.b16 %v256
        %v867 = vunpack.c.h.b16 %v256
        %v868 = vunpack.c.l.b16 %v257
        %v869 = vunpack.c.h.b16 %v257
        %v870 = vunpack.c.l.b16 %v258
        %v871 = vunpack.c.h.b16 %v258
        %v872 = vunpack.c.l.b16 %v259
        %v873 = vunpack.c.h.b16 %v259
        %v874 = vunpack.c.l.b16 %v260
        %v875 = vunpack.c.h.b16 %v260
        %v876 = vunpack.c.l.b16 %v261
        %v877 = vunpack.c.h.b16 %v261
        %v878 = vunpack.c.l.b16 %v262
        %v879 = vunpack.c.h.b16 %v262
        %v880 = vunpack.c.l.b16 %v263
        %v881 = vunpack.c.h.b16 %v263
        %v882 = vunpack.c.l.b16 %v264
        %v883 = vunpack.c.h.b16 %v264
        %v884 = vunpack.c.l.b16 %v265
        %v885 = vunpack.c.h.b16 %v265
        %v886 = vunpack.c.l.b16 %v266
        %v887 = vunpack.c.h.b16 %v266
        %v888 = vunpack.c.l.b16 %v267
        %v889 = vunpack.c.h.b16 %v267
        %v890 = vunpack.c.l.b16 %v268
        %v891 = vunpack.c.h.b16 %v268
        %v892 = vunpack.c.l.b16 %v269
        %v893 = vunpack.c.h.b16 %v269
        %v894 = vunpack.c.l.b16 %v270
        %v895 = vunpack.c.h.b16 %v270
        %v896 = vunpack.c.l.b16 %v271
        %v897 = vunpack.c.h.b16 %v271
        %v898 = vunpack.c.l.b16 %v272
        %v899 = vunpack.c.h.b16 %v272
        %v900 = vunpack.c.l.b16 %v273
        %v901 = vunpack.c.h.b16 %v273
        %v902 = vunpack.c.l.b16 %v274
        %v903 = vunpack.c.h.b16 %v274
        %v904 = vunpack.c.l.b16 %v275
        %v905 = vunpack.c.h.b16 %v275
        %v906 = vunpack.c.l.b16 %v276
        %v907 = vunpack.c.h.b16 %v276
        %v908 = vunpack.c.l.b16 %v277
        %v909 = vunpack.c.h.b16 %v277
        %v910 = vunpack.c.l.b16 %v278
        %v911 = vunpack.c.h.b16 %v278
        %v912 = vunpack.c.l.b16 %v279
        %v913 = vunpack.c.h.b16 %v279
        %v914 = vunpack.c.l.b16 %v280
        %v915 = vunpack.c.h.b16 %v280
        %v916 = vunpack.c.l.b16 %v281
        %v917 = vunpack.c.h.b16 %v281
        %v918 = vunpack.c.l.b16 %v282
        %v919 = vunpack.c.h.b16 %v282
        %v920 = vunpack.c.l.b16 %v283
        %v921 = vunpack.c.h.b16 %v283
        %v922 = vunpack.c.l.b16 %v284
        %v923 = vunpack.c.h.b16 %v284
        %v924 = vunpack.c.l.b16 %v285
        %v925 = vunpack.c.h.b16 %v285
        %v926 = vunpack.c.l.b16 %v286
        %v927 = vunpack.c.h.b16 %v286
        %v928 = vunpack.c.l.b16 %v287
        %v929 = vunpack.c.h.b16 %v287
        %v930 = vunpack.c.l.b16 %v288
        %v931 = vunpack.c.h.b16 %v288
        %v932 = vunpack.c.l.b16 %v289
        %v933 = vunpack.c.h.b16 %v289
        %v934 = vunpack.c.l.b16 %v290
        %v935 = vunpack.c.h.b16 %v290
        %v936 = vunpack.c.l.b16 %v291
        %v937 = vunpack.c.h.b16 %v291
        %v938 = vunpack.c.l.b16 %v292
        %v939 = vunpack.c.h.b16 %v292
        %v940 = vunpack.c.l.b16 %v293
        %v941 = vunpack.c.h.b16 %v293
        %v942 = vunpack.c.l.b16 %v294
        %v943 = vunpack.c.h.b16 %v294
        %v944 = vunpack.c.l.b16 %v295
        %v945 = vunpack.c.h.b16 %v295
        %v946 = vunpack.c.l.b16 %v296
        %v947 = vunpack.c.h.b16 %v296
        %v948 = vunpack.c.l.b16 %v297
        %v949 = vunpack.c.h.b16 %v297
        %v950 = vunpack.c.l.b16 %v298
        %v951 = vunpack.c.h.b16 %v298
        %v952 = vunpack.c.l.b16 %v299
        %v953 = vunpack.c.h.b16 %v299
        %v954 = vunpack.c.l.b16 %v300
        %v955 = vunpack.c.h.b16 %v300
        %v956 = vunpack.c.l.b16 %v301
        %v957 = vunpack.c.h.b16 %v301
        %v958 = vunpack.c.l.b16 %v302
        %v959 = vunpack.c.h.b16 %v302
        %v960 = vunpack.c.l.b16 %v303
        %v961 = vunpack.c.h.b16 %v303
        %v962 = vunpack.c.l.b16 %v304
        %v963 = vunpack.c.h.b16 %v304
        %v964 = vunpack.c.l.b16 %v305
        %v965 = vunpack.c.h.b16 %v305
        %v966 = vunpack.c.l.b16 %v306
        %v967 = vunpack.c.h.b16 %v306
        %v968 = vunpack.c.l.b16 %v307
        %v969 = vunpack.c.h.b16 %v307
        %v970 = vunpack.c.l.b16 %v308
        %v971 = vunpack.c.h.b16 %v308
        %v972 = vunpack.c.l.b16 %v309
        %v973 = vunpack.c.h.b16 %v309
        %v974 = vunpack.c.l.b16 %v310
        %v975 = vunpack.c.h.b16 %v310
        %v976 = vunpack.c.l.b16 %v311
        %v977 = vunpack.c.h.b16 %v311
        %v978 = vunpack.c.l.b16 %v312
        %v979 = vunpack.c.h.b16 %v312
        %v980 = vunpack.c.l.b16 %v313
        %v981 = vunpack.c.h.b16 %v313
        %v982 = vunpack.c.l.b16 %v314
        %v983 = vunpack.c.h.b16 %v314
        %v984 = vunpack.c.l.b16 %v315
        %v985 = vunpack.c.h.b16 %v315
        %v986 = vunpack.c.l.b16 %v316
        %v987 = vunpack.c.h.b16 %v316
        %v988 = vunpack.c.l.b16 %v317
        %v989 = vunpack.c.h.b16 %v317
        %v990 = vunpack.c.l.b16 %v318
        %v991 = vunpack.c.h.b16 %v318
        %v992 = vunpack.c.l.b16 %v319
        %v993 = vunpack.c.h.b16 %v319
        %v994 = vunpack.c.l.b16 %v320
        %v995 = vunpack.c.h.b16 %v320
        %v996 = vunpack.c.l.b16 %v321
        %v997 = vunpack.c.h.b16 %v321
        %v998 = vunpack.c.l.b16 %v322
        %v999 = vunpack.c.h.b16 %v322
        %v1000 = vunpack.c.l.b16 %v323
        %v1001 = vunpack.c.h.b16 %v323
        %v1002 = vunpack.c.l.b16 %v324
        %v1003 = vunpack.c.h.b16 %v324
        %v1004 = vunpack.c.l.b16 %v325
        %v1005 = vunpack.c.h.b16 %v325
        %v1006 = vunpack.c.l.b16 %v326
        %v1007 = vunpack.c.h.b16 %v326
        %v1008 = vunpack.c.l.b16 %v327
        %v1009 = vunpack.c.h.b16 %v327
        %v1010 = vunpack.c.l.b16 %v328
        %v1011 = vunpack.c.h.b16 %v328
        %v1012 = vunpack.c.l.b16 %v329
        %v1013 = vunpack.c.h.b16 %v329
        %v1014 = vunpack.c.l.b16 %v330
        %v1015 = vunpack.c.h.b16 %v330
        %v1016 = vunpack.c.l.b16 %v331
        %v1017 = vunpack.c.h.b16 %v331
        %v1018 = vunpack.c.l.b16 %v332
        %v1019 = vunpack.c.h.b16 %v332
        %v1020 = vunpack.c.l.b16 %v333
        %v1021 = vunpack.c.h.b16 %v333
        %v1022 = vunpack.c.l.b16 %v334
        %v1023 = vunpack.c.h.b16 %v334
        %v1024 = vunpack.c.l.b16 %v335
        %v1025 = vunpack.c.h.b16 %v335
        %v1026 = vunpack.c.l.b16 %v336
        %v1027 = vunpack.c.h.b16 %v336
        %v1028 = vunpack.c.l.b16 %v337
        %v1029 = vunpack.c.h.b16 %v337
        %v1030 = vunpack.c.l.b16 %v338
        %v1031 = vunpack.c.h.b16 %v338
        %v1032 = vunpack.c.l.b16 %v339
        %v1033 = vunpack.c.h.b16 %v339
        %v1034 = vunpack.c.l.b16 %v340
        %v1035 = vunpack.c.h.b16 %v340
        %v1036 = vunpack.c.l.b16 %v341
        %v1037 = vunpack.c.h.b16 %v341
        %v1038 = vunpack.c.l.b16 %v342
        %v1039 = vunpack.c.h.b16 %v342
        %v1040 = vunpack.c.l.b16 %v343
        %v1041 = vunpack.c.h.b16 %v343
        %v1042 = vunpack.c.l.b16 %v344
        %v1043 = vunpack.c.h.b16 %v344
        %v1044 = vunpack.c.l.b16 %v345
        %v1045 = vunpack.c.h.b16 %v345
        %v1046 = vunpack.c.l.b16 %v346
        %v1047 = vunpack.c.h.b16 %v346
        %v1048 = vunpack.c.l.b16 %v347
        %v1049 = vunpack.c.h.b16 %v347
        %v1050 = vunpack.c.l.b16 %v348
        %v1051 = vunpack.c.h.b16 %v348
        %v1052 = vunpack.c.l.b16 %v349
        %v1053 = vunpack.c.h.b16 %v349
        %v1054 = vunpack.c.l.b16 %v350
        %v1055 = vunpack.c.h.b16 %v350
        %v1056 = vunpack.c.l.b16 %v351
        %v1057 = vunpack.c.h.b16 %v351
        %v1058 = vunpack.c.l.b16 %v352
        %v1059 = vunpack.c.h.b16 %v352
        %v1060 = vunpack.c.l.b16 %v353
        %v1061 = vunpack.c.h.b16 %v353
        %v1062 = vunpack.c.l.b16 %v354
        %v1063 = vunpack.c.h.b16 %v354
        %v1064 = vunpack.c.l.b16 %v355
        %v1065 = vunpack.c.h.b16 %v355
        %v1066 = vunpack.c.l.b16 %v356
        %v1067 = vunpack.c.h.b16 %v356
        %v1068 = vunpack.c.l.b16 %v357
        %v1069 = vunpack.c.h.b16 %v357
        %v1070 = vunpack.c.l.b16 %v358
        %v1071 = vunpack.c.h.b16 %v358
        %v1072 = vunpack.c.l.b16 %v359
        %v1073 = vunpack.c.h.b16 %v359
        %v1074 = vunpack.c.l.b16 %v360
        %v1075 = vunpack.c.h.b16 %v360
        %v1076 = vunpack.c.l.b16 %v361
        %v1077 = vunpack.c.h.b16 %v361
        %v1078 = vunpack.c.l.b16 %v362
        %v1079 = vunpack.c.h.b16 %v362
        %v1080 = vunpack.c.l.b16 %v363
        %v1081 = vunpack.c.h.b16 %v363
        %v1082 = vunpack.c.l.b16 %v364
        %v1083 = vunpack.c.h.b16 %v364
        %v1084 = vunpack.c.l.b16 %v365
        %v1085 = vunpack.c.h.b16 %v365
        %v1086 = vunpack.c.l.b16 %v366
        %v1087 = vunpack.c.h.b16 %v366
        %v1088 = vunpack.c.l.b16 %v367
        %v1089 = vunpack.c.h.b16 %v367
        %v1090 = vunpack.c.l.b16 %v368
        %v1091 = vunpack.c.h.b16 %v368
        %v1092 = vunpack.c.l.b16 %v369
        %v1093 = vunpack.c.h.b16 %v369
        %v1094 = vunpack.c.l.b16 %v370
        %v1095 = vunpack.c.h.b16 %v370
        %v1096 = vunpack.c.l.b16 %v371
        %v1097 = vunpack.c.h.b16 %v371
        %v1098 = vunpack.c.l.b16 %v372
        %v1099 = vunpack.c.h.b16 %v372
        %v1100 = vunpack.c.l.b16 %v373
        %v1101 = vunpack.c.h.b16 %v373
        %v1102 = vunpack.c.l.b16 %v374
        %v1103 = vunpack.c.h.b16 %v374
        %v1104 = vunpack.c.l.b16 %v375
        %v1105 = vunpack.c.h.b16 %v375
        %v1106 = vunpack.c.l.b16 %v376
        %v1107 = vunpack.c.h.b16 %v376
        %v1108 = vunpack.c.l.b16 %v377
        %v1109 = vunpack.c.h.b16 %v377
        %v1110 = vunpack.c.l.b16 %v378
        %v1111 = vunpack.c.h.b16 %v378
        %v1112 = vunpack.c.l.b16 %v379
        %v1113 = vunpack.c.h.b16 %v379
        %v1114 = vunpack.c.l.b16 %v380
        %v1115 = vunpack.c.h.b16 %v380
        %v1116 = vunpack.c.l.b16 %v381
        %v1117 = vunpack.c.h.b16 %v381
        %v1118 = vunpack.c.l.b16 %v382
        %v1119 = vunpack.c.h.b16 %v382
        %v1120 = vunpack.c.l.b16 %v383
        %v1121 = vunpack.c.h.b16 %v383
        %v1122 = vunpack.c.l.b16 %v384
        %v1123 = vunpack.c.h.b16 %v384
        %v1124 = vunpack.c.l.b16 %v385
        %v1125 = vunpack.c.h.b16 %v385
        %v1126 = vunpack.c.l.b16 %v386
        %v1127 = vunpack.c.h.b16 %v386
        %v1128 = vunpack.c.l.b16 %v387
        %v1129 = vunpack.c.h.b16 %v387
        %v1130 = vunpack.c.l.b16 %v388
        %v1131 = vunpack.c.h.b16 %v388
        %v1132 = vunpack.c.l.b16 %v389
        %v1133 = vunpack.c.h.b16 %v389
        %v1134 = vunpack.c.l.b16 %v390
        %v1135 = vunpack.c.h.b16 %v390
        %v1136 = vunpack.c.l.b16 %v391
        %v1137 = vunpack.c.h.b16 %v391
        %v1138 = vunpack.c.l.b16 %v392
        %v1139 = vunpack.c.h.b16 %v392
        %v1140 = vunpack.c.l.b16 %v393
        %v1141 = vunpack.c.h.b16 %v393
        %v1142 = vunpack.c.l.b16 %v394
        %v1143 = vunpack.c.h.b16 %v394
        %v1144 = vunpack.c.l.b16 %v395
        %v1145 = vunpack.c.h.b16 %v395
        %v1146 = vunpack.c.l.b16 %v396
        %v1147 = vunpack.c.h.b16 %v396
        %v1148 = vunpack.c.l.b16 %v397
        %v1149 = vunpack.c.h.b16 %v397
        %v1150 = vunpack.c.l.b16 %v398
        %v1151 = vunpack.c.h.b16 %v398
        %v1152 = vunpack.c.l.b16 %v399
        %v1153 = vunpack.c.h.b16 %v399
        %v1154 = vunpack.c.l.b16 %v400
        %v1155 = vunpack.c.h.b16 %v400
        %v1156 = vunpack.c.l.b16 %v401
        %v1157 = vunpack.c.h.b16 %v401
        %v1158 = vunpack.c.l.b16 %v402
        %v1159 = vunpack.c.h.b16 %v402
        %v1160 = vunpack.c.l.b16 %v403
        %v1161 = vunpack.c.h.b16 %v403
        %v1162 = vunpack.c.l.b16 %v404
        %v1163 = vunpack.c.h.b16 %v404
        %v1164 = vunpack.c.l.b16 %v405
        %v1165 = vunpack.c.h.b16 %v405
        %v1166 = vunpack.c.l.b16 %v406
        %v1167 = vunpack.c.h.b16 %v406
        %v1168 = vunpack.c.l.b16 %v407
        %v1169 = vunpack.c.h.b16 %v407
        %v1170 = vunpack.c.l.b16 %v408
        %v1171 = vunpack.c.h.b16 %v408
        %v1172 = vunpack.c.l.b16 %v409
        %v1173 = vunpack.c.h.b16 %v409
        %v1174 = vunpack.c.l.b16 %v410
        %v1175 = vunpack.c.h.b16 %v410
        %v1176 = vunpack.c.l.b16 %v411
        %v1177 = vunpack.c.h.b16 %v411
        %v1178 = vunpack.c.l.b16 %v412
        %v1179 = vunpack.c.h.b16 %v412
        %v1180 = vunpack.c.l.b16 %v413
        %v1181 = vunpack.c.h.b16 %v413
        %v1182 = vpack.c.b16 %v810, %v798
        %v1183 = vpack.c.b16 %v811, %v799
        %v1184 = vpack.c.b16 %v812, %v800
        %v1185 = vpack.c.b16 %v813, %v801
        %v1186 = vpack.c.b16 %v814, %v802
        %v1187 = vpack.c.b16 %v815, %v803
        %v1188 = vpack.c.b16 %v816, %v804
        %v1189 = vpack.c.b16 %v817, %v805
        %v1190 = vpack.c.b16 %v818, %v806
        %v1191 = vpack.c.b16 %v819, %v807
        %v1192 = vpack.c.b16 %v820, %v808
        %v1193 = vpack.c.b16 %v821, %v809
        %v1194 = vpack.c.b16 %v834, %v822
        %v1195 = vpack.c.b16 %v835, %v823
        %v1196 = vpack.c.b16 %v836, %v824
        %v1197 = vpack.c.b16 %v837, %v825
        %v1198 = vpack.c.b16 %v838, %v826
        %v1199 = vpack.c.b16 %v839, %v827
        %v1200 = vpack.c.b16 %v840, %v828
        %v1201 = vpack.c.b16 %v841, %v829
        %v1202 = vpack.c.b16 %v842, %v830
        %v1203 = vpack.c.b16 %v843, %v831
        %v1204 = vpack.c.b16 %v844, %v832
        %v1205 = vpack.c.b16 %v845, %v833
        %v1206 = vpack.c.b16 %v858, %v846
        %v1207 = vpack.c.b16 %v859, %v847
        %v1208 = vpack.c.b16 %v860, %v848
        %v1209 = vpack.c.b16 %v861, %v849
        %v1210 = vpack.c.b16 %v862, %v850
        %v1211 = vpack.c.b16 %v863, %v851
        %v1212 = vpack.c.b16 %v864, %v852
        %v1213 = vpack.c.b16 %v865, %v853
        %v1214 = vpack.c.b16 %v866, %v854
        %v1215 = vpack.c.b16 %v867, %v855
        %v1216 = vpack.c.b16 %v868, %v856
        %v1217 = vpack.c.b16 %v869, %v857
        %v1218 = vpack.c.b16 %v882, %v870
        %v1219 = vpack.c.b16 %v883, %v871
        %v1220 = vpack.c.b16 %v884, %v872
        %v1221 = vpack.c.b16 %v885, %v873
        %v1222 = vpack.c.b16 %v886, %v874
        %v1223 = vpack.c.b16 %v887, %v875
        %v1224 = vpack.c.b16 %v888, %v876
        %v1225 = vpack.c.b16 %v889, %v877
        %v1226 = vpack.c.b16 %v890, %v878
        %v1227 = vpack.c.b16 %v891, %v879
        %v1228 = vpack.c.b16 %v892, %v880
        %v1229 = vpack.c.b16 %v893, %v881
        %v1230 = vpack.c.b16 %v906, %v894
        %v1231 = vpack.c.b16 %v907, %v895
        %v1232 = vpack.c.b16 %v908, %v896
        %v1233 = vpack.c.b16 %v909, %v897
        %v1234 = vpack.c.b16 %v910, %v898
        %v1235 = vpack.c.b16 %v911, %v899
        %v1236 = vpack.c.b16 %v912, %v900
        %v1237 = vpack.c.b16 %v913, %v901
        %v1238 = vpack.c.b16 %v914, %v902
        %v1239 = vpack.c.b16 %v915, %v903
        %v1240 = vpack.c.b16 %v916, %v904
        %v1241 = vpack.c.b16 %v917, %v905
        %v1242 = vpack.c.b16 %v930, %v918
        %v1243 = vpack.c.b16 %v931, %v919
        %v1244 = vpack.c.b16 %v932, %v920
        %v1245 = vpack.c.b16 %v933, %v921
        %v1246 = vpack.c.b16 %v934, %v922
        %v1247 = vpack.c.b16 %v935, %v923
        %v1248 = vpack.c.b16 %v936, %v924
        %v1249 = vpack.c.b16 %v937, %v925
        %v1250 = vpack.c.b16 %v938, %v926
        %v1251 = vpack.c.b16 %v939, %v927
        %v1252 = vpack.c.b16 %v940, %v928
        %v1253 = vpack.c.b16 %v941, %v929
        %v1254 = vpack.c.b16 %v954, %v942
        %v1255 = vpack.c.b16 %v955, %v943
        %v1256 = vpack.c.b16 %v956, %v944
        %v1257 = vpack.c.b16 %v957, %v945
        %v1258 = vpack.c.b16 %v958, %v946
        %v1259 = vpack.c.b16 %v959, %v947
        %v1260 = vpack.c.b16 %v960, %v948
        %v1261 = vpack.c.b16 %v961, %v949
        %v1262 = vpack.c.b16 %v962, %v950
        %v1263 = vpack.c.b16 %v963, %v951
        %v1264 = vpack.c.b16 %v964, %v952
        %v1265 = vpack.c.b16 %v965, %v953
        %v1266 = vpack.c.b16 %v978, %v966
        %v1267 = vpack.c.b16 %v979, %v967
        %v1268 = vpack.c.b16 %v980, %v968
        %v1269 = vpack.c.b16 %v981, %v969
        %v1270 = vpack.c.b16 %v982, %v970
        %v1271 = vpack.c.b16 %v983, %v971
        %v1272 = vpack.c.b16 %v984, %v972
        %v1273 = vpack.c.b16 %v985, %v973
        %v1274 = vpack.c.b16 %v986, %v974
        %v1275 = vpack.c.b16 %v987, %v975
        %v1276 = vpack.c.b16 %v988, %v976
        %v1277 = vpack.c.b16 %v989, %v977
        %v1278 = vpack.c.b16 %v1002, %v990
        %v1279 = vpack.c.b16 %v1003, %v991
        %v1280 = vpack.c.b16 %v1004, %v992
        %v1281 = vpack.c.b16 %v1005, %v993
        %v1282 = vpack.c.b16 %v1006, %v994
        %v1283 = vpack.c.b16 %v1007, %v995
        %v1284 = vpack.c.b16 %v1008, %v996
        %v1285 = vpack.c.b16 %v1009, %v997
        %v1286 = vpack.c.b16 %v1010, %v998
        %v1287 = vpack.c.b16 %v1011, %v999
        %v1288 = vpack.c.b16 %v1012, %v1000
        %v1289 = vpack.c.b16 %v1013, %v1001
        %v1290 = vpack.c.b16 %v1026, %v1014
        %v1291 = vpack.c.b16 %v1027, %v1015
        %v1292 = vpack.c.b16 %v1028, %v1016
        %v1293 = vpack.c.b16 %v1029, %v1017
        %v1294 = vpack.c.b16 %v1030, %v1018
        %v1295 = vpack.c.b16 %v1031, %v1019
        %v1296 = vpack.c.b16 %v1032, %v1020
        %v1297 = vpack.c.b16 %v1033, %v1021
        %v1298 = vpack.c.b16 %v1034, %v1022
        %v1299 = vpack.c.b16 %v1035, %v1023
        %v1300 = vpack.c.b16 %v1036, %v1024
        %v1301 = vpack.c.b16 %v1037, %v1025
        %v1302 = vpack.c.b16 %v1050, %v1038
        %v1303 = vpack.c.b16 %v1051, %v1039
        %v1304 = vpack.c.b16 %v1052, %v1040
        %v1305 = vpack.c.b16 %v1053, %v1041
        %v1306 = vpack.c.b16 %v1054, %v1042
        %v1307 = vpack.c.b16 %v1055, %v1043
        %v1308 = vpack.c.b16 %v1056, %v1044
        %v1309 = vpack.c.b16 %v1057, %v1045
        %v1310 = vpack.c.b16 %v1058, %v1046
        %v1311 = vpack.c.b16 %v1059, %v1047
        %v1312 = vpack.c.b16 %v1060, %v1048
        %v1313 = vpack.c.b16 %v1061, %v1049
        %v1314 = vpack.c.b16 %v1074, %v1062
        %v1315 = vpack.c.b16 %v1075, %v1063
        %v1316 = vpack.c.b16 %v1076, %v1064
        %v1317 = vpack.c.b16 %v1077, %v1065
        %v1318 = vpack.c.b16 %v1078, %v1066
        %v1319 = vpack.c.b16 %v1079, %v1067
        %v1320 = vpack.c.b16 %v1080, %v1068
        %v1321 = vpack.c.b16 %v1081, %v1069
        %v1322 = vpack.c.b16 %v1082, %v1070
        %v1323 = vpack.c.b16 %v1083, %v1071
        %v1324 = vpack.c.b16 %v1084, %v1072
        %v1325 = vpack.c.b16 %v1085, %v1073
        %v1326 = vpack.c.b16 %v1098, %v1086
        %v1327 = vpack.c.b16 %v1099, %v1087
        %v1328 = vpack.c.b16 %v1100, %v1088
        %v1329 = vpack.c.b16 %v1101, %v1089
        %v1330 = vpack.c.b16 %v1102, %v1090
        %v1331 = vpack.c.b16 %v1103, %v1091
        %v1332 = vpack.c.b16 %v1104, %v1092
        %v1333 = vpack.c.b16 %v1105, %v1093
        %v1334 = vpack.c.b16 %v1106, %v1094
        %v1335 = vpack.c.b16 %v1107, %v1095
        %v1336 = vpack.c.b16 %v1108, %v1096
        %v1337 = vpack.c.b16 %v1109, %v1097
        %v1338 = vpack.c.b16 %v1122, %v1110
        %v1339 = vpack.c.b16 %v1123, %v1111
        %v1340 = vpack.c.b16 %v1124, %v1112
        %v1341 = vpack.c.b16 %v1125, %v1113
        %v1342 = vpack.c.b16 %v1126, %v1114
        %v1343 = vpack.c.b16 %v1127, %v1115
        %v1344 = vpack.c.b16 %v1128, %v1116
        %v1345 = vpack.c.b16 %v1129, %v1117
        %v1346 = vpack.c.b16 %v1130, %v1118
        %v1347 = vpack.c.b16 %v1131, %v1119
        %v1348 = vpack.c.b16 %v1132, %v1120
        %v1349 = vpack.c.b16 %v1133, %v1121
        %v1350 = vpack.c.b16 %v1146, %v1134
        %v1351 = vpack.c.b16 %v1147, %v1135
        %v1352 = vpack.c.b16 %v1148, %v1136
        %v1353 = vpack.c.b16 %v1149, %v1137
        %v1354 = vpack.c.b16 %v1150, %v1138
        %v1355 = vpack.c.b16 %v1151, %v1139
        %v1356 = vpack.c.b16 %v1152, %v1140
        %v1357 = vpack.c.b16 %v1153, %v1141
        %v1358 = vpack.c.b16 %v1154, %v1142
        %v1359 = vpack.c.b16 %v1155, %v1143
        %v1360 = vpack.c.b16 %v1156, %v1144
        %v1361 = vpack.c.b16 %v1157, %v1145
        %v1362 = vpack.c.b16 %v1170, %v1158
        %v1363 = vpack.c.b16 %v1171, %v1159
        %v1364 = vpack.c.b16 %v1172, %v1160
        %v1365 = vpack.c.b16 %v1173, %v1161
        %v1366 = vpack.c.b16 %v1174, %v1162
        %v1367 = vpack.c.b16 %v1175, %v1163
        %v1368 = vpack.c.b16 %v1176, %v1164
        %v1369 = vpack.c.b16 %v1177, %v1165
        %v1370 = vpack.c.b16 %v1178, %v1166
        %v1371 = vpack.c.b16 %v1179, %v1167
        %v1372 = vpack.c.b16 %v1180, %v1168
        %v1373 = vpack.c.b16 %v1181, %v1169
        %v1758 = vunpack.c.l.b16 %v414
        %v1759 = vunpack.c.h.b16 %v414
        %v1760 = vunpack.c.l.b16 %v415
        %v1761 = vunpack.c.h.b16 %v415
        %v1762 = vunpack.c.l.b16 %v416
        %v1763 = vunpack.c.h.b16 %v416
        %v1764 = vunpack.c.l.b16 %v417
        %v1765 = vunpack.c.h.b16 %v417
        %v1766 = vunpack.c.l.b16 %v418
        %v1767 = vunpack.c.h.b16 %v418
        %v1768 = vunpack.c.l.b16 %v419
        %v1769 = vunpack.c.h.b16 %v419
        %v1770 = vunpack.c.l.b16 %v420
        %v1771 = vunpack.c.h.b16 %v420
        %v1772 = vunpack.c.l.b16 %v421
        %v1773 = vunpack.c.h.b16 %v421
        %v1774 = vunpack.c.l.b16 %v422
        %v1775 = vunpack.c.h.b16 %v422
        %v1776 = vunpack.c.l.b16 %v423
        %v1777 = vunpack.c.h.b16 %v423
        %v1778 = vunpack.c.l.b16 %v424
        %v1779 = vunpack.c.h.b16 %v424
        %v1780 = vunpack.c.l.b16 %v425
        %v1781 = vunpack.c.h.b16 %v425
        %v1782 = vunpack.c.l.b16 %v426
        %v1783 = vunpack.c.h.b16 %v426
        %v1784 = vunpack.c.l.b16 %v427
        %v1785 = vunpack.c.h.b16 %v427
        %v1786 = vunpack.c.l.b16 %v428
        %v1787 = vunpack.c.h.b16 %v428
        %v1788 = vunpack.c.l.b16 %v429
        %v1789 = vunpack.c.h.b16 %v429
        %v1790 = vunpack.c.l.b16 %v430
        %v1791 = vunpack.c.h.b16 %v430
        %v1792 = vunpack.c.l.b16 %v431
        %v1793 = vunpack.c.h.b16 %v431
        %v1794 = vunpack.c.l.b16 %v432
        %v1795 = vunpack.c.h.b16 %v432
        %v1796 = vunpack.c.l.b16 %v433
        %v1797 = vunpack.c.h.b16 %v433
        %v1798 = vunpack.c.l.b16 %v434
        %v1799 = vunpack.c.h.b16 %v434
        %v1800 = vunpack.c.l.b16 %v435
        %v1801 = vunpack.c.h.b16 %v435
        %v1802 = vunpack.c.l.b16 %v436
        %v1803 = vunpack.c.h.b16 %v436
        %v1804 = vunpack.c.l.b16 %v437
        %v1805 = vunpack.c.h.b16 %v437
        %v1806 = vunpack.c.l.b16 %v438
        %v1807 = vunpack.c.h.b16 %v438
        %v1808 = vunpack.c.l.b16 %v439
        %v1809 = vunpack.c.h.b16 %v439
        %v1810 = vunpack.c.l.b16 %v440
        %v1811 = vunpack.c.h.b16 %v440
        %v1812 = vunpack.c.l.b16 %v441
        %v1813 = vunpack.c.h.b16 %v441
        %v1814 = vunpack.c.l.b16 %v442
        %v1815 = vunpack.c.h.b16 %v442
        %v1816 = vunpack.c.l.b16 %v443
        %v1817 = vunpack.c.h.b16 %v443
        %v1818 = vunpack.c.l.b16 %v444
        %v1819 = vunpack.c.h.b16 %v444
        %v1820 = vunpack.c.l.b16 %v445
        %v1821 = vunpack.c.h.b16 %v445
        %v1822 = vunpack.c.l.b16 %v446
        %v1823 = vunpack.c.h.b16 %v446
        %v1824 = vunpack.c.l.b16 %v447
        %v1825 = vunpack.c.h.b16 %v447
        %v1826 = vunpack.c.l.b16 %v448
        %v1827 = vunpack.c.h.b16 %v448
        %v1828 = vunpack.c.l.b16 %v449
        %v1829 = vunpack.c.h.b16 %v449
        %v1830 = vunpack.c.l.b16 %v450
        %v1831 = vunpack.c.h.b16 %v450
        %v1832 = vunpack.c.l.b16 %v451
        %v1833 = vunpack.c.h.b16 %v451
        %v1834 = vunpack.c.l.b16 %v452
        %v1835 = vunpack.c.h.b16 %v452
        %v1836 = vunpack.c.l.b16 %v453
        %v1837 = vunpack.c.h.b16 %v453
        %v1838 = vunpack.c.l.b16 %v454
        %v1839 = vunpack.c.h.b16 %v454
        %v1840 = vunpack.c.l.b16 %v455
        %v1841 = vunpack.c.h.b16 %v455
        %v1842 = vunpack.c.l.b16 %v456
        %v1843 = vunpack.c.h.b16 %v456
        %v1844 = vunpack.c.l.b16 %v457
        %v1845 = vunpack.c.h.b16 %v457
        %v1846 = vunpack.c.l.b16 %v458
        %v1847 = vunpack.c.h.b16 %v458
        %v1848 = vunpack.c.l.b16 %v459
        %v1849 = vunpack.c.h.b16 %v459
        %v1850 = vunpack.c.l.b16 %v460
        %v1851 = vunpack.c.h.b16 %v460
        %v1852 = vunpack.c.l.b16 %v461
        %v1853 = vunpack.c.h.b16 %v461
        %v1854 = vunpack.c.l.b16 %v462
        %v1855 = vunpack.c.h.b16 %v462
        %v1856 = vunpack.c.l.b16 %v463
        %v1857 = vunpack.c.h.b16 %v463
        %v1858 = vunpack.c.l.b16 %v464
        %v1859 = vunpack.c.h.b16 %v464
        %v1860 = vunpack.c.l.b16 %v465
        %v1861 = vunpack.c.h.b16 %v465
        %v1862 = vunpack.c.l.b16 %v466
        %v1863 = vunpack.c.h.b16 %v466
        %v1864 = vunpack.c.l.b16 %v467
        %v1865 = vunpack.c.h.b16 %v467
        %v1866 = vunpack.c.l.b16 %v468
        %v1867 = vunpack.c.h.b16 %v468
        %v1868 = vunpack.c.l.b16 %v469
        %v1869 = vunpack.c.h.b16 %v469
        %v1870 = vunpack.c.l.b16 %v470
        %v1871 = vunpack.c.h.b16 %v470
        %v1872 = vunpack.c.l.b16 %v471
        %v1873 = vunpack.c.h.b16 %v471
        %v1874 = vunpack.c.l.b16 %v472
        %v1875 = vunpack.c.h.b16 %v472
        %v1876 = vunpack.c.l.b16 %v473
        %v1877 = vunpack.c.h.b16 %v473
        %v1878 = vunpack.c.l.b16 %v474
        %v1879 = vunpack.c.h.b16 %v474
        %v1880 = vunpack.c.l.b16 %v475
        %v1881 = vunpack.c.h.b16 %v475
        %v1882 = vunpack.c.l.b16 %v476
        %v1883 = vunpack.c.h.b16 %v476
        %v1884 = vunpack.c.l.b16 %v477
        %v1885 = vunpack.c.h.b16 %v477
        %v1886 = vunpack.c.l.b16 %v478
        %v1887 = vunpack.c.h.b16 %v478
        %v1888 = vunpack.c.l.b16 %v479
        %v1889 = vunpack.c.h.b16 %v479
        %v1890 = vunpack.c.l.b16 %v480
        %v1891 = vunpack.c.h.b16 %v480
        %v1892 = vunpack.c.l.b16 %v481
        %v1893 = vunpack.c.h.b16 %v481
        %v1894 = vunpack.c.l.b16 %v482
        %v1895 = vunpack.c.h.b16 %v482
        %v1896 = vunpack.c.l.b16 %v483
        %v1897 = vunpack.c.h.b16 %v483
        %v1898 = vunpack.c.l.b16 %v484
        %v1899 = vunpack.c.h.b16 %v484
        %v1900 = vunpack.c.l.b16 %v485
        %v1901 = vunpack.c.h.b16 %v485
        %v1902 = vunpack.c.l.b16 %v486
        %v1903 = vunpack.c.h.b16 %v486
        %v1904 = vunpack.c.l.b16 %v487
        %v1905 = vunpack.c.h.b16 %v487
        %v1906 = vunpack.c.l.b16 %v488
        %v1907 = vunpack.c.h.b16 %v488
        %v1908 = vunpack.c.l.b16 %v489
        %v1909 = vunpack.c.h.b16 %v489
        %v1910 = vunpack.c.l.b16 %v490
        %v1911 = vunpack.c.h.b16 %v490
        %v1912 = vunpack.c.l.b16 %v491
        %v1913 = vunpack.c.h.b16 %v491
        %v1914 = vunpack.c.l.b16 %v492
        %v1915 = vunpack.c.h.b16 %v492
        %v1916 = vunpack.c.l.b16 %v493
        %v1917 = vunpack.c.h.b16 %v493
        %v1918 = vunpack.c.l.b16 %v494
        %v1919 = vunpack.c.h.b16 %v494
        %v1920 = vunpack.c.l.b16 %v495
        %v1921 = vunpack.c.h.b16 %v495
        %v1922 = vunpack.c.l.b16 %v496
        %v1923 = vunpack.c.h.b16 %v496
        %v1924 = vunpack.c.l.b16 %v497
        %v1925 = vunpack.c.h.b16 %v497
        %v1926 = vunpack.c.l.b16 %v498
        %v1927 = vunpack.c.h.b16 %v498
        %v1928 = vunpack.c.l.b16 %v499
        %v1929 = vunpack.c.h.b16 %v499
        %v1930 = vunpack.c.l.b16 %v500
        %v1931 = vunpack.c.h.b16 %v500
        %v1932 = vunpack.c.l.b16 %v501
        %v1933 = vunpack.c.h.b16 %v501
        %v1934 = vunpack.c.l.b16 %v502
        %v1935 = vunpack.c.h.b16 %v502
        %v1936 = vunpack.c.l.b16 %v503
        %v1937 = vunpack.c.h.b16 %v503
        %v1938 = vunpack.c.l.b16 %v504
        %v1939 = vunpack.c.h.b16 %v504
        %v1940 = vunpack.c.l.b16 %v505
        %v1941 = vunpack.c.h.b16 %v505
        %v1942 = vunpack.c.l.b16 %v506
        %v1943 = vunpack.c.h.b16 %v506
        %v1944 = vunpack.c.l.b16 %v507
        %v1945 = vunpack.c.h.b16 %v507
        %v1946 = vunpack.c.l.b16 %v508
        %v1947 = vunpack.c.h.b16 %v508
        %v1948 = vunpack.c.l.b16 %v509
        %v1949 = vunpack.c.h.b16 %v509
        %v1950 = vunpack.c.l.b16 %v510
        %v1951 = vunpack.c.h.b16 %v510
        %v1952 = vunpack.c.l.b16 %v511
        %v1953 = vunpack.c.h.b16 %v511
        %v1954 = vunpack.c.l.b16 %v512
        %v1955 = vunpack.c.h.b16 %v512
        %v1956 = vunpack.c.l.b16 %v513
        %v1957 = vunpack.c.h.b16 %v513
        %v1958 = vunpack.c.l.b16 %v514
        %v1959 = vunpack.c.h.b16 %v514
        %v1960 = vunpack.c.l.b16 %v515
        %v1961 = vunpack.c.h.b16 %v515
        %v1962 = vunpack.c.l.b16 %v516
        %v1963 = vunpack.c.h.b16 %v516
        %v1964 = vunpack.c.l.b16 %v517
        %v1965 = vunpack.c.h.b16 %v517
        %v1966 = vunpack.c.l.b16 %v518
        %v1967 = vunpack.c.h.b16 %v518
        %v1968 = vunpack.c.l.b16 %v519
        %v1969 = vunpack.c.h.b16 %v519
        %v1970 = vunpack.c.l.b16 %v520
        %v1971 = vunpack.c.h.b16 %v520
        %v1972 = vunpack.c.l.b16 %v521
        %v1973 = vunpack.c.h.b16 %v521
        %v1974 = vunpack.c.l.b16 %v522
        %v1975 = vunpack.c.h.b16 %v522
        %v1976 = vunpack.c.l.b16 %v523
        %v1977 = vunpack.c.h.b16 %v523
        %v1978 = vunpack.c.l.b16 %v524
        %v1979 = vunpack.c.h.b16 %v524
        %v1980 = vunpack.c.l.b16 %v525
        %v1981 = vunpack.c.h.b16 %v525
        %v1982 = vunpack.c.l.b16 %v526
        %v1983 = vunpack.c.h.b16 %v526
        %v1984 = vunpack.c.l.b16 %v527
        %v1985 = vunpack.c.h.b16 %v527
        %v1986 = vunpack.c.l.b16 %v528
        %v1987 = vunpack.c.h.b16 %v528
        %v1988 = vunpack.c.l.b16 %v529
        %v1989 = vunpack.c.h.b16 %v529
        %v1990 = vunpack.c.l.b16 %v530
        %v1991 = vunpack.c.h.b16 %v530
        %v1992 = vunpack.c.l.b16 %v531
        %v1993 = vunpack.c.h.b16 %v531
        %v1994 = vunpack.c.l.b16 %v532
        %v1995 = vunpack.c.h.b16 %v532
        %v1996 = vunpack.c.l.b16 %v533
        %v1997 = vunpack.c.h.b16 %v533
        %v1998 = vunpack.c.l.b16 %v534
        %v1999 = vunpack.c.h.b16 %v534
        %v2000 = vunpack.c.l.b16 %v535
        %v2001 = vunpack.c.h.b16 %v535
        %v2002 = vunpack.c.l.b16 %v536
        %v2003 = vunpack.c.h.b16 %v536
        %v2004 = vunpack.c.l.b16 %v537
        %v2005 = vunpack.c.h.b16 %v537
        %v2006 = vunpack.c.l.b16 %v538
        %v2007 = vunpack.c.h.b16 %v538
        %v2008 = vunpack.c.l.b16 %v539
        %v2009 = vunpack.c.h.b16 %v539
        %v2010 = vunpack.c.l.b16 %v540
        %v2011 = vunpack.c.h.b16 %v540
        %v2012 = vunpack.c.l.b16 %v541
        %v2013 = vunpack.c.h.b16 %v541
        %v2014 = vunpack.c.l.b16 %v542
        %v2015 = vunpack.c.h.b16 %v542
        %v2016 = vunpack.c.l.b16 %v543
        %v2017 = vunpack.c.h.b16 %v543
        %v2018 = vunpack.c.l.b16 %v544
        %v2019 = vunpack.c.h.b16 %v544
        %v2020 = vunpack.c.l.b16 %v545
        %v2021 = vunpack.c.h.b16 %v545
        %v2022 = vunpack.c.l.b16 %v546
        %v2023 = vunpack.c.h.b16 %v546
        %v2024 = vunpack.c.l.b16 %v547
        %v2025 = vunpack.c.h.b16 %v547
        %v2026 = vunpack.c.l.b16 %v548
        %v2027 = vunpack.c.h.b16 %v548
        %v2028 = vunpack.c.l.b16 %v549
        %v2029 = vunpack.c.h.b16 %v549
        %v2030 = vunpack.c.l.b16 %v550
        %v2031 = vunpack.c.h.b16 %v550
        %v2032 = vunpack.c.l.b16 %v551
        %v2033 = vunpack.c.h.b16 %v551
        %v2034 = vunpack.c.l.b16 %v552
        %v2035 = vunpack.c.h.b16 %v552
        %v2036 = vunpack.c.l.b16 %v553
        %v2037 = vunpack.c.h.b16 %v553
        %v2038 = vunpack.c.l.b16 %v554
        %v2039 = vunpack.c.h.b16 %v554
        %v2040 = vunpack.c.l.b16 %v555
        %v2041 = vunpack.c.h.b16 %v555
        %v2042 = vunpack.c.l.b16 %v556
        %v2043 = vunpack.c.h.b16 %v556
        %v2044 = vunpack.c.l.b16 %v557
        %v2045 = vunpack.c.h.b16 %v557
        %v2046 = vunpack.c.l.b16 %v558
        %v2047 = vunpack.c.h.b16 %v558
        %v2048 = vunpack.c.l.b16 %v559
        %v2049 = vunpack.c.h.b16 %v559
        %v2050 = vunpack.c.l.b16 %v560
        %v2051 = vunpack.c.h.b16 %v560
        %v2052 = vunpack.c.l.b16 %v561
        %v2053 = vunpack.c.h.b16 %v561
        %v2054 = vunpack.c.l.b16 %v562
        %v2055 = vunpack.c.h.b16 %v562
        %v2056 = vunpack.c.l.b16 %v563
        %v2057 = vunpack.c.h.b16 %v563
        %v2058 = vunpack.c.l.b16 %v564
        %v2059 = vunpack.c.h.b16 %v564
        %v2060 = vunpack.c.l.b16 %v565
        %v2061 = vunpack.c.h.b16 %v565
        %v2062 = vunpack.c.l.b16 %v566
        %v2063 = vunpack.c.h.b16 %v566
        %v2064 = vunpack.c.l.b16 %v567
        %v2065 = vunpack.c.h.b16 %v567
        %v2066 = vunpack.c.l.b16 %v568
        %v2067 = vunpack.c.h.b16 %v568
        %v2068 = vunpack.c.l.b16 %v569
        %v2069 = vunpack.c.h.b16 %v569
        %v2070 = vunpack.c.l.b16 %v570
        %v2071 = vunpack.c.h.b16 %v570
        %v2072 = vunpack.c.l.b16 %v571
        %v2073 = vunpack.c.h.b16 %v571
        %v2074 = vunpack.c.l.b16 %v572
        %v2075 = vunpack.c.h.b16 %v572
        %v2076 = vunpack.c.l.b16 %v573
        %v2077 = vunpack.c.h.b16 %v573
        %v2078 = vunpack.c.l.b16 %v574
        %v2079 = vunpack.c.h.b16 %v574
        %v2080 = vunpack.c.l.b16 %v575
        %v2081 = vunpack.c.h.b16 %v575
        %v2082 = vunpack.c.l.b16 %v576
        %v2083 = vunpack.c.h.b16 %v576
        %v2084 = vunpack.c.l.b16 %v577
        %v2085 = vunpack.c.h.b16 %v577
        %v2086 = vunpack.c.l.b16 %v578
        %v2087 = vunpack.c.h.b16 %v578
        %v2088 = vunpack.c.l.b16 %v579
        %v2089 = vunpack.c.h.b16 %v579
        %v2090 = vunpack.c.l.b16 %v580
        %v2091 = vunpack.c.h.b16 %v580
        %v2092 = vunpack.c.l.b16 %v581
        %v2093 = vunpack.c.h.b16 %v581
        %v2094 = vunpack.c.l.b16 %v582
        %v2095 = vunpack.c.h.b16 %v582
        %v2096 = vunpack.c.l.b16 %v583
        %v2097 = vunpack.c.h.b16 %v583
        %v2098 = vunpack.c.l.b16 %v584
        %v2099 = vunpack.c.h.b16 %v584
        %v2100 = vunpack.c.l.b16 %v585
        %v2101 = vunpack.c.h.b16 %v585
        %v2102 = vunpack.c.l.b16 %v586
        %v2103 = vunpack.c.h.b16 %v586
        %v2104 = vunpack.c.l.b16 %v587
        %v2105 = vunpack.c.h.b16 %v587
        %v2106 = vunpack.c.l.b16 %v588
        %v2107 = vunpack.c.h.b16 %v588
        %v2108 = vunpack.c.l.b16 %v589
        %v2109 = vunpack.c.h.b16 %v589
        %v2110 = vunpack.c.l.b16 %v590
        %v2111 = vunpack.c.h.b16 %v590
        %v2112 = vunpack.c.l.b16 %v591
        %v2113 = vunpack.c.h.b16 %v591
        %v2114 = vunpack.c.l.b16 %v592
        %v2115 = vunpack.c.h.b16 %v592
        %v2116 = vunpack.c.l.b16 %v593
        %v2117 = vunpack.c.h.b16 %v593
        %v2118 = vunpack.c.l.b16 %v594
        %v2119 = vunpack.c.h.b16 %v594
        %v2120 = vunpack.c.l.b16 %v595
        %v2121 = vunpack.c.h.b16 %v595
        %v2122 = vunpack.c.l.b16 %v596
        %v2123 = vunpack.c.h.b16 %v596
        %v2124 = vunpack.c.l.b16 %v597
        %v2125 = vunpack.c.h.b16 %v597
        %v2126 = vunpack.c.l.b16 %v598
        %v2127 = vunpack.c.h.b16 %v598
        %v2128 = vunpack.c.l.b16 %v599
        %v2129 = vunpack.c.h.b16 %v599
        %v2130 = vunpack.c.l.b16 %v600
        %v2131 = vunpack.c.h.b16 %v600
        %v2132 = vunpack.c.l.b16 %v601
        %v2133 = vunpack.c.h.b16 %v601
        %v2134 = vunpack.c.l.b16 %v602
        %v2135 = vunpack.c.h.b16 %v602
        %v2136 = vunpack.c.l.b16 %v603
        %v2137 = vunpack.c.h.b16 %v603
        %v2138 = vunpack.c.l.b16 %v604
        %v2139 = vunpack.c.h.b16 %v604
        %v2140 = vunpack.c.l.b16 %v605
        %v2141 = vunpack.c.h.b16 %v605
        %v2142 = vpack.c.b16 %v1760, %v1758
        %v2143 = vpack.c.b16 %v1761, %v1759
        %v2144 = vpack.c.b16 %v1764, %v1762
        %v2145 = vpack.c.b16 %v1765, %v1763
        %v2146 = vpack.c.b16 %v1768, %v1766
        %v2147 = vpack.c.b16 %v1769, %v1767
        %v2148 = vpack.c.b16 %v1772, %v1770
        %v2149 = vpack.c.b16 %v1773, %v1771
        %v2150 = vpack.c.b16 %v1776, %v1774
        %v2151 = vpack.c.b16 %v1777, %v1775
        %v2152 = vpack.c.b16 %v1780, %v1778
        %v2153 = vpack.c.b16 %v1781, %v1779
        %v2154 = vpack.c.b16 %v1784, %v1782
        %v2155 = vpack.c.b16 %v1785, %v1783
        %v2156 = vpack.c.b16 %v1788, %v1786
        %v2157 = vpack.c.b16 %v1789, %v1787
        %v2158 = vpack.c.b16 %v1792, %v1790
        %v2159 = vpack.c.b16 %v1793, %v1791
        %v2160 = vpack.c.b16 %v1796, %v1794
        %v2161 = vpack.c.b16 %v1797, %v1795
        %v2162 = vpack.c.b16 %v1800, %v1798
        %v2163 = vpack.c.b16 %v1801, %v1799
        %v2164 = vpack.c.b16 %v1804, %v1802
        %v2165 = vpack.c.b16 %v1805, %v1803
        %v2166 = vpack.c.b16 %v1808, %v1806
        %v2167 = vpack.c.b16 %v1809, %v1807
        %v2168 = vpack.c.b16 %v1812, %v1810
        %v2169 = vpack.c.b16 %v1813, %v1811
        %v2170 = vpack.c.b16 %v1816, %v1814
        %v2171 = vpack.c.b16 %v1817, %v1815
        %v2172 = vpack.c.b16 %v1820, %v1818
        %v2173 = vpack.c.b16 %v1821, %v1819
        %v2174 = vpack.c.b16 %v1824, %v1822
        %v2175 = vpack.c.b16 %v1825, %v1823
        %v2176 = vpack.c.b16 %v1828, %v1826
        %v2177 = vpack.c.b16 %v1829, %v1827
        %v2178 = vpack.c.b16 %v1832, %v1830
        %v2179 = vpack.c.b16 %v1833, %v1831
        %v2180 = vpack.c.b16 %v1836, %v1834
        %v2181 = vpack.c.b16 %v1837, %v1835
        %v2182 = vpack.c.b16 %v1840, %v1838
        %v2183 = vpack.c.b16 %v1841, %v1839
        %v2184 = vpack.c.b16 %v1844, %v1842
        %v2185 = vpack.c.b16 %v1845, %v1843
        %v2186 = vpack.c.b16 %v1848, %v1846
        %v2187 = vpack.c.b16 %v1849, %v1847
        %v2188 = vpack.c.b16 %v1852, %v1850
        %v2189 = vpack.c.b16 %v1853, %v1851
        %v2190 = vpack.c.b16 %v1856, %v1854
        %v2191 = vpack.c.b16 %v1857, %v1855
        %v2192 = vpack.c.b16 %v1860, %v1858
        %v2193 = vpack.c.b16 %v1861, %v1859
        %v2194 = vpack.c.b16 %v1864, %v1862
        %v2195 = vpack.c.b16 %v1865, %v1863
        %v2196 = vpack.c.b16 %v1868, %v1866
        %v2197 = vpack.c.b16 %v1869, %v1867
        %v2198 = vpack.c.b16 %v1872, %v1870
        %v2199 = vpack.c.b16 %v1873, %v1871
        %v2200 = vpack.c.b16 %v1876, %v1874
        %v2201 = vpack.c.b16 %v1877, %v1875
        %v2202 = vpack.c.b16 %v1880, %v1878
        %v2203 = vpack.c.b16 %v1881, %v1879
        %v2204 = vpack.c.b16 %v1884, %v1882
        %v2205 = vpack.c.b16 %v1885, %v1883
        %v2206 = vpack.c.b16 %v1888, %v1886
        %v2207 = vpack.c.b16 %v1889, %v1887
        %v2208 = vpack.c.b16 %v1892, %v1890
        %v2209 = vpack.c.b16 %v1893, %v1891
        %v2210 = vpack.c.b16 %v1896, %v1894
        %v2211 = vpack.c.b16 %v1897, %v1895
        %v2212 = vpack.c.b16 %v1900, %v1898
        %v2213 = vpack.c.b16 %v1901, %v1899
        %v2214 = vpack.c.b16 %v1904, %v1902
        %v2215 = vpack.c.b16 %v1905, %v1903
        %v2216 = vpack.c.b16 %v1908, %v1906
        %v2217 = vpack.c.b16 %v1909, %v1907
        %v2218 = vpack.c.b16 %v1912, %v1910
        %v2219 = vpack.c.b16 %v1913, %v1911
        %v2220 = vpack.c.b16 %v1916, %v1914
        %v2221 = vpack.c.b16 %v1917, %v1915
        %v2222 = vpack.c.b16 %v1920, %v1918
        %v2223 = vpack.c.b16 %v1921, %v1919
        %v2224 = vpack.c.b16 %v1924, %v1922
        %v2225 = vpack.c.b16 %v1925, %v1923
        %v2226 = vpack.c.b16 %v1928, %v1926
        %v2227 = vpack.c.b16 %v1929, %v1927
        %v2228 = vpack.c.b16 %v1932, %v1930
        %v2229 = vpack.c.b16 %v1933, %v1931
        %v2230 = vpack.c.b16 %v1936, %v1934
        %v2231 = vpack.c.b16 %v1937, %v1935
        %v2232 = vpack.c.b16 %v1940, %v1938
        %v2233 = vpack.c.b16 %v1941, %v1939
        %v2234 = vpack.c.b16 %v1944, %v1942
        %v2235 = vpack.c.b16 %v1945, %v1943
        %v2236 = vpack.c.b16 %v1948, %v1946
        %v2237 = vpack.c.b16 %v1949, %v1947
        %v2238 = vpack.c.b16 %v1952, %v1950
        %v2239 = vpack.c.b16 %v1953, %v1951
        %v2240 = vpack.c.b16 %v1956, %v1954
        %v2241 = vpack.c.b16 %v1957, %v1955
        %v2242 = vpack.c.b16 %v1960, %v1958
        %v2243 = vpack.c.b16 %v1961, %v1959
        %v2244 = vpack.c.b16 %v1964, %v1962
        %v2245 = vpack.c.b16 %v1965, %v1963
        %v2246 = vpack.c.b16 %v1968, %v1966
        %v2247 = vpack.c.b16 %v1969, %v1967
        %v2248 = vpack.c.b16 %v1972, %v1970
        %v2249 = vpack.c.b16 %v1973, %v1971
        %v2250 = vpack.c.b16 %v1976, %v1974
        %v2251 = vpack.c.b16 %v1977, %v1975
        %v2252 = vpack.c.b16 %v1980, %v1978
        %v2253 = vpack.c.b16 %v1981, %v1979
        %v2254 = vpack.c.b16 %v1984, %v1982
        %v2255 = vpack.c.b16 %v1985, %v1983
        %v2256 = vpack.c.b16 %v1988, %v1986
        %v2257 = vpack.c.b16 %v1989, %v1987
        %v2258 = vpack.c.b16 %v1992, %v1990
        %v2259 = vpack.c.b16 %v1993, %v1991
        %v2260 = vpack.c.b16 %v1996, %v1994
        %v2261 = vpack.c.b16 %v1997, %v1995
        %v2262 = vpack.c.b16 %v2000, %v1998
        %v2263 = vpack.c.b16 %v2001, %v1999
        %v2264 = vpack.c.b16 %v2004, %v2002
        %v2265 = vpack.c.b16 %v2005, %v2003
        %v2266 = vpack.c.b16 %v2008, %v2006
        %v2267 = vpack.c.b16 %v2009, %v2007
        %v2268 = vpack.c.b16 %v2012, %v2010
        %v2269 = vpack.c.b16 %v2013, %v2011
        %v2270 = vpack.c.b16 %v2016, %v2014
        %v2271 = vpack.c.b16 %v2017, %v2015
        %v2272 = vpack.c.b16 %v2020, %v2018
        %v2273 = vpack.c.b16 %v2021, %v2019
        %v2274 = vpack.c.b16 %v2024, %v2022
        %v2275 = vpack.c.b16 %v2025, %v2023
        %v2276 = vpack.c.b16 %v2028, %v2026
        %v2277 = vpack.c.b16 %v2029, %v2027
        %v2278 = vpack.c.b16 %v2032, %v2030
        %v2279 = vpack.c.b16 %v2033, %v2031
        %v2280 = vpack.c.b16 %v2036, %v2034
        %v2281 = vpack.c.b16 %v2037, %v2035
        %v2282 = vpack.c.b16 %v2040, %v2038
        %v2283 = vpack.c.b16 %v2041, %v2039
        %v2284 = vpack.c.b16 %v2044, %v2042
        %v2285 = vpack.c.b16 %v2045, %v2043
        %v2286 = vpack.c.b16 %v2048, %v2046
        %v2287 = vpack.c.b16 %v2049, %v2047
        %v2288 = vpack.c.b16 %v2052, %v2050
        %v2289 = vpack.c.b16 %v2053, %v2051
        %v2290 = vpack.c.b16 %v2056, %v2054
        %v2291 = vpack.c.b16 %v2057, %v2055
        %v2292 = vpack.c.b16 %v2060, %v2058
        %v2293 = vpack.c.b16 %v2061, %v2059
        %v2294 = vpack.c.b16 %v2064, %v2062
        %v2295 = vpack.c.b16 %v2065, %v2063
        %v2296 = vpack.c.b16 %v2068, %v2066
        %v2297 = vpack.c.b16 %v2069, %v2067
        %v2298 = vpack.c.b16 %v2072, %v2070
        %v2299 = vpack.c.b16 %v2073, %v2071
        %v2300 = vpack.c.b16 %v2076, %v2074
        %v2301 = vpack.c.b16 %v2077, %v2075
        %v2302 = vpack.c.b16 %v2080, %v2078
        %v2303 = vpack.c.b16 %v2081, %v2079
        %v2304 = vpack.c.b16 %v2084, %v2082
        %v2305 = vpack.c.b16 %v2085, %v2083
        %v2306 = vpack.c.b16 %v2088, %v2086
        %v2307 = vpack.c.b16 %v2089, %v2087
        %v2308 = vpack.c.b16 %v2092, %v2090
        %v2309 = vpack.c.b16 %v2093, %v2091
        %v2310 = vpack.c.b16 %v2096, %v2094
        %v2311 = vpack.c.b16 %v2097, %v2095
        %v2312 = vpack.c.b16 %v2100, %v2098
        %v2313 = vpack.c.b16 %v2101, %v2099
        %v2314 = vpack.c.b16 %v2104, %v2102
        %v2315 = vpack.c.b16 %v2105, %v2103
        %v2316 = vpack.c.b16 %v2108, %v2106
        %v2317 = vpack.c.b16 %v2109, %v2107
        %v2318 = vpack.c.b16 %v2112, %v2110
        %v2319 = vpack.c.b16 %v2113, %v2111
        %v2320 = vpack.c.b16 %v2116, %v2114
        %v2321 = vpack.c.b16 %v2117, %v2115
        %v2322 = vpack.c.b16 %v2120, %v2118
        %v2323 = vpack.c.b16 %v2121, %v2119
        %v2324 = vpack.c.b16 %v2124, %v2122
        %v2325 = vpack.c.b16 %v2125, %v2123
        %v2326 = vpack.c.b16 %v2128, %v2126
        %v2327 = vpack.c.b16 %v2129, %v2127
        %v2328 = vpack.c.b16 %v2132, %v2130
        %v2329 = vpack.c.b16 %v2133, %v2131
        %v2330 = vpack.c.b16 %v2136, %v2134
        %v2331 = vpack.c.b16 %v2137, %v2135
        %v2332 = vpack.c.b16 %v2140, %v2138
        %v2333 = vpack.c.b16 %v2141, %v2139
        %2526 = vmatpush.bf16.msra.mxu0 %v2156
        %2527 = vmatpush.bf16.msra.mxu0 %v2154
        %2528 = vmatpush.bf16.msra.mxu0 %v2152
        %2529 = vmatpush.bf16.msra.mxu0 %v2150
        %2530 = vmatpush.bf16.msra.mxu0 %v2148
        %2531 = vmatpush.bf16.msra.mxu0 %v2146
        %2532 = vmatpush.bf16.msra.mxu0 %v2144
        %2533 = vmatpush.bf16.msra.mxu0 %v2142
        %2534 = vmatmul.bf16.gmra.mxu0 %v1182
        %v2535 = vpop.f32.mrf.mxu0
        %v2536 = vadd.f32 0.0, %v2535
        %v2537 = vpop.f32.mrf.mxu0
        %v2538 = vadd.f32 0.0, %v2537
        %2539 = vmatmul.bf16.gmra.mxu0 %v1194
        %v2540 = vpop.f32.mrf.mxu0
        %v2541 = vadd.f32 0.0, %v2540
        %v2542 = vpop.f32.mrf.mxu0
        %v2543 = vadd.f32 0.0, %v2542
        %2544 = vmatmul.bf16.gmra.mxu0 %v1206
        %v2545 = vpop.f32.mrf.mxu0
        %v2546 = vadd.f32 0.0, %v2545
        %v2547 = vpop.f32.mrf.mxu0
        %v2548 = vadd.f32 0.0, %v2547
        %2549 = vmatmul.bf16.gmra.mxu0 %v1218
        %v2550 = vpop.f32.mrf.mxu0
        %v2551 = vadd.f32 0.0, %v2550
        %v2552 = vpop.f32.mrf.mxu0
        %v2553 = vadd.f32 0.0, %v2552
        %2554 = vmatmul.bf16.gmra.mxu0 %v1230
        %v2555 = vpop.f32.mrf.mxu0
        %v2556 = vadd.f32 0.0, %v2555
        %v2557 = vpop.f32.mrf.mxu0
        %v2558 = vadd.f32 0.0, %v2557
        %2559 = vmatmul.bf16.gmra.mxu0 %v1242
        %v2560 = vpop.f32.mrf.mxu0
        %v2561 = vadd.f32 0.0, %v2560
        %v2562 = vpop.f32.mrf.mxu0
        %v2563 = vadd.f32 0.0, %v2562
        %2564 = vmatmul.bf16.gmra.mxu0 %v1254
        %v2565 = vpop.f32.mrf.mxu0
        %v2566 = vadd.f32 0.0, %v2565
        %v2567 = vpop.f32.mrf.mxu0
        %v2568 = vadd.f32 0.0, %v2567
        %2569 = vmatmul.bf16.gmra.mxu0 %v1266
        %v2570 = vpop.f32.mrf.mxu0
        %v2571 = vadd.f32 0.0, %v2570
        %v2572 = vpop.f32.mrf.mxu0
        %v2573 = vadd.f32 0.0, %v2572
        %2574 = vmatmul.bf16.gmra.mxu0 %v1278
        %v2575 = vpop.f32.mrf.mxu0
        %v2576 = vadd.f32 0.0, %v2575
        %v2577 = vpop.f32.mrf.mxu0
        %v2578 = vadd.f32 0.0, %v2577
        %2579 = vmatmul.bf16.gmra.mxu0 %v1290
        %v2580 = vpop.f32.mrf.mxu0
        %v2581 = vadd.f32 0.0, %v2580
        %v2582 = vpop.f32.mrf.mxu0
        %v2583 = vadd.f32 0.0, %v2582
        %2584 = vmatmul.bf16.gmra.mxu0 %v1302
        %v2585 = vpop.f32.mrf.mxu0
        %v2586 = vadd.f32 0.0, %v2585
        %v2587 = vpop.f32.mrf.mxu0
        %v2588 = vadd.f32 0.0, %v2587
        %2589 = vmatmul.bf16.gmra.mxu0 %v1314
        %v2590 = vpop.f32.mrf.mxu0
        %v2591 = vadd.f32 0.0, %v2590
        %v2592 = vpop.f32.mrf.mxu0
        %v2593 = vadd.f32 0.0, %v2592
        %2594 = vmatmul.bf16.gmra.mxu0 %v1326
        %v2595 = vpop.f32.mrf.mxu0
        %v2596 = vadd.f32 0.0, %v2595
        %v2597 = vpop.f32.mrf.mxu0
        %v2598 = vadd.f32 0.0, %v2597
        %2599 = vmatmul.bf16.gmra.mxu0 %v1338
        %v2600 = vpop.f32.mrf.mxu0
        %v2601 = vadd.f32 0.0, %v2600
        %v2602 = vpop.f32.mrf.mxu0
        %v2603 = vadd.f32 0.0, %v2602
        %2604 = vmatmul.bf16.gmra.mxu0 %v1350
        %v2605 = vpop.f32.mrf.mxu0
        %v2606 = vadd.f32 0.0, %v2605
        %v2607 = vpop.f32.mrf.mxu0
        %v2608 = vadd.f32 0.0, %v2607
        %2609 = vmatmul.bf16.gmra.mxu0 %v1362
        %v2610 = vpop.f32.mrf.mxu0
        %v2611 = vadd.f32 0.0, %v2610
        %v2612 = vpop.f32.mrf.mxu0
        %v2613 = vadd.f32 0.0, %v2612
        %2614 = vdwg.mxu0
        %2615 = vmatpush.bf16.msra.mxu0 %v2172
        %2616 = vmatpush.bf16.msra.mxu0 %v2170
        %2617 = vmatpush.bf16.msra.mxu0 %v2168
        %2618 = vmatpush.bf16.msra.mxu0 %v2166
        %2619 = vmatpush.bf16.msra.mxu0 %v2164
        %2620 = vmatpush.bf16.msra.mxu0 %v2162
        %2621 = vmatpush.bf16.msra.mxu0 %v2160
        %2622 = vmatpush.bf16.msra.mxu0 %v2158
        %2623 = vmatmul.bf16.gmra.mxu0 %v1183
        %v2624 = vpop.f32.mrf.mxu0
        %v2625 = vadd.f32 %v2536, %v2624
        %v2626 = vpop.f32.mrf.mxu0
        %v2627 = vadd.f32 %v2538, %v2626
        %2628 = vmatmul.bf16.gmra.mxu0 %v1195
        %v2629 = vpop.f32.mrf.mxu0
        %v2630 = vadd.f32 %v2541, %v2629
        %v2631 = vpop.f32.mrf.mxu0
        %v2632 = vadd.f32 %v2543, %v2631
        %2633 = vmatmul.bf16.gmra.mxu0 %v1207
        %v2634 = vpop.f32.mrf.mxu0
        %v2635 = vadd.f32 %v2546, %v2634
        %v2636 = vpop.f32.mrf.mxu0
        %v2637 = vadd.f32 %v2548, %v2636
        %2638 = vmatmul.bf16.gmra.mxu0 %v1219
        %v2639 = vpop.f32.mrf.mxu0
        %v2640 = vadd.f32 %v2551, %v2639
        %v2641 = vpop.f32.mrf.mxu0
        %v2642 = vadd.f32 %v2553, %v2641
        %2643 = vmatmul.bf16.gmra.mxu0 %v1231
        %v2644 = vpop.f32.mrf.mxu0
        %v2645 = vadd.f32 %v2556, %v2644
        %v2646 = vpop.f32.mrf.mxu0
        %v2647 = vadd.f32 %v2558, %v2646
        %2648 = vmatmul.bf16.gmra.mxu0 %v1243
        %v2649 = vpop.f32.mrf.mxu0
        %v2650 = vadd.f32 %v2561, %v2649
        %v2651 = vpop.f32.mrf.mxu0
        %v2652 = vadd.f32 %v2563, %v2651
        %2653 = vmatmul.bf16.gmra.mxu0 %v1255
        %v2654 = vpop.f32.mrf.mxu0
        %v2655 = vadd.f32 %v2566, %v2654
        %v2656 = vpop.f32.mrf.mxu0
        %v2657 = vadd.f32 %v2568, %v2656
        %2658 = vmatmul.bf16.gmra.mxu0 %v1267
        %v2659 = vpop.f32.mrf.mxu0
        %v2660 = vadd.f32 %v2571, %v2659
        %v2661 = vpop.f32.mrf.mxu0
        %v2662 = vadd.f32 %v2573, %v2661
        %2663 = vmatmul.bf16.gmra.mxu0 %v1279
        %v2664 = vpop.f32.mrf.mxu0
        %v2665 = vadd.f32 %v2576, %v2664
        %v2666 = vpop.f32.mrf.mxu0
        %v2667 = vadd.f32 %v2578, %v2666
        %2668 = vmatmul.bf16.gmra.mxu0 %v1291
        %v2669 = vpop.f32.mrf.mxu0
        %v2670 = vadd.f32 %v2581, %v2669
        %v2671 = vpop.f32.mrf.mxu0
        %v2672 = vadd.f32 %v2583, %v2671
        %2673 = vmatmul.bf16.gmra.mxu0 %v1303
        %v2674 = vpop.f32.mrf.mxu0
        %v2675 = vadd.f32 %v2586, %v2674
        %v2676 = vpop.f32.mrf.mxu0
        %v2677 = vadd.f32 %v2588, %v2676
        %2678 = vmatmul.bf16.gmra.mxu0 %v1315
        %v2679 = vpop.f32.mrf.mxu0
        %v2680 = vadd.f32 %v2591, %v2679
        %v2681 = vpop.f32.mrf.mxu0
        %v2682 = vadd.f32 %v2593, %v2681
        %2683 = vmatmul.bf16.gmra.mxu0 %v1327
        %v2684 = vpop.f32.mrf.mxu0
        %v2685 = vadd.f32 %v2596, %v2684
        %v2686 = vpop.f32.mrf.mxu0
        %v2687 = vadd.f32 %v2598, %v2686
        %2688 = vmatmul.bf16.gmra.mxu0 %v1339
        %v2689 = vpop.f32.mrf.mxu0
        %v2690 = vadd.f32 %v2601, %v2689
        %v2691 = vpop.f32.mrf.mxu0
        %v2692 = vadd.f32 %v2603, %v2691
        %2693 = vmatmul.bf16.gmra.mxu0 %v1351
        %v2694 = vpop.f32.mrf.mxu0
        %v2695 = vadd.f32 %v2606, %v2694
        %v2696 = vpop.f32.mrf.mxu0
        %v2697 = vadd.f32 %v2608, %v2696
        %2698 = vmatmul.bf16.gmra.mxu0 %v1363
        %v2699 = vpop.f32.mrf.mxu0
        %v2700 = vadd.f32 %v2611, %v2699
        %v2701 = vpop.f32.mrf.mxu0
        %v2702 = vadd.f32 %v2613, %v2701
        %2703 = vdwg.mxu0
        %2704 = vmatpush.bf16.msra.mxu0 %v2188
        %2705 = vmatpush.bf16.msra.mxu0 %v2186
        %2706 = vmatpush.bf16.msra.mxu0 %v2184
        %2707 = vmatpush.bf16.msra.mxu0 %v2182
        %2708 = vmatpush.bf16.msra.mxu0 %v2180
        %2709 = vmatpush.bf16.msra.mxu0 %v2178
        %2710 = vmatpush.bf16.msra.mxu0 %v2176
        %2711 = vmatpush.bf16.msra.mxu0 %v2174
        %2712 = vmatmul.bf16.gmra.mxu0 %v1184
        %v2713 = vpop.f32.mrf.mxu0
        %v2714 = vadd.f32 %v2625, %v2713
        %v2715 = vpop.f32.mrf.mxu0
        %v2716 = vadd.f32 %v2627, %v2715
        %2717 = vmatmul.bf16.gmra.mxu0 %v1196
        %v2718 = vpop.f32.mrf.mxu0
        %v2719 = vadd.f32 %v2630, %v2718
        %v2720 = vpop.f32.mrf.mxu0
        %v2721 = vadd.f32 %v2632, %v2720
        %2722 = vmatmul.bf16.gmra.mxu0 %v1208
        %v2723 = vpop.f32.mrf.mxu0
        %v2724 = vadd.f32 %v2635, %v2723
        %v2725 = vpop.f32.mrf.mxu0
        %v2726 = vadd.f32 %v2637, %v2725
        %2727 = vmatmul.bf16.gmra.mxu0 %v1220
        %v2728 = vpop.f32.mrf.mxu0
        %v2729 = vadd.f32 %v2640, %v2728
        %v2730 = vpop.f32.mrf.mxu0
        %v2731 = vadd.f32 %v2642, %v2730
        %2732 = vmatmul.bf16.gmra.mxu0 %v1232
        %v2733 = vpop.f32.mrf.mxu0
        %v2734 = vadd.f32 %v2645, %v2733
        %v2735 = vpop.f32.mrf.mxu0
        %v2736 = vadd.f32 %v2647, %v2735
        %2737 = vmatmul.bf16.gmra.mxu0 %v1244
        %v2738 = vpop.f32.mrf.mxu0
        %v2739 = vadd.f32 %v2650, %v2738
        %v2740 = vpop.f32.mrf.mxu0
        %v2741 = vadd.f32 %v2652, %v2740
        %2742 = vmatmul.bf16.gmra.mxu0 %v1256
        %v2743 = vpop.f32.mrf.mxu0
        %v2744 = vadd.f32 %v2655, %v2743
        %v2745 = vpop.f32.mrf.mxu0
        %v2746 = vadd.f32 %v2657, %v2745
        %2747 = vmatmul.bf16.gmra.mxu0 %v1268
        %v2748 = vpop.f32.mrf.mxu0
        %v2749 = vadd.f32 %v2660, %v2748
        %v2750 = vpop.f32.mrf.mxu0
        %v2751 = vadd.f32 %v2662, %v2750
        %2752 = vmatmul.bf16.gmra.mxu0 %v1280
        %v2753 = vpop.f32.mrf.mxu0
        %v2754 = vadd.f32 %v2665, %v2753
        %v2755 = vpop.f32.mrf.mxu0
        %v2756 = vadd.f32 %v2667, %v2755
        %2757 = vmatmul.bf16.gmra.mxu0 %v1292
        %v2758 = vpop.f32.mrf.mxu0
        %v2759 = vadd.f32 %v2670, %v2758
        %v2760 = vpop.f32.mrf.mxu0
        %v2761 = vadd.f32 %v2672, %v2760
        %2762 = vmatmul.bf16.gmra.mxu0 %v1304
        %v2763 = vpop.f32.mrf.mxu0
        %v2764 = vadd.f32 %v2675, %v2763
        %v2765 = vpop.f32.mrf.mxu0
        %v2766 = vadd.f32 %v2677, %v2765
        %2767 = vmatmul.bf16.gmra.mxu0 %v1316
        %v2768 = vpop.f32.mrf.mxu0
        %v2769 = vadd.f32 %v2680, %v2768
        %v2770 = vpop.f32.mrf.mxu0
        %v2771 = vadd.f32 %v2682, %v2770
        %2772 = vmatmul.bf16.gmra.mxu0 %v1328
        %v2773 = vpop.f32.mrf.mxu0
        %v2774 = vadd.f32 %v2685, %v2773
        %v2775 = vpop.f32.mrf.mxu0
        %v2776 = vadd.f32 %v2687, %v2775
        %2777 = vmatmul.bf16.gmra.mxu0 %v1340
        %v2778 = vpop.f32.mrf.mxu0
        %v2779 = vadd.f32 %v2690, %v2778
        %v2780 = vpop.f32.mrf.mxu0
        %v2781 = vadd.f32 %v2692, %v2780
        %2782 = vmatmul.bf16.gmra.mxu0 %v1352
        %v2783 = vpop.f32.mrf.mxu0
        %v2784 = vadd.f32 %v2695, %v2783
        %v2785 = vpop.f32.mrf.mxu0
        %v2786 = vadd.f32 %v2697, %v2785
        %2787 = vmatmul.bf16.gmra.mxu0 %v1364
        %v2788 = vpop.f32.mrf.mxu0
        %v2789 = vadd.f32 %v2700, %v2788
        %v2790 = vpop.f32.mrf.mxu0
        %v2791 = vadd.f32 %v2702, %v2790
        %2792 = vdwg.mxu0
        %2793 = vmatpush.bf16.msra.mxu0 %v2204
        %2794 = vmatpush.bf16.msra.mxu0 %v2202
        %2795 = vmatpush.bf16.msra.mxu0 %v2200
        %2796 = vmatpush.bf16.msra.mxu0 %v2198
        %2797 = vmatpush.bf16.msra.mxu0 %v2196
        %2798 = vmatpush.bf16.msra.mxu0 %v2194
        %2799 = vmatpush.bf16.msra.mxu0 %v2192
        %2800 = vmatpush.bf16.msra.mxu0 %v2190
        %2801 = vmatmul.bf16.gmra.mxu0 %v1185
        %v2802 = vpop.f32.mrf.mxu0
        %v2803 = vadd.f32 %v2714, %v2802
        %v2804 = vpop.f32.mrf.mxu0
        %v2805 = vadd.f32 %v2716, %v2804
        %2806 = vmatmul.bf16.gmra.mxu0 %v1197
        %v2807 = vpop.f32.mrf.mxu0
        %v2808 = vadd.f32 %v2719, %v2807
        %v2809 = vpop.f32.mrf.mxu0
        %v2810 = vadd.f32 %v2721, %v2809
        %2811 = vmatmul.bf16.gmra.mxu0 %v1209
        %v2812 = vpop.f32.mrf.mxu0
        %v2813 = vadd.f32 %v2724, %v2812
        %v2814 = vpop.f32.mrf.mxu0
        %v2815 = vadd.f32 %v2726, %v2814
        %2816 = vmatmul.bf16.gmra.mxu0 %v1221
        %v2817 = vpop.f32.mrf.mxu0
        %v2818 = vadd.f32 %v2729, %v2817
        %v2819 = vpop.f32.mrf.mxu0
        %v2820 = vadd.f32 %v2731, %v2819
        %2821 = vmatmul.bf16.gmra.mxu0 %v1233
        %v2822 = vpop.f32.mrf.mxu0
        %v2823 = vadd.f32 %v2734, %v2822
        %v2824 = vpop.f32.mrf.mxu0
        %v2825 = vadd.f32 %v2736, %v2824
        %2826 = vmatmul.bf16.gmra.mxu0 %v1245
        %v2827 = vpop.f32.mrf.mxu0
        %v2828 = vadd.f32 %v2739, %v2827
        %v2829 = vpop.f32.mrf.mxu0
        %v2830 = vadd.f32 %v2741, %v2829
        %2831 = vmatmul.bf16.gmra.mxu0 %v1257
        %v2832 = vpop.f32.mrf.mxu0
        %v2833 = vadd.f32 %v2744, %v2832
        %v2834 = vpop.f32.mrf.mxu0
        %v2835 = vadd.f32 %v2746, %v2834
        %2836 = vmatmul.bf16.gmra.mxu0 %v1269
        %v2837 = vpop.f32.mrf.mxu0
        %v2838 = vadd.f32 %v2749, %v2837
        %v2839 = vpop.f32.mrf.mxu0
        %v2840 = vadd.f32 %v2751, %v2839
        %2841 = vmatmul.bf16.gmra.mxu0 %v1281
        %v2842 = vpop.f32.mrf.mxu0
        %v2843 = vadd.f32 %v2754, %v2842
        %v2844 = vpop.f32.mrf.mxu0
        %v2845 = vadd.f32 %v2756, %v2844
        %2846 = vmatmul.bf16.gmra.mxu0 %v1293
        %v2847 = vpop.f32.mrf.mxu0
        %v2848 = vadd.f32 %v2759, %v2847
        %v2849 = vpop.f32.mrf.mxu0
        %v2850 = vadd.f32 %v2761, %v2849
        %2851 = vmatmul.bf16.gmra.mxu0 %v1305
        %v2852 = vpop.f32.mrf.mxu0
        %v2853 = vadd.f32 %v2764, %v2852
        %v2854 = vpop.f32.mrf.mxu0
        %v2855 = vadd.f32 %v2766, %v2854
        %2856 = vmatmul.bf16.gmra.mxu0 %v1317
        %v2857 = vpop.f32.mrf.mxu0
        %v2858 = vadd.f32 %v2769, %v2857
        %v2859 = vpop.f32.mrf.mxu0
        %v2860 = vadd.f32 %v2771, %v2859
        %2861 = vmatmul.bf16.gmra.mxu0 %v1329
        %v2862 = vpop.f32.mrf.mxu0
        %v2863 = vadd.f32 %v2774, %v2862
        %v2864 = vpop.f32.mrf.mxu0
        %v2865 = vadd.f32 %v2776, %v2864
        %2866 = vmatmul.bf16.gmra.mxu0 %v1341
        %v2867 = vpop.f32.mrf.mxu0
        %v2868 = vadd.f32 %v2779, %v2867
        %v2869 = vpop.f32.mrf.mxu0
        %v2870 = vadd.f32 %v2781, %v2869
        %2871 = vmatmul.bf16.gmra.mxu0 %v1353
        %v2872 = vpop.f32.mrf.mxu0
        %v2873 = vadd.f32 %v2784, %v2872
        %v2874 = vpop.f32.mrf.mxu0
        %v2875 = vadd.f32 %v2786, %v2874
        %2876 = vmatmul.bf16.gmra.mxu0 %v1365
        %v2877 = vpop.f32.mrf.mxu0
        %v2878 = vadd.f32 %v2789, %v2877
        %v2879 = vpop.f32.mrf.mxu0
        %v2880 = vadd.f32 %v2791, %v2879
        %2881 = vdwg.mxu0
        %2882 = vmatpush.bf16.msra.mxu0 %v2220
        %2883 = vmatpush.bf16.msra.mxu0 %v2218
        %2884 = vmatpush.bf16.msra.mxu0 %v2216
        %2885 = vmatpush.bf16.msra.mxu0 %v2214
        %2886 = vmatpush.bf16.msra.mxu0 %v2212
        %2887 = vmatpush.bf16.msra.mxu0 %v2210
        %2888 = vmatpush.bf16.msra.mxu0 %v2208
        %2889 = vmatpush.bf16.msra.mxu0 %v2206
        %2890 = vmatmul.bf16.gmra.mxu0 %v1186
        %v2891 = vpop.f32.mrf.mxu0
        %v2892 = vadd.f32 %v2803, %v2891
        %v2893 = vpop.f32.mrf.mxu0
        %v2894 = vadd.f32 %v2805, %v2893
        %2895 = vmatmul.bf16.gmra.mxu0 %v1198
        %v2896 = vpop.f32.mrf.mxu0
        %v2897 = vadd.f32 %v2808, %v2896
        %v2898 = vpop.f32.mrf.mxu0
        %v2899 = vadd.f32 %v2810, %v2898
        %2900 = vmatmul.bf16.gmra.mxu0 %v1210
        %v2901 = vpop.f32.mrf.mxu0
        %v2902 = vadd.f32 %v2813, %v2901
        %v2903 = vpop.f32.mrf.mxu0
        %v2904 = vadd.f32 %v2815, %v2903
        %2905 = vmatmul.bf16.gmra.mxu0 %v1222
        %v2906 = vpop.f32.mrf.mxu0
        %v2907 = vadd.f32 %v2818, %v2906
        %v2908 = vpop.f32.mrf.mxu0
        %v2909 = vadd.f32 %v2820, %v2908
        %2910 = vmatmul.bf16.gmra.mxu0 %v1234
        %v2911 = vpop.f32.mrf.mxu0
        %v2912 = vadd.f32 %v2823, %v2911
        %v2913 = vpop.f32.mrf.mxu0
        %v2914 = vadd.f32 %v2825, %v2913
        %2915 = vmatmul.bf16.gmra.mxu0 %v1246
        %v2916 = vpop.f32.mrf.mxu0
        %v2917 = vadd.f32 %v2828, %v2916
        %v2918 = vpop.f32.mrf.mxu0
        %v2919 = vadd.f32 %v2830, %v2918
        %2920 = vmatmul.bf16.gmra.mxu0 %v1258
        %v2921 = vpop.f32.mrf.mxu0
        %v2922 = vadd.f32 %v2833, %v2921
        %v2923 = vpop.f32.mrf.mxu0
        %v2924 = vadd.f32 %v2835, %v2923
        %2925 = vmatmul.bf16.gmra.mxu0 %v1270
        %v2926 = vpop.f32.mrf.mxu0
        %v2927 = vadd.f32 %v2838, %v2926
        %v2928 = vpop.f32.mrf.mxu0
        %v2929 = vadd.f32 %v2840, %v2928
        %2930 = vmatmul.bf16.gmra.mxu0 %v1282
        %v2931 = vpop.f32.mrf.mxu0
        %v2932 = vadd.f32 %v2843, %v2931
        %v2933 = vpop.f32.mrf.mxu0
        %v2934 = vadd.f32 %v2845, %v2933
        %2935 = vmatmul.bf16.gmra.mxu0 %v1294
        %v2936 = vpop.f32.mrf.mxu0
        %v2937 = vadd.f32 %v2848, %v2936
        %v2938 = vpop.f32.mrf.mxu0
        %v2939 = vadd.f32 %v2850, %v2938
        %2940 = vmatmul.bf16.gmra.mxu0 %v1306
        %v2941 = vpop.f32.mrf.mxu0
        %v2942 = vadd.f32 %v2853, %v2941
        %v2943 = vpop.f32.mrf.mxu0
        %v2944 = vadd.f32 %v2855, %v2943
        %2945 = vmatmul.bf16.gmra.mxu0 %v1318
        %v2946 = vpop.f32.mrf.mxu0
        %v2947 = vadd.f32 %v2858, %v2946
        %v2948 = vpop.f32.mrf.mxu0
        %v2949 = vadd.f32 %v2860, %v2948
        %2950 = vmatmul.bf16.gmra.mxu0 %v1330
        %v2951 = vpop.f32.mrf.mxu0
        %v2952 = vadd.f32 %v2863, %v2951
        %v2953 = vpop.f32.mrf.mxu0
        %v2954 = vadd.f32 %v2865, %v2953
        %2955 = vmatmul.bf16.gmra.mxu0 %v1342
        %v2956 = vpop.f32.mrf.mxu0
        %v2957 = vadd.f32 %v2868, %v2956
        %v2958 = vpop.f32.mrf.mxu0
        %v2959 = vadd.f32 %v2870, %v2958
        %2960 = vmatmul.bf16.gmra.mxu0 %v1354
        %v2961 = vpop.f32.mrf.mxu0
        %v2962 = vadd.f32 %v2873, %v2961
        %v2963 = vpop.f32.mrf.mxu0
        %v2964 = vadd.f32 %v2875, %v2963
        %2965 = vmatmul.bf16.gmra.mxu0 %v1366
        %v2966 = vpop.f32.mrf.mxu0
        %v2967 = vadd.f32 %v2878, %v2966
        %v2968 = vpop.f32.mrf.mxu0
        %v2969 = vadd.f32 %v2880, %v2968
        %2970 = vdwg.mxu0
        %2971 = vmatpush.bf16.msra.mxu0 %v2236
        %2972 = vmatpush.bf16.msra.mxu0 %v2234
        %2973 = vmatpush.bf16.msra.mxu0 %v2232
        %2974 = vmatpush.bf16.msra.mxu0 %v2230
        %2975 = vmatpush.bf16.msra.mxu0 %v2228
        %2976 = vmatpush.bf16.msra.mxu0 %v2226
        %2977 = vmatpush.bf16.msra.mxu0 %v2224
        %2978 = vmatpush.bf16.msra.mxu0 %v2222
        %2979 = vmatmul.bf16.gmra.mxu0 %v1187
        %v2980 = vpop.f32.mrf.mxu0
        %v2981 = vadd.f32 %v2892, %v2980
        %v2982 = vpop.f32.mrf.mxu0
        %v2983 = vadd.f32 %v2894, %v2982
        %2984 = vmatmul.bf16.gmra.mxu0 %v1199
        %v2985 = vpop.f32.mrf.mxu0
        %v2986 = vadd.f32 %v2897, %v2985
        %v2987 = vpop.f32.mrf.mxu0
        %v2988 = vadd.f32 %v2899, %v2987
        %2989 = vmatmul.bf16.gmra.mxu0 %v1211
        %v2990 = vpop.f32.mrf.mxu0
        %v2991 = vadd.f32 %v2902, %v2990
        %v2992 = vpop.f32.mrf.mxu0
        %v2993 = vadd.f32 %v2904, %v2992
        %2994 = vmatmul.bf16.gmra.mxu0 %v1223
        %v2995 = vpop.f32.mrf.mxu0
        %v2996 = vadd.f32 %v2907, %v2995
        %v2997 = vpop.f32.mrf.mxu0
        %v2998 = vadd.f32 %v2909, %v2997
        %2999 = vmatmul.bf16.gmra.mxu0 %v1235
        %v3000 = vpop.f32.mrf.mxu0
        %v3001 = vadd.f32 %v2912, %v3000
        %v3002 = vpop.f32.mrf.mxu0
        %v3003 = vadd.f32 %v2914, %v3002
        %3004 = vmatmul.bf16.gmra.mxu0 %v1247
        %v3005 = vpop.f32.mrf.mxu0
        %v3006 = vadd.f32 %v2917, %v3005
        %v3007 = vpop.f32.mrf.mxu0
        %v3008 = vadd.f32 %v2919, %v3007
        %3009 = vmatmul.bf16.gmra.mxu0 %v1259
        %v3010 = vpop.f32.mrf.mxu0
        %v3011 = vadd.f32 %v2922, %v3010
        %v3012 = vpop.f32.mrf.mxu0
        %v3013 = vadd.f32 %v2924, %v3012
        %3014 = vmatmul.bf16.gmra.mxu0 %v1271
        %v3015 = vpop.f32.mrf.mxu0
        %v3016 = vadd.f32 %v2927, %v3015
        %v3017 = vpop.f32.mrf.mxu0
        %v3018 = vadd.f32 %v2929, %v3017
        %3019 = vmatmul.bf16.gmra.mxu0 %v1283
        %v3020 = vpop.f32.mrf.mxu0
        %v3021 = vadd.f32 %v2932, %v3020
        %v3022 = vpop.f32.mrf.mxu0
        %v3023 = vadd.f32 %v2934, %v3022
        %3024 = vmatmul.bf16.gmra.mxu0 %v1295
        %v3025 = vpop.f32.mrf.mxu0
        %v3026 = vadd.f32 %v2937, %v3025
        %v3027 = vpop.f32.mrf.mxu0
        %v3028 = vadd.f32 %v2939, %v3027
        %3029 = vmatmul.bf16.gmra.mxu0 %v1307
        %v3030 = vpop.f32.mrf.mxu0
        %v3031 = vadd.f32 %v2942, %v3030
        %v3032 = vpop.f32.mrf.mxu0
        %v3033 = vadd.f32 %v2944, %v3032
        %3034 = vmatmul.bf16.gmra.mxu0 %v1319
        %v3035 = vpop.f32.mrf.mxu0
        %v3036 = vadd.f32 %v2947, %v3035
        %v3037 = vpop.f32.mrf.mxu0
        %v3038 = vadd.f32 %v2949, %v3037
        %3039 = vmatmul.bf16.gmra.mxu0 %v1331
        %v3040 = vpop.f32.mrf.mxu0
        %v3041 = vadd.f32 %v2952, %v3040
        %v3042 = vpop.f32.mrf.mxu0
        %v3043 = vadd.f32 %v2954, %v3042
        %3044 = vmatmul.bf16.gmra.mxu0 %v1343
        %v3045 = vpop.f32.mrf.mxu0
        %v3046 = vadd.f32 %v2957, %v3045
        %v3047 = vpop.f32.mrf.mxu0
        %v3048 = vadd.f32 %v2959, %v3047
        %3049 = vmatmul.bf16.gmra.mxu0 %v1355
        %v3050 = vpop.f32.mrf.mxu0
        %v3051 = vadd.f32 %v2962, %v3050
        %v3052 = vpop.f32.mrf.mxu0
        %v3053 = vadd.f32 %v2964, %v3052
        %3054 = vmatmul.bf16.gmra.mxu0 %v1367
        %v3055 = vpop.f32.mrf.mxu0
        %v3056 = vadd.f32 %v2967, %v3055
        %v3057 = vpop.f32.mrf.mxu0
        %v3058 = vadd.f32 %v2969, %v3057
        %3059 = vdwg.mxu0
        %3060 = vmatpush.bf16.msra.mxu0 %v2252
        %3061 = vmatpush.bf16.msra.mxu0 %v2250
        %3062 = vmatpush.bf16.msra.mxu0 %v2248
        %3063 = vmatpush.bf16.msra.mxu0 %v2246
        %3064 = vmatpush.bf16.msra.mxu0 %v2244
        %3065 = vmatpush.bf16.msra.mxu0 %v2242
        %3066 = vmatpush.bf16.msra.mxu0 %v2240
        %3067 = vmatpush.bf16.msra.mxu0 %v2238
        %3068 = vmatmul.bf16.gmra.mxu0 %v1188
        %v3069 = vpop.f32.mrf.mxu0
        %v3070 = vadd.f32 %v2981, %v3069
        %v3071 = vpop.f32.mrf.mxu0
        %v3072 = vadd.f32 %v2983, %v3071
        %3073 = vmatmul.bf16.gmra.mxu0 %v1200
        %v3074 = vpop.f32.mrf.mxu0
        %v3075 = vadd.f32 %v2986, %v3074
        %v3076 = vpop.f32.mrf.mxu0
        %v3077 = vadd.f32 %v2988, %v3076
        %3078 = vmatmul.bf16.gmra.mxu0 %v1212
        %v3079 = vpop.f32.mrf.mxu0
        %v3080 = vadd.f32 %v2991, %v3079
        %v3081 = vpop.f32.mrf.mxu0
        %v3082 = vadd.f32 %v2993, %v3081
        %3083 = vmatmul.bf16.gmra.mxu0 %v1224
        %v3084 = vpop.f32.mrf.mxu0
        %v3085 = vadd.f32 %v2996, %v3084
        %v3086 = vpop.f32.mrf.mxu0
        %v3087 = vadd.f32 %v2998, %v3086
        %3088 = vmatmul.bf16.gmra.mxu0 %v1236
        %v3089 = vpop.f32.mrf.mxu0
        %v3090 = vadd.f32 %v3001, %v3089
        %v3091 = vpop.f32.mrf.mxu0
        %v3092 = vadd.f32 %v3003, %v3091
        %3093 = vmatmul.bf16.gmra.mxu0 %v1248
        %v3094 = vpop.f32.mrf.mxu0
        %v3095 = vadd.f32 %v3006, %v3094
        %v3096 = vpop.f32.mrf.mxu0
        %v3097 = vadd.f32 %v3008, %v3096
        %3098 = vmatmul.bf16.gmra.mxu0 %v1260
        %v3099 = vpop.f32.mrf.mxu0
        %v3100 = vadd.f32 %v3011, %v3099
        %v3101 = vpop.f32.mrf.mxu0
        %v3102 = vadd.f32 %v3013, %v3101
        %3103 = vmatmul.bf16.gmra.mxu0 %v1272
        %v3104 = vpop.f32.mrf.mxu0
        %v3105 = vadd.f32 %v3016, %v3104
        %v3106 = vpop.f32.mrf.mxu0
        %v3107 = vadd.f32 %v3018, %v3106
        %3108 = vmatmul.bf16.gmra.mxu0 %v1284
        %v3109 = vpop.f32.mrf.mxu0
        %v3110 = vadd.f32 %v3021, %v3109
        %v3111 = vpop.f32.mrf.mxu0
        %v3112 = vadd.f32 %v3023, %v3111
        %3113 = vmatmul.bf16.gmra.mxu0 %v1296
        %v3114 = vpop.f32.mrf.mxu0
        %v3115 = vadd.f32 %v3026, %v3114
        %v3116 = vpop.f32.mrf.mxu0
        %v3117 = vadd.f32 %v3028, %v3116
        %3118 = vmatmul.bf16.gmra.mxu0 %v1308
        %v3119 = vpop.f32.mrf.mxu0
        %v3120 = vadd.f32 %v3031, %v3119
        %v3121 = vpop.f32.mrf.mxu0
        %v3122 = vadd.f32 %v3033, %v3121
        %3123 = vmatmul.bf16.gmra.mxu0 %v1320
        %v3124 = vpop.f32.mrf.mxu0
        %v3125 = vadd.f32 %v3036, %v3124
        %v3126 = vpop.f32.mrf.mxu0
        %v3127 = vadd.f32 %v3038, %v3126
        %3128 = vmatmul.bf16.gmra.mxu0 %v1332
        %v3129 = vpop.f32.mrf.mxu0
        %v3130 = vadd.f32 %v3041, %v3129
        %v3131 = vpop.f32.mrf.mxu0
        %v3132 = vadd.f32 %v3043, %v3131
        %3133 = vmatmul.bf16.gmra.mxu0 %v1344
        %v3134 = vpop.f32.mrf.mxu0
        %v3135 = vadd.f32 %v3046, %v3134
        %v3136 = vpop.f32.mrf.mxu0
        %v3137 = vadd.f32 %v3048, %v3136
        %3138 = vmatmul.bf16.gmra.mxu0 %v1356
        %v3139 = vpop.f32.mrf.mxu0
        %v3140 = vadd.f32 %v3051, %v3139
        %v3141 = vpop.f32.mrf.mxu0
        %v3142 = vadd.f32 %v3053, %v3141
        %3143 = vmatmul.bf16.gmra.mxu0 %v1368
        %v3144 = vpop.f32.mrf.mxu0
        %v3145 = vadd.f32 %v3056, %v3144
        %v3146 = vpop.f32.mrf.mxu0
        %v3147 = vadd.f32 %v3058, %v3146
        %3148 = vdwg.mxu0
        %3149 = vmatpush.bf16.msra.mxu0 %v2268
        %3150 = vmatpush.bf16.msra.mxu0 %v2266
        %3151 = vmatpush.bf16.msra.mxu0 %v2264
        %3152 = vmatpush.bf16.msra.mxu0 %v2262
        %3153 = vmatpush.bf16.msra.mxu0 %v2260
        %3154 = vmatpush.bf16.msra.mxu0 %v2258
        %3155 = vmatpush.bf16.msra.mxu0 %v2256
        %3156 = vmatpush.bf16.msra.mxu0 %v2254
        %3157 = vmatmul.bf16.gmra.mxu0 %v1189
        %v3158 = vpop.f32.mrf.mxu0
        %v3159 = vadd.f32 %v3070, %v3158
        %v3160 = vpop.f32.mrf.mxu0
        %v3161 = vadd.f32 %v3072, %v3160
        %3162 = vmatmul.bf16.gmra.mxu0 %v1201
        %v3163 = vpop.f32.mrf.mxu0
        %v3164 = vadd.f32 %v3075, %v3163
        %v3165 = vpop.f32.mrf.mxu0
        %v3166 = vadd.f32 %v3077, %v3165
        %3167 = vmatmul.bf16.gmra.mxu0 %v1213
        %v3168 = vpop.f32.mrf.mxu0
        %v3169 = vadd.f32 %v3080, %v3168
        %v3170 = vpop.f32.mrf.mxu0
        %v3171 = vadd.f32 %v3082, %v3170
        %3172 = vmatmul.bf16.gmra.mxu0 %v1225
        %v3173 = vpop.f32.mrf.mxu0
        %v3174 = vadd.f32 %v3085, %v3173
        %v3175 = vpop.f32.mrf.mxu0
        %v3176 = vadd.f32 %v3087, %v3175
        %3177 = vmatmul.bf16.gmra.mxu0 %v1237
        %v3178 = vpop.f32.mrf.mxu0
        %v3179 = vadd.f32 %v3090, %v3178
        %v3180 = vpop.f32.mrf.mxu0
        %v3181 = vadd.f32 %v3092, %v3180
        %3182 = vmatmul.bf16.gmra.mxu0 %v1249
        %v3183 = vpop.f32.mrf.mxu0
        %v3184 = vadd.f32 %v3095, %v3183
        %v3185 = vpop.f32.mrf.mxu0
        %v3186 = vadd.f32 %v3097, %v3185
        %3187 = vmatmul.bf16.gmra.mxu0 %v1261
        %v3188 = vpop.f32.mrf.mxu0
        %v3189 = vadd.f32 %v3100, %v3188
        %v3190 = vpop.f32.mrf.mxu0
        %v3191 = vadd.f32 %v3102, %v3190
        %3192 = vmatmul.bf16.gmra.mxu0 %v1273
        %v3193 = vpop.f32.mrf.mxu0
        %v3194 = vadd.f32 %v3105, %v3193
        %v3195 = vpop.f32.mrf.mxu0
        %v3196 = vadd.f32 %v3107, %v3195
        %3197 = vmatmul.bf16.gmra.mxu0 %v1285
        %v3198 = vpop.f32.mrf.mxu0
        %v3199 = vadd.f32 %v3110, %v3198
        %v3200 = vpop.f32.mrf.mxu0
        %v3201 = vadd.f32 %v3112, %v3200
        %3202 = vmatmul.bf16.gmra.mxu0 %v1297
        %v3203 = vpop.f32.mrf.mxu0
        %v3204 = vadd.f32 %v3115, %v3203
        %v3205 = vpop.f32.mrf.mxu0
        %v3206 = vadd.f32 %v3117, %v3205
        %3207 = vmatmul.bf16.gmra.mxu0 %v1309
        %v3208 = vpop.f32.mrf.mxu0
        %v3209 = vadd.f32 %v3120, %v3208
        %v3210 = vpop.f32.mrf.mxu0
        %v3211 = vadd.f32 %v3122, %v3210
        %3212 = vmatmul.bf16.gmra.mxu0 %v1321
        %v3213 = vpop.f32.mrf.mxu0
        %v3214 = vadd.f32 %v3125, %v3213
        %v3215 = vpop.f32.mrf.mxu0
        %v3216 = vadd.f32 %v3127, %v3215
        %3217 = vmatmul.bf16.gmra.mxu0 %v1333
        %v3218 = vpop.f32.mrf.mxu0
        %v3219 = vadd.f32 %v3130, %v3218
        %v3220 = vpop.f32.mrf.mxu0
        %v3221 = vadd.f32 %v3132, %v3220
        %3222 = vmatmul.bf16.gmra.mxu0 %v1345
        %v3223 = vpop.f32.mrf.mxu0
        %v3224 = vadd.f32 %v3135, %v3223
        %v3225 = vpop.f32.mrf.mxu0
        %v3226 = vadd.f32 %v3137, %v3225
        %3227 = vmatmul.bf16.gmra.mxu0 %v1357
        %v3228 = vpop.f32.mrf.mxu0
        %v3229 = vadd.f32 %v3140, %v3228
        %v3230 = vpop.f32.mrf.mxu0
        %v3231 = vadd.f32 %v3142, %v3230
        %3232 = vmatmul.bf16.gmra.mxu0 %v1369
        %v3233 = vpop.f32.mrf.mxu0
        %v3234 = vadd.f32 %v3145, %v3233
        %v3235 = vpop.f32.mrf.mxu0
        %v3236 = vadd.f32 %v3147, %v3235
        %3237 = vdwg.mxu0
        %3238 = vmatpush.bf16.msra.mxu0 %v2284
        %3239 = vmatpush.bf16.msra.mxu0 %v2282
        %3240 = vmatpush.bf16.msra.mxu0 %v2280
        %3241 = vmatpush.bf16.msra.mxu0 %v2278
        %3242 = vmatpush.bf16.msra.mxu0 %v2276
        %3243 = vmatpush.bf16.msra.mxu0 %v2274
        %3244 = vmatpush.bf16.msra.mxu0 %v2272
        %3245 = vmatpush.bf16.msra.mxu0 %v2270
        %3246 = vmatmul.bf16.gmra.mxu0 %v1190
        %v3247 = vpop.f32.mrf.mxu0
        %v3248 = vadd.f32 %v3159, %v3247
        %v3249 = vpop.f32.mrf.mxu0
        %v3250 = vadd.f32 %v3161, %v3249
        %3251 = vmatmul.bf16.gmra.mxu0 %v1202
        %v3252 = vpop.f32.mrf.mxu0
        %v3253 = vadd.f32 %v3164, %v3252
        %v3254 = vpop.f32.mrf.mxu0
        %v3255 = vadd.f32 %v3166, %v3254
        %3256 = vmatmul.bf16.gmra.mxu0 %v1214
        %v3257 = vpop.f32.mrf.mxu0
        %v3258 = vadd.f32 %v3169, %v3257
        %v3259 = vpop.f32.mrf.mxu0
        %v3260 = vadd.f32 %v3171, %v3259
        %3261 = vmatmul.bf16.gmra.mxu0 %v1226
        %v3262 = vpop.f32.mrf.mxu0
        %v3263 = vadd.f32 %v3174, %v3262
        %v3264 = vpop.f32.mrf.mxu0
        %v3265 = vadd.f32 %v3176, %v3264
        %3266 = vmatmul.bf16.gmra.mxu0 %v1238
        %v3267 = vpop.f32.mrf.mxu0
        %v3268 = vadd.f32 %v3179, %v3267
        %v3269 = vpop.f32.mrf.mxu0
        %v3270 = vadd.f32 %v3181, %v3269
        %3271 = vmatmul.bf16.gmra.mxu0 %v1250
        %v3272 = vpop.f32.mrf.mxu0
        %v3273 = vadd.f32 %v3184, %v3272
        %v3274 = vpop.f32.mrf.mxu0
        %v3275 = vadd.f32 %v3186, %v3274
        %3276 = vmatmul.bf16.gmra.mxu0 %v1262
        %v3277 = vpop.f32.mrf.mxu0
        %v3278 = vadd.f32 %v3189, %v3277
        %v3279 = vpop.f32.mrf.mxu0
        %v3280 = vadd.f32 %v3191, %v3279
        %3281 = vmatmul.bf16.gmra.mxu0 %v1274
        %v3282 = vpop.f32.mrf.mxu0
        %v3283 = vadd.f32 %v3194, %v3282
        %v3284 = vpop.f32.mrf.mxu0
        %v3285 = vadd.f32 %v3196, %v3284
        %3286 = vmatmul.bf16.gmra.mxu0 %v1286
        %v3287 = vpop.f32.mrf.mxu0
        %v3288 = vadd.f32 %v3199, %v3287
        %v3289 = vpop.f32.mrf.mxu0
        %v3290 = vadd.f32 %v3201, %v3289
        %3291 = vmatmul.bf16.gmra.mxu0 %v1298
        %v3292 = vpop.f32.mrf.mxu0
        %v3293 = vadd.f32 %v3204, %v3292
        %v3294 = vpop.f32.mrf.mxu0
        %v3295 = vadd.f32 %v3206, %v3294
        %3296 = vmatmul.bf16.gmra.mxu0 %v1310
        %v3297 = vpop.f32.mrf.mxu0
        %v3298 = vadd.f32 %v3209, %v3297
        %v3299 = vpop.f32.mrf.mxu0
        %v3300 = vadd.f32 %v3211, %v3299
        %3301 = vmatmul.bf16.gmra.mxu0 %v1322
        %v3302 = vpop.f32.mrf.mxu0
        %v3303 = vadd.f32 %v3214, %v3302
        %v3304 = vpop.f32.mrf.mxu0
        %v3305 = vadd.f32 %v3216, %v3304
        %3306 = vmatmul.bf16.gmra.mxu0 %v1334
        %v3307 = vpop.f32.mrf.mxu0
        %v3308 = vadd.f32 %v3219, %v3307
        %v3309 = vpop.f32.mrf.mxu0
        %v3310 = vadd.f32 %v3221, %v3309
        %3311 = vmatmul.bf16.gmra.mxu0 %v1346
        %v3312 = vpop.f32.mrf.mxu0
        %v3313 = vadd.f32 %v3224, %v3312
        %v3314 = vpop.f32.mrf.mxu0
        %v3315 = vadd.f32 %v3226, %v3314
        %3316 = vmatmul.bf16.gmra.mxu0 %v1358
        %v3317 = vpop.f32.mrf.mxu0
        %v3318 = vadd.f32 %v3229, %v3317
        %v3319 = vpop.f32.mrf.mxu0
        %v3320 = vadd.f32 %v3231, %v3319
        %3321 = vmatmul.bf16.gmra.mxu0 %v1370
        %v3322 = vpop.f32.mrf.mxu0
        %v3323 = vadd.f32 %v3234, %v3322
        %v3324 = vpop.f32.mrf.mxu0
        %v3325 = vadd.f32 %v3236, %v3324
        %3326 = vdwg.mxu0
        %3327 = vmatpush.bf16.msra.mxu0 %v2300
        %3328 = vmatpush.bf16.msra.mxu0 %v2298
        %3329 = vmatpush.bf16.msra.mxu0 %v2296
        %3330 = vmatpush.bf16.msra.mxu0 %v2294
        %3331 = vmatpush.bf16.msra.mxu0 %v2292
        %3332 = vmatpush.bf16.msra.mxu0 %v2290
        %3333 = vmatpush.bf16.msra.mxu0 %v2288
        %3334 = vmatpush.bf16.msra.mxu0 %v2286
        %3335 = vmatmul.bf16.gmra.mxu0 %v1191
        %v3336 = vpop.f32.mrf.mxu0
        %v3337 = vadd.f32 %v3248, %v3336
        %v3338 = vpop.f32.mrf.mxu0
        %v3339 = vadd.f32 %v3250, %v3338
        %3340 = vmatmul.bf16.gmra.mxu0 %v1203
        %v3341 = vpop.f32.mrf.mxu0
        %v3342 = vadd.f32 %v3253, %v3341
        %v3343 = vpop.f32.mrf.mxu0
        %v3344 = vadd.f32 %v3255, %v3343
        %3345 = vmatmul.bf16.gmra.mxu0 %v1215
        %v3346 = vpop.f32.mrf.mxu0
        %v3347 = vadd.f32 %v3258, %v3346
        %v3348 = vpop.f32.mrf.mxu0
        %v3349 = vadd.f32 %v3260, %v3348
        %3350 = vmatmul.bf16.gmra.mxu0 %v1227
        %v3351 = vpop.f32.mrf.mxu0
        %v3352 = vadd.f32 %v3263, %v3351
        %v3353 = vpop.f32.mrf.mxu0
        %v3354 = vadd.f32 %v3265, %v3353
        %3355 = vmatmul.bf16.gmra.mxu0 %v1239
        %v3356 = vpop.f32.mrf.mxu0
        %v3357 = vadd.f32 %v3268, %v3356
        %v3358 = vpop.f32.mrf.mxu0
        %v3359 = vadd.f32 %v3270, %v3358
        %3360 = vmatmul.bf16.gmra.mxu0 %v1251
        %v3361 = vpop.f32.mrf.mxu0
        %v3362 = vadd.f32 %v3273, %v3361
        %v3363 = vpop.f32.mrf.mxu0
        %v3364 = vadd.f32 %v3275, %v3363
        %3365 = vmatmul.bf16.gmra.mxu0 %v1263
        %v3366 = vpop.f32.mrf.mxu0
        %v3367 = vadd.f32 %v3278, %v3366
        %v3368 = vpop.f32.mrf.mxu0
        %v3369 = vadd.f32 %v3280, %v3368
        %3370 = vmatmul.bf16.gmra.mxu0 %v1275
        %v3371 = vpop.f32.mrf.mxu0
        %v3372 = vadd.f32 %v3283, %v3371
        %v3373 = vpop.f32.mrf.mxu0
        %v3374 = vadd.f32 %v3285, %v3373
        %3375 = vmatmul.bf16.gmra.mxu0 %v1287
        %v3376 = vpop.f32.mrf.mxu0
        %v3377 = vadd.f32 %v3288, %v3376
        %v3378 = vpop.f32.mrf.mxu0
        %v3379 = vadd.f32 %v3290, %v3378
        %3380 = vmatmul.bf16.gmra.mxu0 %v1299
        %v3381 = vpop.f32.mrf.mxu0
        %v3382 = vadd.f32 %v3293, %v3381
        %v3383 = vpop.f32.mrf.mxu0
        %v3384 = vadd.f32 %v3295, %v3383
        %3385 = vmatmul.bf16.gmra.mxu0 %v1311
        %v3386 = vpop.f32.mrf.mxu0
        %v3387 = vadd.f32 %v3298, %v3386
        %v3388 = vpop.f32.mrf.mxu0
        %v3389 = vadd.f32 %v3300, %v3388
        %3390 = vmatmul.bf16.gmra.mxu0 %v1323
        %v3391 = vpop.f32.mrf.mxu0
        %v3392 = vadd.f32 %v3303, %v3391
        %v3393 = vpop.f32.mrf.mxu0
        %v3394 = vadd.f32 %v3305, %v3393
        %3395 = vmatmul.bf16.gmra.mxu0 %v1335
        %v3396 = vpop.f32.mrf.mxu0
        %v3397 = vadd.f32 %v3308, %v3396
        %v3398 = vpop.f32.mrf.mxu0
        %v3399 = vadd.f32 %v3310, %v3398
        %3400 = vmatmul.bf16.gmra.mxu0 %v1347
        %v3401 = vpop.f32.mrf.mxu0
        %v3402 = vadd.f32 %v3313, %v3401
        %v3403 = vpop.f32.mrf.mxu0
        %v3404 = vadd.f32 %v3315, %v3403
        %3405 = vmatmul.bf16.gmra.mxu0 %v1359
        %v3406 = vpop.f32.mrf.mxu0
        %v3407 = vadd.f32 %v3318, %v3406
        %v3408 = vpop.f32.mrf.mxu0
        %v3409 = vadd.f32 %v3320, %v3408
        %3410 = vmatmul.bf16.gmra.mxu0 %v1371
        %v3411 = vpop.f32.mrf.mxu0
        %v3412 = vadd.f32 %v3323, %v3411
        %v3413 = vpop.f32.mrf.mxu0
        %v3414 = vadd.f32 %v3325, %v3413
        %3415 = vdwg.mxu0
        %3416 = vmatpush.bf16.msra.mxu0 %v2316
        %3417 = vmatpush.bf16.msra.mxu0 %v2314
        %3418 = vmatpush.bf16.msra.mxu0 %v2312
        %3419 = vmatpush.bf16.msra.mxu0 %v2310
        %3420 = vmatpush.bf16.msra.mxu0 %v2308
        %3421 = vmatpush.bf16.msra.mxu0 %v2306
        %3422 = vmatpush.bf16.msra.mxu0 %v2304
        %3423 = vmatpush.bf16.msra.mxu0 %v2302
        %3424 = vmatmul.bf16.gmra.mxu0 %v1192
        %v3425 = vpop.f32.mrf.mxu0
        %v3426 = vadd.f32 %v3337, %v3425
        %v3427 = vpop.f32.mrf.mxu0
        %v3428 = vadd.f32 %v3339, %v3427
        %3429 = vmatmul.bf16.gmra.mxu0 %v1204
        %v3430 = vpop.f32.mrf.mxu0
        %v3431 = vadd.f32 %v3342, %v3430
        %v3432 = vpop.f32.mrf.mxu0
        %v3433 = vadd.f32 %v3344, %v3432
        %3434 = vmatmul.bf16.gmra.mxu0 %v1216
        %v3435 = vpop.f32.mrf.mxu0
        %v3436 = vadd.f32 %v3347, %v3435
        %v3437 = vpop.f32.mrf.mxu0
        %v3438 = vadd.f32 %v3349, %v3437
        %3439 = vmatmul.bf16.gmra.mxu0 %v1228
        %v3440 = vpop.f32.mrf.mxu0
        %v3441 = vadd.f32 %v3352, %v3440
        %v3442 = vpop.f32.mrf.mxu0
        %v3443 = vadd.f32 %v3354, %v3442
        %3444 = vmatmul.bf16.gmra.mxu0 %v1240
        %v3445 = vpop.f32.mrf.mxu0
        %v3446 = vadd.f32 %v3357, %v3445
        %v3447 = vpop.f32.mrf.mxu0
        %v3448 = vadd.f32 %v3359, %v3447
        %3449 = vmatmul.bf16.gmra.mxu0 %v1252
        %v3450 = vpop.f32.mrf.mxu0
        %v3451 = vadd.f32 %v3362, %v3450
        %v3452 = vpop.f32.mrf.mxu0
        %v3453 = vadd.f32 %v3364, %v3452
        %3454 = vmatmul.bf16.gmra.mxu0 %v1264
        %v3455 = vpop.f32.mrf.mxu0
        %v3456 = vadd.f32 %v3367, %v3455
        %v3457 = vpop.f32.mrf.mxu0
        %v3458 = vadd.f32 %v3369, %v3457
        %3459 = vmatmul.bf16.gmra.mxu0 %v1276
        %v3460 = vpop.f32.mrf.mxu0
        %v3461 = vadd.f32 %v3372, %v3460
        %v3462 = vpop.f32.mrf.mxu0
        %v3463 = vadd.f32 %v3374, %v3462
        %3464 = vmatmul.bf16.gmra.mxu0 %v1288
        %v3465 = vpop.f32.mrf.mxu0
        %v3466 = vadd.f32 %v3377, %v3465
        %v3467 = vpop.f32.mrf.mxu0
        %v3468 = vadd.f32 %v3379, %v3467
        %3469 = vmatmul.bf16.gmra.mxu0 %v1300
        %v3470 = vpop.f32.mrf.mxu0
        %v3471 = vadd.f32 %v3382, %v3470
        %v3472 = vpop.f32.mrf.mxu0
        %v3473 = vadd.f32 %v3384, %v3472
        %3474 = vmatmul.bf16.gmra.mxu0 %v1312
        %v3475 = vpop.f32.mrf.mxu0
        %v3476 = vadd.f32 %v3387, %v3475
        %v3477 = vpop.f32.mrf.mxu0
        %v3478 = vadd.f32 %v3389, %v3477
        %3479 = vmatmul.bf16.gmra.mxu0 %v1324
        %v3480 = vpop.f32.mrf.mxu0
        %v3481 = vadd.f32 %v3392, %v3480
        %v3482 = vpop.f32.mrf.mxu0
        %v3483 = vadd.f32 %v3394, %v3482
        %3484 = vmatmul.bf16.gmra.mxu0 %v1336
        %v3485 = vpop.f32.mrf.mxu0
        %v3486 = vadd.f32 %v3397, %v3485
        %v3487 = vpop.f32.mrf.mxu0
        %v3488 = vadd.f32 %v3399, %v3487
        %3489 = vmatmul.bf16.gmra.mxu0 %v1348
        %v3490 = vpop.f32.mrf.mxu0
        %v3491 = vadd.f32 %v3402, %v3490
        %v3492 = vpop.f32.mrf.mxu0
        %v3493 = vadd.f32 %v3404, %v3492
        %3494 = vmatmul.bf16.gmra.mxu0 %v1360
        %v3495 = vpop.f32.mrf.mxu0
        %v3496 = vadd.f32 %v3407, %v3495
        %v3497 = vpop.f32.mrf.mxu0
        %v3498 = vadd.f32 %v3409, %v3497
        %3499 = vmatmul.bf16.gmra.mxu0 %v1372
        %v3500 = vpop.f32.mrf.mxu0
        %v3501 = vadd.f32 %v3412, %v3500
        %v3502 = vpop.f32.mrf.mxu0
        %v3503 = vadd.f32 %v3414, %v3502
        %3504 = vdwg.mxu0
        %3505 = vmatpush.bf16.msra.mxu0 %v2332
        %3506 = vmatpush.bf16.msra.mxu0 %v2330
        %3507 = vmatpush.bf16.msra.mxu0 %v2328
        %3508 = vmatpush.bf16.msra.mxu0 %v2326
        %3509 = vmatpush.bf16.msra.mxu0 %v2324
        %3510 = vmatpush.bf16.msra.mxu0 %v2322
        %3511 = vmatpush.bf16.msra.mxu0 %v2320
        %3512 = vmatpush.bf16.msra.mxu0 %v2318
        %3513 = vmatmul.bf16.gmra.mxu0 %v1193
        %v3514 = vpop.f32.mrf.mxu0
        %v3515 = vadd.f32 %v3426, %v3514
        %v3516 = vpop.f32.mrf.mxu0
        %v3517 = vadd.f32 %v3428, %v3516
        %3518 = vmatmul.bf16.gmra.mxu0 %v1205
        %v3519 = vpop.f32.mrf.mxu0
        %v3520 = vadd.f32 %v3431, %v3519
        %v3521 = vpop.f32.mrf.mxu0
        %v3522 = vadd.f32 %v3433, %v3521
        %3523 = vmatmul.bf16.gmra.mxu0 %v1217
        %v3524 = vpop.f32.mrf.mxu0
        %v3525 = vadd.f32 %v3436, %v3524
        %v3526 = vpop.f32.mrf.mxu0
        %v3527 = vadd.f32 %v3438, %v3526
        %3528 = vmatmul.bf16.gmra.mxu0 %v1229
        %v3529 = vpop.f32.mrf.mxu0
        %v3530 = vadd.f32 %v3441, %v3529
        %v3531 = vpop.f32.mrf.mxu0
        %v3532 = vadd.f32 %v3443, %v3531
        %3533 = vmatmul.bf16.gmra.mxu0 %v1241
        %v3534 = vpop.f32.mrf.mxu0
        %v3535 = vadd.f32 %v3446, %v3534
        %v3536 = vpop.f32.mrf.mxu0
        %v3537 = vadd.f32 %v3448, %v3536
        %3538 = vmatmul.bf16.gmra.mxu0 %v1253
        %v3539 = vpop.f32.mrf.mxu0
        %v3540 = vadd.f32 %v3451, %v3539
        %v3541 = vpop.f32.mrf.mxu0
        %v3542 = vadd.f32 %v3453, %v3541
        %3543 = vmatmul.bf16.gmra.mxu0 %v1265
        %v3544 = vpop.f32.mrf.mxu0
        %v3545 = vadd.f32 %v3456, %v3544
        %v3546 = vpop.f32.mrf.mxu0
        %v3547 = vadd.f32 %v3458, %v3546
        %3548 = vmatmul.bf16.gmra.mxu0 %v1277
        %v3549 = vpop.f32.mrf.mxu0
        %v3550 = vadd.f32 %v3461, %v3549
        %v3551 = vpop.f32.mrf.mxu0
        %v3552 = vadd.f32 %v3463, %v3551
        %3553 = vmatmul.bf16.gmra.mxu0 %v1289
        %v3554 = vpop.f32.mrf.mxu0
        %v3555 = vadd.f32 %v3466, %v3554
        %v3556 = vpop.f32.mrf.mxu0
        %v3557 = vadd.f32 %v3468, %v3556
        %3558 = vmatmul.bf16.gmra.mxu0 %v1301
        %v3559 = vpop.f32.mrf.mxu0
        %v3560 = vadd.f32 %v3471, %v3559
        %v3561 = vpop.f32.mrf.mxu0
        %v3562 = vadd.f32 %v3473, %v3561
        %3563 = vmatmul.bf16.gmra.mxu0 %v1313
        %v3564 = vpop.f32.mrf.mxu0
        %v3565 = vadd.f32 %v3476, %v3564
        %v3566 = vpop.f32.mrf.mxu0
        %v3567 = vadd.f32 %v3478, %v3566
        %3568 = vmatmul.bf16.gmra.mxu0 %v1325
        %v3569 = vpop.f32.mrf.mxu0
        %v3570 = vadd.f32 %v3481, %v3569
        %v3571 = vpop.f32.mrf.mxu0
        %v3572 = vadd.f32 %v3483, %v3571
        %3573 = vmatmul.bf16.gmra.mxu0 %v1337
        %v3574 = vpop.f32.mrf.mxu0
        %v3575 = vadd.f32 %v3486, %v3574
        %v3576 = vpop.f32.mrf.mxu0
        %v3577 = vadd.f32 %v3488, %v3576
        %3578 = vmatmul.bf16.gmra.mxu0 %v1349
        %v3579 = vpop.f32.mrf.mxu0
        %v3580 = vadd.f32 %v3491, %v3579
        %v3581 = vpop.f32.mrf.mxu0
        %v3582 = vadd.f32 %v3493, %v3581
        %3583 = vmatmul.bf16.gmra.mxu0 %v1361
        %v3584 = vpop.f32.mrf.mxu0
        %v3585 = vadd.f32 %v3496, %v3584
        %v3586 = vpop.f32.mrf.mxu0
        %v3587 = vadd.f32 %v3498, %v3586
        %3588 = vmatmul.bf16.gmra.mxu0 %v1373
        %v3589 = vpop.f32.mrf.mxu0
        %v3590 = vadd.f32 %v3501, %v3589
        %v3591 = vpop.f32.mrf.mxu0
        %v3592 = vadd.f32 %v3503, %v3591
        %3593 = vdwg.mxu0
        %3594 = vmatpush.bf16.msra.mxu0 %v2157
        %3595 = vmatpush.bf16.msra.mxu0 %v2155
        %3596 = vmatpush.bf16.msra.mxu0 %v2153
        %3597 = vmatpush.bf16.msra.mxu0 %v2151
        %3598 = vmatpush.bf16.msra.mxu0 %v2149
        %3599 = vmatpush.bf16.msra.mxu0 %v2147
        %3600 = vmatpush.bf16.msra.mxu0 %v2145
        %3601 = vmatpush.bf16.msra.mxu0 %v2143
        %3602 = vmatmul.bf16.gmra.mxu0 %v1182
        %v3603 = vpop.f32.mrf.mxu0
        %v3604 = vadd.f32 0.0, %v3603
        %v3605 = vpop.f32.mrf.mxu0
        %v3606 = vadd.f32 0.0, %v3605
        %3607 = vmatmul.bf16.gmra.mxu0 %v1194
        %v3608 = vpop.f32.mrf.mxu0
        %v3609 = vadd.f32 0.0, %v3608
        %v3610 = vpop.f32.mrf.mxu0
        %v3611 = vadd.f32 0.0, %v3610
        %3612 = vmatmul.bf16.gmra.mxu0 %v1206
        %v3613 = vpop.f32.mrf.mxu0
        %v3614 = vadd.f32 0.0, %v3613
        %v3615 = vpop.f32.mrf.mxu0
        %v3616 = vadd.f32 0.0, %v3615
        %3617 = vmatmul.bf16.gmra.mxu0 %v1218
        %v3618 = vpop.f32.mrf.mxu0
        %v3619 = vadd.f32 0.0, %v3618
        %v3620 = vpop.f32.mrf.mxu0
        %v3621 = vadd.f32 0.0, %v3620
        %3622 = vmatmul.bf16.gmra.mxu0 %v1230
        %v3623 = vpop.f32.mrf.mxu0
        %v3624 = vadd.f32 0.0, %v3623
        %v3625 = vpop.f32.mrf.mxu0
        %v3626 = vadd.f32 0.0, %v3625
        %3627 = vmatmul.bf16.gmra.mxu0 %v1242
        %v3628 = vpop.f32.mrf.mxu0
        %v3629 = vadd.f32 0.0, %v3628
        %v3630 = vpop.f32.mrf.mxu0
        %v3631 = vadd.f32 0.0, %v3630
        %3632 = vmatmul.bf16.gmra.mxu0 %v1254
        %v3633 = vpop.f32.mrf.mxu0
        %v3634 = vadd.f32 0.0, %v3633
        %v3635 = vpop.f32.mrf.mxu0
        %v3636 = vadd.f32 0.0, %v3635
        %3637 = vmatmul.bf16.gmra.mxu0 %v1266
        %v3638 = vpop.f32.mrf.mxu0
        %v3639 = vadd.f32 0.0, %v3638
        %v3640 = vpop.f32.mrf.mxu0
        %v3641 = vadd.f32 0.0, %v3640
        %3642 = vmatmul.bf16.gmra.mxu0 %v1278
        %v3643 = vpop.f32.mrf.mxu0
        %v3644 = vadd.f32 0.0, %v3643
        %v3645 = vpop.f32.mrf.mxu0
        %v3646 = vadd.f32 0.0, %v3645
        %3647 = vmatmul.bf16.gmra.mxu0 %v1290
        %v3648 = vpop.f32.mrf.mxu0
        %v3649 = vadd.f32 0.0, %v3648
        %v3650 = vpop.f32.mrf.mxu0
        %v3651 = vadd.f32 0.0, %v3650
        %3652 = vmatmul.bf16.gmra.mxu0 %v1302
        %v3653 = vpop.f32.mrf.mxu0
        %v3654 = vadd.f32 0.0, %v3653
        %v3655 = vpop.f32.mrf.mxu0
        %v3656 = vadd.f32 0.0, %v3655
        %3657 = vmatmul.bf16.gmra.mxu0 %v1314
        %v3658 = vpop.f32.mrf.mxu0
        %v3659 = vadd.f32 0.0, %v3658
        %v3660 = vpop.f32.mrf.mxu0
        %v3661 = vadd.f32 0.0, %v3660
        %3662 = vmatmul.bf16.gmra.mxu0 %v1326
        %v3663 = vpop.f32.mrf.mxu0
        %v3664 = vadd.f32 0.0, %v3663
        %v3665 = vpop.f32.mrf.mxu0
        %v3666 = vadd.f32 0.0, %v3665
        %3667 = vmatmul.bf16.gmra.mxu0 %v1338
        %v3668 = vpop.f32.mrf.mxu0
        %v3669 = vadd.f32 0.0, %v3668
        %v3670 = vpop.f32.mrf.mxu0
        %v3671 = vadd.f32 0.0, %v3670
        %3672 = vmatmul.bf16.gmra.mxu0 %v1350
        %v3673 = vpop.f32.mrf.mxu0
        %v3674 = vadd.f32 0.0, %v3673
        %v3675 = vpop.f32.mrf.mxu0
        %v3676 = vadd.f32 0.0, %v3675
        %3677 = vmatmul.bf16.gmra.mxu0 %v1362
        %v3678 = vpop.f32.mrf.mxu0
        %v3679 = vadd.f32 0.0, %v3678
        %v3680 = vpop.f32.mrf.mxu0
        %v3681 = vadd.f32 0.0, %v3680
        %3682 = vdwg.mxu0
        %3683 = vmatpush.bf16.msra.mxu0 %v2173
        %3684 = vmatpush.bf16.msra.mxu0 %v2171
        %3685 = vmatpush.bf16.msra.mxu0 %v2169
        %3686 = vmatpush.bf16.msra.mxu0 %v2167
        %3687 = vmatpush.bf16.msra.mxu0 %v2165
        %3688 = vmatpush.bf16.msra.mxu0 %v2163
        %3689 = vmatpush.bf16.msra.mxu0 %v2161
        %3690 = vmatpush.bf16.msra.mxu0 %v2159
        %3691 = vmatmul.bf16.gmra.mxu0 %v1183
        %v3692 = vpop.f32.mrf.mxu0
        %v3693 = vadd.f32 %v3604, %v3692
        %v3694 = vpop.f32.mrf.mxu0
        %v3695 = vadd.f32 %v3606, %v3694
        %3696 = vmatmul.bf16.gmra.mxu0 %v1195
        %v3697 = vpop.f32.mrf.mxu0
        %v3698 = vadd.f32 %v3609, %v3697
        %v3699 = vpop.f32.mrf.mxu0
        %v3700 = vadd.f32 %v3611, %v3699
        %3701 = vmatmul.bf16.gmra.mxu0 %v1207
        %v3702 = vpop.f32.mrf.mxu0
        %v3703 = vadd.f32 %v3614, %v3702
        %v3704 = vpop.f32.mrf.mxu0
        %v3705 = vadd.f32 %v3616, %v3704
        %3706 = vmatmul.bf16.gmra.mxu0 %v1219
        %v3707 = vpop.f32.mrf.mxu0
        %v3708 = vadd.f32 %v3619, %v3707
        %v3709 = vpop.f32.mrf.mxu0
        %v3710 = vadd.f32 %v3621, %v3709
        %3711 = vmatmul.bf16.gmra.mxu0 %v1231
        %v3712 = vpop.f32.mrf.mxu0
        %v3713 = vadd.f32 %v3624, %v3712
        %v3714 = vpop.f32.mrf.mxu0
        %v3715 = vadd.f32 %v3626, %v3714
        %3716 = vmatmul.bf16.gmra.mxu0 %v1243
        %v3717 = vpop.f32.mrf.mxu0
        %v3718 = vadd.f32 %v3629, %v3717
        %v3719 = vpop.f32.mrf.mxu0
        %v3720 = vadd.f32 %v3631, %v3719
        %3721 = vmatmul.bf16.gmra.mxu0 %v1255
        %v3722 = vpop.f32.mrf.mxu0
        %v3723 = vadd.f32 %v3634, %v3722
        %v3724 = vpop.f32.mrf.mxu0
        %v3725 = vadd.f32 %v3636, %v3724
        %3726 = vmatmul.bf16.gmra.mxu0 %v1267
        %v3727 = vpop.f32.mrf.mxu0
        %v3728 = vadd.f32 %v3639, %v3727
        %v3729 = vpop.f32.mrf.mxu0
        %v3730 = vadd.f32 %v3641, %v3729
        %3731 = vmatmul.bf16.gmra.mxu0 %v1279
        %v3732 = vpop.f32.mrf.mxu0
        %v3733 = vadd.f32 %v3644, %v3732
        %v3734 = vpop.f32.mrf.mxu0
        %v3735 = vadd.f32 %v3646, %v3734
        %3736 = vmatmul.bf16.gmra.mxu0 %v1291
        %v3737 = vpop.f32.mrf.mxu0
        %v3738 = vadd.f32 %v3649, %v3737
        %v3739 = vpop.f32.mrf.mxu0
        %v3740 = vadd.f32 %v3651, %v3739
        %3741 = vmatmul.bf16.gmra.mxu0 %v1303
        %v3742 = vpop.f32.mrf.mxu0
        %v3743 = vadd.f32 %v3654, %v3742
        %v3744 = vpop.f32.mrf.mxu0
        %v3745 = vadd.f32 %v3656, %v3744
        %3746 = vmatmul.bf16.gmra.mxu0 %v1315
        %v3747 = vpop.f32.mrf.mxu0
        %v3748 = vadd.f32 %v3659, %v3747
        %v3749 = vpop.f32.mrf.mxu0
        %v3750 = vadd.f32 %v3661, %v3749
        %3751 = vmatmul.bf16.gmra.mxu0 %v1327
        %v3752 = vpop.f32.mrf.mxu0
        %v3753 = vadd.f32 %v3664, %v3752
        %v3754 = vpop.f32.mrf.mxu0
        %v3755 = vadd.f32 %v3666, %v3754
        %3756 = vmatmul.bf16.gmra.mxu0 %v1339
        %v3757 = vpop.f32.mrf.mxu0
        %v3758 = vadd.f32 %v3669, %v3757
        %v3759 = vpop.f32.mrf.mxu0
        %v3760 = vadd.f32 %v3671, %v3759
        %3761 = vmatmul.bf16.gmra.mxu0 %v1351
        %v3762 = vpop.f32.mrf.mxu0
        %v3763 = vadd.f32 %v3674, %v3762
        %v3764 = vpop.f32.mrf.mxu0
        %v3765 = vadd.f32 %v3676, %v3764
        %3766 = vmatmul.bf16.gmra.mxu0 %v1363
        %v3767 = vpop.f32.mrf.mxu0
        %v3768 = vadd.f32 %v3679, %v3767
        %v3769 = vpop.f32.mrf.mxu0
        %v3770 = vadd.f32 %v3681, %v3769
        %3771 = vdwg.mxu0
        %3772 = vmatpush.bf16.msra.mxu0 %v2189
        %3773 = vmatpush.bf16.msra.mxu0 %v2187
        %3774 = vmatpush.bf16.msra.mxu0 %v2185
        %3775 = vmatpush.bf16.msra.mxu0 %v2183
        %3776 = vmatpush.bf16.msra.mxu0 %v2181
        %3777 = vmatpush.bf16.msra.mxu0 %v2179
        %3778 = vmatpush.bf16.msra.mxu0 %v2177
        %3779 = vmatpush.bf16.msra.mxu0 %v2175
        %3780 = vmatmul.bf16.gmra.mxu0 %v1184
        %v3781 = vpop.f32.mrf.mxu0
        %v3782 = vadd.f32 %v3693, %v3781
        %v3783 = vpop.f32.mrf.mxu0
        %v3784 = vadd.f32 %v3695, %v3783
        %3785 = vmatmul.bf16.gmra.mxu0 %v1196
        %v3786 = vpop.f32.mrf.mxu0
        %v3787 = vadd.f32 %v3698, %v3786
        %v3788 = vpop.f32.mrf.mxu0
        %v3789 = vadd.f32 %v3700, %v3788
        %3790 = vmatmul.bf16.gmra.mxu0 %v1208
        %v3791 = vpop.f32.mrf.mxu0
        %v3792 = vadd.f32 %v3703, %v3791
        %v3793 = vpop.f32.mrf.mxu0
        %v3794 = vadd.f32 %v3705, %v3793
        %3795 = vmatmul.bf16.gmra.mxu0 %v1220
        %v3796 = vpop.f32.mrf.mxu0
        %v3797 = vadd.f32 %v3708, %v3796
        %v3798 = vpop.f32.mrf.mxu0
        %v3799 = vadd.f32 %v3710, %v3798
        %3800 = vmatmul.bf16.gmra.mxu0 %v1232
        %v3801 = vpop.f32.mrf.mxu0
        %v3802 = vadd.f32 %v3713, %v3801
        %v3803 = vpop.f32.mrf.mxu0
        %v3804 = vadd.f32 %v3715, %v3803
        %3805 = vmatmul.bf16.gmra.mxu0 %v1244
        %v3806 = vpop.f32.mrf.mxu0
        %v3807 = vadd.f32 %v3718, %v3806
        %v3808 = vpop.f32.mrf.mxu0
        %v3809 = vadd.f32 %v3720, %v3808
        %3810 = vmatmul.bf16.gmra.mxu0 %v1256
        %v3811 = vpop.f32.mrf.mxu0
        %v3812 = vadd.f32 %v3723, %v3811
        %v3813 = vpop.f32.mrf.mxu0
        %v3814 = vadd.f32 %v3725, %v3813
        %3815 = vmatmul.bf16.gmra.mxu0 %v1268
        %v3816 = vpop.f32.mrf.mxu0
        %v3817 = vadd.f32 %v3728, %v3816
        %v3818 = vpop.f32.mrf.mxu0
        %v3819 = vadd.f32 %v3730, %v3818
        %3820 = vmatmul.bf16.gmra.mxu0 %v1280
        %v3821 = vpop.f32.mrf.mxu0
        %v3822 = vadd.f32 %v3733, %v3821
        %v3823 = vpop.f32.mrf.mxu0
        %v3824 = vadd.f32 %v3735, %v3823
        %3825 = vmatmul.bf16.gmra.mxu0 %v1292
        %v3826 = vpop.f32.mrf.mxu0
        %v3827 = vadd.f32 %v3738, %v3826
        %v3828 = vpop.f32.mrf.mxu0
        %v3829 = vadd.f32 %v3740, %v3828
        %3830 = vmatmul.bf16.gmra.mxu0 %v1304
        %v3831 = vpop.f32.mrf.mxu0
        %v3832 = vadd.f32 %v3743, %v3831
        %v3833 = vpop.f32.mrf.mxu0
        %v3834 = vadd.f32 %v3745, %v3833
        %3835 = vmatmul.bf16.gmra.mxu0 %v1316
        %v3836 = vpop.f32.mrf.mxu0
        %v3837 = vadd.f32 %v3748, %v3836
        %v3838 = vpop.f32.mrf.mxu0
        %v3839 = vadd.f32 %v3750, %v3838
        %3840 = vmatmul.bf16.gmra.mxu0 %v1328
        %v3841 = vpop.f32.mrf.mxu0
        %v3842 = vadd.f32 %v3753, %v3841
        %v3843 = vpop.f32.mrf.mxu0
        %v3844 = vadd.f32 %v3755, %v3843
        %3845 = vmatmul.bf16.gmra.mxu0 %v1340
        %v3846 = vpop.f32.mrf.mxu0
        %v3847 = vadd.f32 %v3758, %v3846
        %v3848 = vpop.f32.mrf.mxu0
        %v3849 = vadd.f32 %v3760, %v3848
        %3850 = vmatmul.bf16.gmra.mxu0 %v1352
        %v3851 = vpop.f32.mrf.mxu0
        %v3852 = vadd.f32 %v3763, %v3851
        %v3853 = vpop.f32.mrf.mxu0
        %v3854 = vadd.f32 %v3765, %v3853
        %3855 = vmatmul.bf16.gmra.mxu0 %v1364
        %v3856 = vpop.f32.mrf.mxu0
        %v3857 = vadd.f32 %v3768, %v3856
        %v3858 = vpop.f32.mrf.mxu0
        %v3859 = vadd.f32 %v3770, %v3858
        %3860 = vdwg.mxu0
        %3861 = vmatpush.bf16.msra.mxu0 %v2205
        %3862 = vmatpush.bf16.msra.mxu0 %v2203
        %3863 = vmatpush.bf16.msra.mxu0 %v2201
        %3864 = vmatpush.bf16.msra.mxu0 %v2199
        %3865 = vmatpush.bf16.msra.mxu0 %v2197
        %3866 = vmatpush.bf16.msra.mxu0 %v2195
        %3867 = vmatpush.bf16.msra.mxu0 %v2193
        %3868 = vmatpush.bf16.msra.mxu0 %v2191
        %3869 = vmatmul.bf16.gmra.mxu0 %v1185
        %v3870 = vpop.f32.mrf.mxu0
        %v3871 = vadd.f32 %v3782, %v3870
        %v3872 = vpop.f32.mrf.mxu0
        %v3873 = vadd.f32 %v3784, %v3872
        %3874 = vmatmul.bf16.gmra.mxu0 %v1197
        %v3875 = vpop.f32.mrf.mxu0
        %v3876 = vadd.f32 %v3787, %v3875
        %v3877 = vpop.f32.mrf.mxu0
        %v3878 = vadd.f32 %v3789, %v3877
        %3879 = vmatmul.bf16.gmra.mxu0 %v1209
        %v3880 = vpop.f32.mrf.mxu0
        %v3881 = vadd.f32 %v3792, %v3880
        %v3882 = vpop.f32.mrf.mxu0
        %v3883 = vadd.f32 %v3794, %v3882
        %3884 = vmatmul.bf16.gmra.mxu0 %v1221
        %v3885 = vpop.f32.mrf.mxu0
        %v3886 = vadd.f32 %v3797, %v3885
        %v3887 = vpop.f32.mrf.mxu0
        %v3888 = vadd.f32 %v3799, %v3887
        %3889 = vmatmul.bf16.gmra.mxu0 %v1233
        %v3890 = vpop.f32.mrf.mxu0
        %v3891 = vadd.f32 %v3802, %v3890
        %v3892 = vpop.f32.mrf.mxu0
        %v3893 = vadd.f32 %v3804, %v3892
        %3894 = vmatmul.bf16.gmra.mxu0 %v1245
        %v3895 = vpop.f32.mrf.mxu0
        %v3896 = vadd.f32 %v3807, %v3895
        %v3897 = vpop.f32.mrf.mxu0
        %v3898 = vadd.f32 %v3809, %v3897
        %3899 = vmatmul.bf16.gmra.mxu0 %v1257
        %v3900 = vpop.f32.mrf.mxu0
        %v3901 = vadd.f32 %v3812, %v3900
        %v3902 = vpop.f32.mrf.mxu0
        %v3903 = vadd.f32 %v3814, %v3902
        %3904 = vmatmul.bf16.gmra.mxu0 %v1269
        %v3905 = vpop.f32.mrf.mxu0
        %v3906 = vadd.f32 %v3817, %v3905
        %v3907 = vpop.f32.mrf.mxu0
        %v3908 = vadd.f32 %v3819, %v3907
        %3909 = vmatmul.bf16.gmra.mxu0 %v1281
        %v3910 = vpop.f32.mrf.mxu0
        %v3911 = vadd.f32 %v3822, %v3910
        %v3912 = vpop.f32.mrf.mxu0
        %v3913 = vadd.f32 %v3824, %v3912
        %3914 = vmatmul.bf16.gmra.mxu0 %v1293
        %v3915 = vpop.f32.mrf.mxu0
        %v3916 = vadd.f32 %v3827, %v3915
        %v3917 = vpop.f32.mrf.mxu0
        %v3918 = vadd.f32 %v3829, %v3917
        %3919 = vmatmul.bf16.gmra.mxu0 %v1305
        %v3920 = vpop.f32.mrf.mxu0
        %v3921 = vadd.f32 %v3832, %v3920
        %v3922 = vpop.f32.mrf.mxu0
        %v3923 = vadd.f32 %v3834, %v3922
        %3924 = vmatmul.bf16.gmra.mxu0 %v1317
        %v3925 = vpop.f32.mrf.mxu0
        %v3926 = vadd.f32 %v3837, %v3925
        %v3927 = vpop.f32.mrf.mxu0
        %v3928 = vadd.f32 %v3839, %v3927
        %3929 = vmatmul.bf16.gmra.mxu0 %v1329
        %v3930 = vpop.f32.mrf.mxu0
        %v3931 = vadd.f32 %v3842, %v3930
        %v3932 = vpop.f32.mrf.mxu0
        %v3933 = vadd.f32 %v3844, %v3932
        %3934 = vmatmul.bf16.gmra.mxu0 %v1341
        %v3935 = vpop.f32.mrf.mxu0
        %v3936 = vadd.f32 %v3847, %v3935
        %v3937 = vpop.f32.mrf.mxu0
        %v3938 = vadd.f32 %v3849, %v3937
        %3939 = vmatmul.bf16.gmra.mxu0 %v1353
        %v3940 = vpop.f32.mrf.mxu0
        %v3941 = vadd.f32 %v3852, %v3940
        %v3942 = vpop.f32.mrf.mxu0
        %v3943 = vadd.f32 %v3854, %v3942
        %3944 = vmatmul.bf16.gmra.mxu0 %v1365
        %v3945 = vpop.f32.mrf.mxu0
        %v3946 = vadd.f32 %v3857, %v3945
        %v3947 = vpop.f32.mrf.mxu0
        %v3948 = vadd.f32 %v3859, %v3947
        %3949 = vdwg.mxu0
        %3950 = vmatpush.bf16.msra.mxu0 %v2221
        %3951 = vmatpush.bf16.msra.mxu0 %v2219
        %3952 = vmatpush.bf16.msra.mxu0 %v2217
        %3953 = vmatpush.bf16.msra.mxu0 %v2215
        %3954 = vmatpush.bf16.msra.mxu0 %v2213
        %3955 = vmatpush.bf16.msra.mxu0 %v2211
        %3956 = vmatpush.bf16.msra.mxu0 %v2209
        %3957 = vmatpush.bf16.msra.mxu0 %v2207
        %3958 = vmatmul.bf16.gmra.mxu0 %v1186
        %v3959 = vpop.f32.mrf.mxu0
        %v3960 = vadd.f32 %v3871, %v3959
        %v3961 = vpop.f32.mrf.mxu0
        %v3962 = vadd.f32 %v3873, %v3961
        %3963 = vmatmul.bf16.gmra.mxu0 %v1198
        %v3964 = vpop.f32.mrf.mxu0
        %v3965 = vadd.f32 %v3876, %v3964
        %v3966 = vpop.f32.mrf.mxu0
        %v3967 = vadd.f32 %v3878, %v3966
        %3968 = vmatmul.bf16.gmra.mxu0 %v1210
        %v3969 = vpop.f32.mrf.mxu0
        %v3970 = vadd.f32 %v3881, %v3969
        %v3971 = vpop.f32.mrf.mxu0
        %v3972 = vadd.f32 %v3883, %v3971
        %3973 = vmatmul.bf16.gmra.mxu0 %v1222
        %v3974 = vpop.f32.mrf.mxu0
        %v3975 = vadd.f32 %v3886, %v3974
        %v3976 = vpop.f32.mrf.mxu0
        %v3977 = vadd.f32 %v3888, %v3976
        %3978 = vmatmul.bf16.gmra.mxu0 %v1234
        %v3979 = vpop.f32.mrf.mxu0
        %v3980 = vadd.f32 %v3891, %v3979
        %v3981 = vpop.f32.mrf.mxu0
        %v3982 = vadd.f32 %v3893, %v3981
        %3983 = vmatmul.bf16.gmra.mxu0 %v1246
        %v3984 = vpop.f32.mrf.mxu0
        %v3985 = vadd.f32 %v3896, %v3984
        %v3986 = vpop.f32.mrf.mxu0
        %v3987 = vadd.f32 %v3898, %v3986
        %3988 = vmatmul.bf16.gmra.mxu0 %v1258
        %v3989 = vpop.f32.mrf.mxu0
        %v3990 = vadd.f32 %v3901, %v3989
        %v3991 = vpop.f32.mrf.mxu0
        %v3992 = vadd.f32 %v3903, %v3991
        %3993 = vmatmul.bf16.gmra.mxu0 %v1270
        %v3994 = vpop.f32.mrf.mxu0
        %v3995 = vadd.f32 %v3906, %v3994
        %v3996 = vpop.f32.mrf.mxu0
        %v3997 = vadd.f32 %v3908, %v3996
        %3998 = vmatmul.bf16.gmra.mxu0 %v1282
        %v3999 = vpop.f32.mrf.mxu0
        %v4000 = vadd.f32 %v3911, %v3999
        %v4001 = vpop.f32.mrf.mxu0
        %v4002 = vadd.f32 %v3913, %v4001
        %4003 = vmatmul.bf16.gmra.mxu0 %v1294
        %v4004 = vpop.f32.mrf.mxu0
        %v4005 = vadd.f32 %v3916, %v4004
        %v4006 = vpop.f32.mrf.mxu0
        %v4007 = vadd.f32 %v3918, %v4006
        %4008 = vmatmul.bf16.gmra.mxu0 %v1306
        %v4009 = vpop.f32.mrf.mxu0
        %v4010 = vadd.f32 %v3921, %v4009
        %v4011 = vpop.f32.mrf.mxu0
        %v4012 = vadd.f32 %v3923, %v4011
        %4013 = vmatmul.bf16.gmra.mxu0 %v1318
        %v4014 = vpop.f32.mrf.mxu0
        %v4015 = vadd.f32 %v3926, %v4014
        %v4016 = vpop.f32.mrf.mxu0
        %v4017 = vadd.f32 %v3928, %v4016
        %4018 = vmatmul.bf16.gmra.mxu0 %v1330
        %v4019 = vpop.f32.mrf.mxu0
        %v4020 = vadd.f32 %v3931, %v4019
        %v4021 = vpop.f32.mrf.mxu0
        %v4022 = vadd.f32 %v3933, %v4021
        %4023 = vmatmul.bf16.gmra.mxu0 %v1342
        %v4024 = vpop.f32.mrf.mxu0
        %v4025 = vadd.f32 %v3936, %v4024
        %v4026 = vpop.f32.mrf.mxu0
        %v4027 = vadd.f32 %v3938, %v4026
        %4028 = vmatmul.bf16.gmra.mxu0 %v1354
        %v4029 = vpop.f32.mrf.mxu0
        %v4030 = vadd.f32 %v3941, %v4029
        %v4031 = vpop.f32.mrf.mxu0
        %v4032 = vadd.f32 %v3943, %v4031
        %4033 = vmatmul.bf16.gmra.mxu0 %v1366
        %v4034 = vpop.f32.mrf.mxu0
        %v4035 = vadd.f32 %v3946, %v4034
        %v4036 = vpop.f32.mrf.mxu0
        %v4037 = vadd.f32 %v3948, %v4036
        %4038 = vdwg.mxu0
        %4039 = vmatpush.bf16.msra.mxu0 %v2237
        %4040 = vmatpush.bf16.msra.mxu0 %v2235
        %4041 = vmatpush.bf16.msra.mxu0 %v2233
        %4042 = vmatpush.bf16.msra.mxu0 %v2231
        %4043 = vmatpush.bf16.msra.mxu0 %v2229
        %4044 = vmatpush.bf16.msra.mxu0 %v2227
        %4045 = vmatpush.bf16.msra.mxu0 %v2225
        %4046 = vmatpush.bf16.msra.mxu0 %v2223
        %4047 = vmatmul.bf16.gmra.mxu0 %v1187
        %v4048 = vpop.f32.mrf.mxu0
        %v4049 = vadd.f32 %v3960, %v4048
        %v4050 = vpop.f32.mrf.mxu0
        %v4051 = vadd.f32 %v3962, %v4050
        %4052 = vmatmul.bf16.gmra.mxu0 %v1199
        %v4053 = vpop.f32.mrf.mxu0
        %v4054 = vadd.f32 %v3965, %v4053
        %v4055 = vpop.f32.mrf.mxu0
        %v4056 = vadd.f32 %v3967, %v4055
        %4057 = vmatmul.bf16.gmra.mxu0 %v1211
        %v4058 = vpop.f32.mrf.mxu0
        %v4059 = vadd.f32 %v3970, %v4058
        %v4060 = vpop.f32.mrf.mxu0
        %v4061 = vadd.f32 %v3972, %v4060
        %4062 = vmatmul.bf16.gmra.mxu0 %v1223
        %v4063 = vpop.f32.mrf.mxu0
        %v4064 = vadd.f32 %v3975, %v4063
        %v4065 = vpop.f32.mrf.mxu0
        %v4066 = vadd.f32 %v3977, %v4065
        %4067 = vmatmul.bf16.gmra.mxu0 %v1235
        %v4068 = vpop.f32.mrf.mxu0
        %v4069 = vadd.f32 %v3980, %v4068
        %v4070 = vpop.f32.mrf.mxu0
        %v4071 = vadd.f32 %v3982, %v4070
        %4072 = vmatmul.bf16.gmra.mxu0 %v1247
        %v4073 = vpop.f32.mrf.mxu0
        %v4074 = vadd.f32 %v3985, %v4073
        %v4075 = vpop.f32.mrf.mxu0
        %v4076 = vadd.f32 %v3987, %v4075
        %4077 = vmatmul.bf16.gmra.mxu0 %v1259
        %v4078 = vpop.f32.mrf.mxu0
        %v4079 = vadd.f32 %v3990, %v4078
        %v4080 = vpop.f32.mrf.mxu0
        %v4081 = vadd.f32 %v3992, %v4080
        %4082 = vmatmul.bf16.gmra.mxu0 %v1271
        %v4083 = vpop.f32.mrf.mxu0
        %v4084 = vadd.f32 %v3995, %v4083
        %v4085 = vpop.f32.mrf.mxu0
        %v4086 = vadd.f32 %v3997, %v4085
        %4087 = vmatmul.bf16.gmra.mxu0 %v1283
        %v4088 = vpop.f32.mrf.mxu0
        %v4089 = vadd.f32 %v4000, %v4088
        %v4090 = vpop.f32.mrf.mxu0
        %v4091 = vadd.f32 %v4002, %v4090
        %4092 = vmatmul.bf16.gmra.mxu0 %v1295
        %v4093 = vpop.f32.mrf.mxu0
        %v4094 = vadd.f32 %v4005, %v4093
        %v4095 = vpop.f32.mrf.mxu0
        %v4096 = vadd.f32 %v4007, %v4095
        %4097 = vmatmul.bf16.gmra.mxu0 %v1307
        %v4098 = vpop.f32.mrf.mxu0
        %v4099 = vadd.f32 %v4010, %v4098
        %v4100 = vpop.f32.mrf.mxu0
        %v4101 = vadd.f32 %v4012, %v4100
        %4102 = vmatmul.bf16.gmra.mxu0 %v1319
        %v4103 = vpop.f32.mrf.mxu0
        %v4104 = vadd.f32 %v4015, %v4103
        %v4105 = vpop.f32.mrf.mxu0
        %v4106 = vadd.f32 %v4017, %v4105
        %4107 = vmatmul.bf16.gmra.mxu0 %v1331
        %v4108 = vpop.f32.mrf.mxu0
        %v4109 = vadd.f32 %v4020, %v4108
        %v4110 = vpop.f32.mrf.mxu0
        %v4111 = vadd.f32 %v4022, %v4110
        %4112 = vmatmul.bf16.gmra.mxu0 %v1343
        %v4113 = vpop.f32.mrf.mxu0
        %v4114 = vadd.f32 %v4025, %v4113
        %v4115 = vpop.f32.mrf.mxu0
        %v4116 = vadd.f32 %v4027, %v4115
        %4117 = vmatmul.bf16.gmra.mxu0 %v1355
        %v4118 = vpop.f32.mrf.mxu0
        %v4119 = vadd.f32 %v4030, %v4118
        %v4120 = vpop.f32.mrf.mxu0
        %v4121 = vadd.f32 %v4032, %v4120
        %4122 = vmatmul.bf16.gmra.mxu0 %v1367
        %v4123 = vpop.f32.mrf.mxu0
        %v4124 = vadd.f32 %v4035, %v4123
        %v4125 = vpop.f32.mrf.mxu0
        %v4126 = vadd.f32 %v4037, %v4125
        %4127 = vdwg.mxu0
        %4128 = vmatpush.bf16.msra.mxu0 %v2253
        %4129 = vmatpush.bf16.msra.mxu0 %v2251
        %4130 = vmatpush.bf16.msra.mxu0 %v2249
        %4131 = vmatpush.bf16.msra.mxu0 %v2247
        %4132 = vmatpush.bf16.msra.mxu0 %v2245
        %4133 = vmatpush.bf16.msra.mxu0 %v2243
        %4134 = vmatpush.bf16.msra.mxu0 %v2241
        %4135 = vmatpush.bf16.msra.mxu0 %v2239
        %4136 = vmatmul.bf16.gmra.mxu0 %v1188
        %v4137 = vpop.f32.mrf.mxu0
        %v4138 = vadd.f32 %v4049, %v4137
        %v4139 = vpop.f32.mrf.mxu0
        %v4140 = vadd.f32 %v4051, %v4139
        %4141 = vmatmul.bf16.gmra.mxu0 %v1200
        %v4142 = vpop.f32.mrf.mxu0
        %v4143 = vadd.f32 %v4054, %v4142
        %v4144 = vpop.f32.mrf.mxu0
        %v4145 = vadd.f32 %v4056, %v4144
        %4146 = vmatmul.bf16.gmra.mxu0 %v1212
        %v4147 = vpop.f32.mrf.mxu0
        %v4148 = vadd.f32 %v4059, %v4147
        %v4149 = vpop.f32.mrf.mxu0
        %v4150 = vadd.f32 %v4061, %v4149
        %4151 = vmatmul.bf16.gmra.mxu0 %v1224
        %v4152 = vpop.f32.mrf.mxu0
        %v4153 = vadd.f32 %v4064, %v4152
        %v4154 = vpop.f32.mrf.mxu0
        %v4155 = vadd.f32 %v4066, %v4154
        %4156 = vmatmul.bf16.gmra.mxu0 %v1236
        %v4157 = vpop.f32.mrf.mxu0
        %v4158 = vadd.f32 %v4069, %v4157
        %v4159 = vpop.f32.mrf.mxu0
        %v4160 = vadd.f32 %v4071, %v4159
        %4161 = vmatmul.bf16.gmra.mxu0 %v1248
        %v4162 = vpop.f32.mrf.mxu0
        %v4163 = vadd.f32 %v4074, %v4162
        %v4164 = vpop.f32.mrf.mxu0
        %v4165 = vadd.f32 %v4076, %v4164
        %4166 = vmatmul.bf16.gmra.mxu0 %v1260
        %v4167 = vpop.f32.mrf.mxu0
        %v4168 = vadd.f32 %v4079, %v4167
        %v4169 = vpop.f32.mrf.mxu0
        %v4170 = vadd.f32 %v4081, %v4169
        %4171 = vmatmul.bf16.gmra.mxu0 %v1272
        %v4172 = vpop.f32.mrf.mxu0
        %v4173 = vadd.f32 %v4084, %v4172
        %v4174 = vpop.f32.mrf.mxu0
        %v4175 = vadd.f32 %v4086, %v4174
        %4176 = vmatmul.bf16.gmra.mxu0 %v1284
        %v4177 = vpop.f32.mrf.mxu0
        %v4178 = vadd.f32 %v4089, %v4177
        %v4179 = vpop.f32.mrf.mxu0
        %v4180 = vadd.f32 %v4091, %v4179
        %4181 = vmatmul.bf16.gmra.mxu0 %v1296
        %v4182 = vpop.f32.mrf.mxu0
        %v4183 = vadd.f32 %v4094, %v4182
        %v4184 = vpop.f32.mrf.mxu0
        %v4185 = vadd.f32 %v4096, %v4184
        %4186 = vmatmul.bf16.gmra.mxu0 %v1308
        %v4187 = vpop.f32.mrf.mxu0
        %v4188 = vadd.f32 %v4099, %v4187
        %v4189 = vpop.f32.mrf.mxu0
        %v4190 = vadd.f32 %v4101, %v4189
        %4191 = vmatmul.bf16.gmra.mxu0 %v1320
        %v4192 = vpop.f32.mrf.mxu0
        %v4193 = vadd.f32 %v4104, %v4192
        %v4194 = vpop.f32.mrf.mxu0
        %v4195 = vadd.f32 %v4106, %v4194
        %4196 = vmatmul.bf16.gmra.mxu0 %v1332
        %v4197 = vpop.f32.mrf.mxu0
        %v4198 = vadd.f32 %v4109, %v4197
        %v4199 = vpop.f32.mrf.mxu0
        %v4200 = vadd.f32 %v4111, %v4199
        %4201 = vmatmul.bf16.gmra.mxu0 %v1344
        %v4202 = vpop.f32.mrf.mxu0
        %v4203 = vadd.f32 %v4114, %v4202
        %v4204 = vpop.f32.mrf.mxu0
        %v4205 = vadd.f32 %v4116, %v4204
        %4206 = vmatmul.bf16.gmra.mxu0 %v1356
        %v4207 = vpop.f32.mrf.mxu0
        %v4208 = vadd.f32 %v4119, %v4207
        %v4209 = vpop.f32.mrf.mxu0
        %v4210 = vadd.f32 %v4121, %v4209
        %4211 = vmatmul.bf16.gmra.mxu0 %v1368
        %v4212 = vpop.f32.mrf.mxu0
        %v4213 = vadd.f32 %v4124, %v4212
        %v4214 = vpop.f32.mrf.mxu0
        %v4215 = vadd.f32 %v4126, %v4214
        %4216 = vdwg.mxu0
        %4217 = vmatpush.bf16.msra.mxu0 %v2269
        %4218 = vmatpush.bf16.msra.mxu0 %v2267
        %4219 = vmatpush.bf16.msra.mxu0 %v2265
        %4220 = vmatpush.bf16.msra.mxu0 %v2263
        %4221 = vmatpush.bf16.msra.mxu0 %v2261
        %4222 = vmatpush.bf16.msra.mxu0 %v2259
        %4223 = vmatpush.bf16.msra.mxu0 %v2257
        %4224 = vmatpush.bf16.msra.mxu0 %v2255
        %4225 = vmatmul.bf16.gmra.mxu0 %v1189
        %v4226 = vpop.f32.mrf.mxu0
        %v4227 = vadd.f32 %v4138, %v4226
        %v4228 = vpop.f32.mrf.mxu0
        %v4229 = vadd.f32 %v4140, %v4228
        %4230 = vmatmul.bf16.gmra.mxu0 %v1201
        %v4231 = vpop.f32.mrf.mxu0
        %v4232 = vadd.f32 %v4143, %v4231
        %v4233 = vpop.f32.mrf.mxu0
        %v4234 = vadd.f32 %v4145, %v4233
        %4235 = vmatmul.bf16.gmra.mxu0 %v1213
        %v4236 = vpop.f32.mrf.mxu0
        %v4237 = vadd.f32 %v4148, %v4236
        %v4238 = vpop.f32.mrf.mxu0
        %v4239 = vadd.f32 %v4150, %v4238
        %4240 = vmatmul.bf16.gmra.mxu0 %v1225
        %v4241 = vpop.f32.mrf.mxu0
        %v4242 = vadd.f32 %v4153, %v4241
        %v4243 = vpop.f32.mrf.mxu0
        %v4244 = vadd.f32 %v4155, %v4243
        %4245 = vmatmul.bf16.gmra.mxu0 %v1237
        %v4246 = vpop.f32.mrf.mxu0
        %v4247 = vadd.f32 %v4158, %v4246
        %v4248 = vpop.f32.mrf.mxu0
        %v4249 = vadd.f32 %v4160, %v4248
        %4250 = vmatmul.bf16.gmra.mxu0 %v1249
        %v4251 = vpop.f32.mrf.mxu0
        %v4252 = vadd.f32 %v4163, %v4251
        %v4253 = vpop.f32.mrf.mxu0
        %v4254 = vadd.f32 %v4165, %v4253
        %4255 = vmatmul.bf16.gmra.mxu0 %v1261
        %v4256 = vpop.f32.mrf.mxu0
        %v4257 = vadd.f32 %v4168, %v4256
        %v4258 = vpop.f32.mrf.mxu0
        %v4259 = vadd.f32 %v4170, %v4258
        %4260 = vmatmul.bf16.gmra.mxu0 %v1273
        %v4261 = vpop.f32.mrf.mxu0
        %v4262 = vadd.f32 %v4173, %v4261
        %v4263 = vpop.f32.mrf.mxu0
        %v4264 = vadd.f32 %v4175, %v4263
        %4265 = vmatmul.bf16.gmra.mxu0 %v1285
        %v4266 = vpop.f32.mrf.mxu0
        %v4267 = vadd.f32 %v4178, %v4266
        %v4268 = vpop.f32.mrf.mxu0
        %v4269 = vadd.f32 %v4180, %v4268
        %4270 = vmatmul.bf16.gmra.mxu0 %v1297
        %v4271 = vpop.f32.mrf.mxu0
        %v4272 = vadd.f32 %v4183, %v4271
        %v4273 = vpop.f32.mrf.mxu0
        %v4274 = vadd.f32 %v4185, %v4273
        %4275 = vmatmul.bf16.gmra.mxu0 %v1309
        %v4276 = vpop.f32.mrf.mxu0
        %v4277 = vadd.f32 %v4188, %v4276
        %v4278 = vpop.f32.mrf.mxu0
        %v4279 = vadd.f32 %v4190, %v4278
        %4280 = vmatmul.bf16.gmra.mxu0 %v1321
        %v4281 = vpop.f32.mrf.mxu0
        %v4282 = vadd.f32 %v4193, %v4281
        %v4283 = vpop.f32.mrf.mxu0
        %v4284 = vadd.f32 %v4195, %v4283
        %4285 = vmatmul.bf16.gmra.mxu0 %v1333
        %v4286 = vpop.f32.mrf.mxu0
        %v4287 = vadd.f32 %v4198, %v4286
        %v4288 = vpop.f32.mrf.mxu0
        %v4289 = vadd.f32 %v4200, %v4288
        %4290 = vmatmul.bf16.gmra.mxu0 %v1345
        %v4291 = vpop.f32.mrf.mxu0
        %v4292 = vadd.f32 %v4203, %v4291
        %v4293 = vpop.f32.mrf.mxu0
        %v4294 = vadd.f32 %v4205, %v4293
        %4295 = vmatmul.bf16.gmra.mxu0 %v1357
        %v4296 = vpop.f32.mrf.mxu0
        %v4297 = vadd.f32 %v4208, %v4296
        %v4298 = vpop.f32.mrf.mxu0
        %v4299 = vadd.f32 %v4210, %v4298
        %4300 = vmatmul.bf16.gmra.mxu0 %v1369
        %v4301 = vpop.f32.mrf.mxu0
        %v4302 = vadd.f32 %v4213, %v4301
        %v4303 = vpop.f32.mrf.mxu0
        %v4304 = vadd.f32 %v4215, %v4303
        %4305 = vdwg.mxu0
        %4306 = vmatpush.bf16.msra.mxu0 %v2285
        %4307 = vmatpush.bf16.msra.mxu0 %v2283
        %4308 = vmatpush.bf16.msra.mxu0 %v2281
        %4309 = vmatpush.bf16.msra.mxu0 %v2279
        %4310 = vmatpush.bf16.msra.mxu0 %v2277
        %4311 = vmatpush.bf16.msra.mxu0 %v2275
        %4312 = vmatpush.bf16.msra.mxu0 %v2273
        %4313 = vmatpush.bf16.msra.mxu0 %v2271
        %4314 = vmatmul.bf16.gmra.mxu0 %v1190
        %v4315 = vpop.f32.mrf.mxu0
        %v4316 = vadd.f32 %v4227, %v4315
        %v4317 = vpop.f32.mrf.mxu0
        %v4318 = vadd.f32 %v4229, %v4317
        %4319 = vmatmul.bf16.gmra.mxu0 %v1202
        %v4320 = vpop.f32.mrf.mxu0
        %v4321 = vadd.f32 %v4232, %v4320
        %v4322 = vpop.f32.mrf.mxu0
        %v4323 = vadd.f32 %v4234, %v4322
        %4324 = vmatmul.bf16.gmra.mxu0 %v1214
        %v4325 = vpop.f32.mrf.mxu0
        %v4326 = vadd.f32 %v4237, %v4325
        %v4327 = vpop.f32.mrf.mxu0
        %v4328 = vadd.f32 %v4239, %v4327
        %4329 = vmatmul.bf16.gmra.mxu0 %v1226
        %v4330 = vpop.f32.mrf.mxu0
        %v4331 = vadd.f32 %v4242, %v4330
        %v4332 = vpop.f32.mrf.mxu0
        %v4333 = vadd.f32 %v4244, %v4332
        %4334 = vmatmul.bf16.gmra.mxu0 %v1238
        %v4335 = vpop.f32.mrf.mxu0
        %v4336 = vadd.f32 %v4247, %v4335
        %v4337 = vpop.f32.mrf.mxu0
        %v4338 = vadd.f32 %v4249, %v4337
        %4339 = vmatmul.bf16.gmra.mxu0 %v1250
        %v4340 = vpop.f32.mrf.mxu0
        %v4341 = vadd.f32 %v4252, %v4340
        %v4342 = vpop.f32.mrf.mxu0
        %v4343 = vadd.f32 %v4254, %v4342
        %4344 = vmatmul.bf16.gmra.mxu0 %v1262
        %v4345 = vpop.f32.mrf.mxu0
        %v4346 = vadd.f32 %v4257, %v4345
        %v4347 = vpop.f32.mrf.mxu0
        %v4348 = vadd.f32 %v4259, %v4347
        %4349 = vmatmul.bf16.gmra.mxu0 %v1274
        %v4350 = vpop.f32.mrf.mxu0
        %v4351 = vadd.f32 %v4262, %v4350
        %v4352 = vpop.f32.mrf.mxu0
        %v4353 = vadd.f32 %v4264, %v4352
        %4354 = vmatmul.bf16.gmra.mxu0 %v1286
        %v4355 = vpop.f32.mrf.mxu0
        %v4356 = vadd.f32 %v4267, %v4355
        %v4357 = vpop.f32.mrf.mxu0
        %v4358 = vadd.f32 %v4269, %v4357
        %4359 = vmatmul.bf16.gmra.mxu0 %v1298
        %v4360 = vpop.f32.mrf.mxu0
        %v4361 = vadd.f32 %v4272, %v4360
        %v4362 = vpop.f32.mrf.mxu0
        %v4363 = vadd.f32 %v4274, %v4362
        %4364 = vmatmul.bf16.gmra.mxu0 %v1310
        %v4365 = vpop.f32.mrf.mxu0
        %v4366 = vadd.f32 %v4277, %v4365
        %v4367 = vpop.f32.mrf.mxu0
        %v4368 = vadd.f32 %v4279, %v4367
        %4369 = vmatmul.bf16.gmra.mxu0 %v1322
        %v4370 = vpop.f32.mrf.mxu0
        %v4371 = vadd.f32 %v4282, %v4370
        %v4372 = vpop.f32.mrf.mxu0
        %v4373 = vadd.f32 %v4284, %v4372
        %4374 = vmatmul.bf16.gmra.mxu0 %v1334
        %v4375 = vpop.f32.mrf.mxu0
        %v4376 = vadd.f32 %v4287, %v4375
        %v4377 = vpop.f32.mrf.mxu0
        %v4378 = vadd.f32 %v4289, %v4377
        %4379 = vmatmul.bf16.gmra.mxu0 %v1346
        %v4380 = vpop.f32.mrf.mxu0
        %v4381 = vadd.f32 %v4292, %v4380
        %v4382 = vpop.f32.mrf.mxu0
        %v4383 = vadd.f32 %v4294, %v4382
        %4384 = vmatmul.bf16.gmra.mxu0 %v1358
        %v4385 = vpop.f32.mrf.mxu0
        %v4386 = vadd.f32 %v4297, %v4385
        %v4387 = vpop.f32.mrf.mxu0
        %v4388 = vadd.f32 %v4299, %v4387
        %4389 = vmatmul.bf16.gmra.mxu0 %v1370
        %v4390 = vpop.f32.mrf.mxu0
        %v4391 = vadd.f32 %v4302, %v4390
        %v4392 = vpop.f32.mrf.mxu0
        %v4393 = vadd.f32 %v4304, %v4392
        %4394 = vdwg.mxu0
        %4395 = vmatpush.bf16.msra.mxu0 %v2301
        %4396 = vmatpush.bf16.msra.mxu0 %v2299
        %4397 = vmatpush.bf16.msra.mxu0 %v2297
        %4398 = vmatpush.bf16.msra.mxu0 %v2295
        %4399 = vmatpush.bf16.msra.mxu0 %v2293
        %4400 = vmatpush.bf16.msra.mxu0 %v2291
        %4401 = vmatpush.bf16.msra.mxu0 %v2289
        %4402 = vmatpush.bf16.msra.mxu0 %v2287
        %4403 = vmatmul.bf16.gmra.mxu0 %v1191
        %v4404 = vpop.f32.mrf.mxu0
        %v4405 = vadd.f32 %v4316, %v4404
        %v4406 = vpop.f32.mrf.mxu0
        %v4407 = vadd.f32 %v4318, %v4406
        %4408 = vmatmul.bf16.gmra.mxu0 %v1203
        %v4409 = vpop.f32.mrf.mxu0
        %v4410 = vadd.f32 %v4321, %v4409
        %v4411 = vpop.f32.mrf.mxu0
        %v4412 = vadd.f32 %v4323, %v4411
        %4413 = vmatmul.bf16.gmra.mxu0 %v1215
        %v4414 = vpop.f32.mrf.mxu0
        %v4415 = vadd.f32 %v4326, %v4414
        %v4416 = vpop.f32.mrf.mxu0
        %v4417 = vadd.f32 %v4328, %v4416
        %4418 = vmatmul.bf16.gmra.mxu0 %v1227
        %v4419 = vpop.f32.mrf.mxu0
        %v4420 = vadd.f32 %v4331, %v4419
        %v4421 = vpop.f32.mrf.mxu0
        %v4422 = vadd.f32 %v4333, %v4421
        %4423 = vmatmul.bf16.gmra.mxu0 %v1239
        %v4424 = vpop.f32.mrf.mxu0
        %v4425 = vadd.f32 %v4336, %v4424
        %v4426 = vpop.f32.mrf.mxu0
        %v4427 = vadd.f32 %v4338, %v4426
        %4428 = vmatmul.bf16.gmra.mxu0 %v1251
        %v4429 = vpop.f32.mrf.mxu0
        %v4430 = vadd.f32 %v4341, %v4429
        %v4431 = vpop.f32.mrf.mxu0
        %v4432 = vadd.f32 %v4343, %v4431
        %4433 = vmatmul.bf16.gmra.mxu0 %v1263
        %v4434 = vpop.f32.mrf.mxu0
        %v4435 = vadd.f32 %v4346, %v4434
        %v4436 = vpop.f32.mrf.mxu0
        %v4437 = vadd.f32 %v4348, %v4436
        %4438 = vmatmul.bf16.gmra.mxu0 %v1275
        %v4439 = vpop.f32.mrf.mxu0
        %v4440 = vadd.f32 %v4351, %v4439
        %v4441 = vpop.f32.mrf.mxu0
        %v4442 = vadd.f32 %v4353, %v4441
        %4443 = vmatmul.bf16.gmra.mxu0 %v1287
        %v4444 = vpop.f32.mrf.mxu0
        %v4445 = vadd.f32 %v4356, %v4444
        %v4446 = vpop.f32.mrf.mxu0
        %v4447 = vadd.f32 %v4358, %v4446
        %4448 = vmatmul.bf16.gmra.mxu0 %v1299
        %v4449 = vpop.f32.mrf.mxu0
        %v4450 = vadd.f32 %v4361, %v4449
        %v4451 = vpop.f32.mrf.mxu0
        %v4452 = vadd.f32 %v4363, %v4451
        %4453 = vmatmul.bf16.gmra.mxu0 %v1311
        %v4454 = vpop.f32.mrf.mxu0
        %v4455 = vadd.f32 %v4366, %v4454
        %v4456 = vpop.f32.mrf.mxu0
        %v4457 = vadd.f32 %v4368, %v4456
        %4458 = vmatmul.bf16.gmra.mxu0 %v1323
        %v4459 = vpop.f32.mrf.mxu0
        %v4460 = vadd.f32 %v4371, %v4459
        %v4461 = vpop.f32.mrf.mxu0
        %v4462 = vadd.f32 %v4373, %v4461
        %4463 = vmatmul.bf16.gmra.mxu0 %v1335
        %v4464 = vpop.f32.mrf.mxu0
        %v4465 = vadd.f32 %v4376, %v4464
        %v4466 = vpop.f32.mrf.mxu0
        %v4467 = vadd.f32 %v4378, %v4466
        %4468 = vmatmul.bf16.gmra.mxu0 %v1347
        %v4469 = vpop.f32.mrf.mxu0
        %v4470 = vadd.f32 %v4381, %v4469
        %v4471 = vpop.f32.mrf.mxu0
        %v4472 = vadd.f32 %v4383, %v4471
        %4473 = vmatmul.bf16.gmra.mxu0 %v1359
        %v4474 = vpop.f32.mrf.mxu0
        %v4475 = vadd.f32 %v4386, %v4474
        %v4476 = vpop.f32.mrf.mxu0
        %v4477 = vadd.f32 %v4388, %v4476
        %4478 = vmatmul.bf16.gmra.mxu0 %v1371
        %v4479 = vpop.f32.mrf.mxu0
        %v4480 = vadd.f32 %v4391, %v4479
        %v4481 = vpop.f32.mrf.mxu0
        %v4482 = vadd.f32 %v4393, %v4481
        %4483 = vdwg.mxu0
        %4484 = vmatpush.bf16.msra.mxu0 %v2317
        %4485 = vmatpush.bf16.msra.mxu0 %v2315
        %4486 = vmatpush.bf16.msra.mxu0 %v2313
        %4487 = vmatpush.bf16.msra.mxu0 %v2311
        %4488 = vmatpush.bf16.msra.mxu0 %v2309
        %4489 = vmatpush.bf16.msra.mxu0 %v2307
        %4490 = vmatpush.bf16.msra.mxu0 %v2305
        %4491 = vmatpush.bf16.msra.mxu0 %v2303
        %4492 = vmatmul.bf16.gmra.mxu0 %v1192
        %v4493 = vpop.f32.mrf.mxu0
        %v4494 = vadd.f32 %v4405, %v4493
        %v4495 = vpop.f32.mrf.mxu0
        %v4496 = vadd.f32 %v4407, %v4495
        %4497 = vmatmul.bf16.gmra.mxu0 %v1204
        %v4498 = vpop.f32.mrf.mxu0
        %v4499 = vadd.f32 %v4410, %v4498
        %v4500 = vpop.f32.mrf.mxu0
        %v4501 = vadd.f32 %v4412, %v4500
        %4502 = vmatmul.bf16.gmra.mxu0 %v1216
        %v4503 = vpop.f32.mrf.mxu0
        %v4504 = vadd.f32 %v4415, %v4503
        %v4505 = vpop.f32.mrf.mxu0
        %v4506 = vadd.f32 %v4417, %v4505
        %4507 = vmatmul.bf16.gmra.mxu0 %v1228
        %v4508 = vpop.f32.mrf.mxu0
        %v4509 = vadd.f32 %v4420, %v4508
        %v4510 = vpop.f32.mrf.mxu0
        %v4511 = vadd.f32 %v4422, %v4510
        %4512 = vmatmul.bf16.gmra.mxu0 %v1240
        %v4513 = vpop.f32.mrf.mxu0
        %v4514 = vadd.f32 %v4425, %v4513
        %v4515 = vpop.f32.mrf.mxu0
        %v4516 = vadd.f32 %v4427, %v4515
        %4517 = vmatmul.bf16.gmra.mxu0 %v1252
        %v4518 = vpop.f32.mrf.mxu0
        %v4519 = vadd.f32 %v4430, %v4518
        %v4520 = vpop.f32.mrf.mxu0
        %v4521 = vadd.f32 %v4432, %v4520
        %4522 = vmatmul.bf16.gmra.mxu0 %v1264
        %v4523 = vpop.f32.mrf.mxu0
        %v4524 = vadd.f32 %v4435, %v4523
        %v4525 = vpop.f32.mrf.mxu0
        %v4526 = vadd.f32 %v4437, %v4525
        %4527 = vmatmul.bf16.gmra.mxu0 %v1276
        %v4528 = vpop.f32.mrf.mxu0
        %v4529 = vadd.f32 %v4440, %v4528
        %v4530 = vpop.f32.mrf.mxu0
        %v4531 = vadd.f32 %v4442, %v4530
        %4532 = vmatmul.bf16.gmra.mxu0 %v1288
        %v4533 = vpop.f32.mrf.mxu0
        %v4534 = vadd.f32 %v4445, %v4533
        %v4535 = vpop.f32.mrf.mxu0
        %v4536 = vadd.f32 %v4447, %v4535
        %4537 = vmatmul.bf16.gmra.mxu0 %v1300
        %v4538 = vpop.f32.mrf.mxu0
        %v4539 = vadd.f32 %v4450, %v4538
        %v4540 = vpop.f32.mrf.mxu0
        %v4541 = vadd.f32 %v4452, %v4540
        %4542 = vmatmul.bf16.gmra.mxu0 %v1312
        %v4543 = vpop.f32.mrf.mxu0
        %v4544 = vadd.f32 %v4455, %v4543
        %v4545 = vpop.f32.mrf.mxu0
        %v4546 = vadd.f32 %v4457, %v4545
        %4547 = vmatmul.bf16.gmra.mxu0 %v1324
        %v4548 = vpop.f32.mrf.mxu0
        %v4549 = vadd.f32 %v4460, %v4548
        %v4550 = vpop.f32.mrf.mxu0
        %v4551 = vadd.f32 %v4462, %v4550
        %4552 = vmatmul.bf16.gmra.mxu0 %v1336
        %v4553 = vpop.f32.mrf.mxu0
        %v4554 = vadd.f32 %v4465, %v4553
        %v4555 = vpop.f32.mrf.mxu0
        %v4556 = vadd.f32 %v4467, %v4555
        %4557 = vmatmul.bf16.gmra.mxu0 %v1348
        %v4558 = vpop.f32.mrf.mxu0
        %v4559 = vadd.f32 %v4470, %v4558
        %v4560 = vpop.f32.mrf.mxu0
        %v4561 = vadd.f32 %v4472, %v4560
        %4562 = vmatmul.bf16.gmra.mxu0 %v1360
        %v4563 = vpop.f32.mrf.mxu0
        %v4564 = vadd.f32 %v4475, %v4563
        %v4565 = vpop.f32.mrf.mxu0
        %v4566 = vadd.f32 %v4477, %v4565
        %4567 = vmatmul.bf16.gmra.mxu0 %v1372
        %v4568 = vpop.f32.mrf.mxu0
        %v4569 = vadd.f32 %v4480, %v4568
        %v4570 = vpop.f32.mrf.mxu0
        %v4571 = vadd.f32 %v4482, %v4570
        %4572 = vdwg.mxu0
        %4573 = vmatpush.bf16.msra.mxu0 %v2333
        %4574 = vmatpush.bf16.msra.mxu0 %v2331
        %4575 = vmatpush.bf16.msra.mxu0 %v2329
        %4576 = vmatpush.bf16.msra.mxu0 %v2327
        %4577 = vmatpush.bf16.msra.mxu0 %v2325
        %4578 = vmatpush.bf16.msra.mxu0 %v2323
        %4579 = vmatpush.bf16.msra.mxu0 %v2321
        %4580 = vmatpush.bf16.msra.mxu0 %v2319
        %4581 = vmatmul.bf16.gmra.mxu0 %v1193
        %v4582 = vpop.f32.mrf.mxu0
        %v4583 = vadd.f32 %v4494, %v4582
        %v4584 = vpop.f32.mrf.mxu0
        %v4585 = vadd.f32 %v4496, %v4584
        %4586 = vmatmul.bf16.gmra.mxu0 %v1205
        %v4587 = vpop.f32.mrf.mxu0
        %v4588 = vadd.f32 %v4499, %v4587
        %v4589 = vpop.f32.mrf.mxu0
        %v4590 = vadd.f32 %v4501, %v4589
        %4591 = vmatmul.bf16.gmra.mxu0 %v1217
        %v4592 = vpop.f32.mrf.mxu0
        %v4593 = vadd.f32 %v4504, %v4592
        %v4594 = vpop.f32.mrf.mxu0
        %v4595 = vadd.f32 %v4506, %v4594
        %4596 = vmatmul.bf16.gmra.mxu0 %v1229
        %v4597 = vpop.f32.mrf.mxu0
        %v4598 = vadd.f32 %v4509, %v4597
        %v4599 = vpop.f32.mrf.mxu0
        %v4600 = vadd.f32 %v4511, %v4599
        %4601 = vmatmul.bf16.gmra.mxu0 %v1241
        %v4602 = vpop.f32.mrf.mxu0
        %v4603 = vadd.f32 %v4514, %v4602
        %v4604 = vpop.f32.mrf.mxu0
        %v4605 = vadd.f32 %v4516, %v4604
        %4606 = vmatmul.bf16.gmra.mxu0 %v1253
        %v4607 = vpop.f32.mrf.mxu0
        %v4608 = vadd.f32 %v4519, %v4607
        %v4609 = vpop.f32.mrf.mxu0
        %v4610 = vadd.f32 %v4521, %v4609
        %4611 = vmatmul.bf16.gmra.mxu0 %v1265
        %v4612 = vpop.f32.mrf.mxu0
        %v4613 = vadd.f32 %v4524, %v4612
        %v4614 = vpop.f32.mrf.mxu0
        %v4615 = vadd.f32 %v4526, %v4614
        %4616 = vmatmul.bf16.gmra.mxu0 %v1277
        %v4617 = vpop.f32.mrf.mxu0
        %v4618 = vadd.f32 %v4529, %v4617
        %v4619 = vpop.f32.mrf.mxu0
        %v4620 = vadd.f32 %v4531, %v4619
        %4621 = vmatmul.bf16.gmra.mxu0 %v1289
        %v4622 = vpop.f32.mrf.mxu0
        %v4623 = vadd.f32 %v4534, %v4622
        %v4624 = vpop.f32.mrf.mxu0
        %v4625 = vadd.f32 %v4536, %v4624
        %4626 = vmatmul.bf16.gmra.mxu0 %v1301
        %v4627 = vpop.f32.mrf.mxu0
        %v4628 = vadd.f32 %v4539, %v4627
        %v4629 = vpop.f32.mrf.mxu0
        %v4630 = vadd.f32 %v4541, %v4629
        %4631 = vmatmul.bf16.gmra.mxu0 %v1313
        %v4632 = vpop.f32.mrf.mxu0
        %v4633 = vadd.f32 %v4544, %v4632
        %v4634 = vpop.f32.mrf.mxu0
        %v4635 = vadd.f32 %v4546, %v4634
        %4636 = vmatmul.bf16.gmra.mxu0 %v1325
        %v4637 = vpop.f32.mrf.mxu0
        %v4638 = vadd.f32 %v4549, %v4637
        %v4639 = vpop.f32.mrf.mxu0
        %v4640 = vadd.f32 %v4551, %v4639
        %4641 = vmatmul.bf16.gmra.mxu0 %v1337
        %v4642 = vpop.f32.mrf.mxu0
        %v4643 = vadd.f32 %v4554, %v4642
        %v4644 = vpop.f32.mrf.mxu0
        %v4645 = vadd.f32 %v4556, %v4644
        %4646 = vmatmul.bf16.gmra.mxu0 %v1349
        %v4647 = vpop.f32.mrf.mxu0
        %v4648 = vadd.f32 %v4559, %v4647
        %v4649 = vpop.f32.mrf.mxu0
        %v4650 = vadd.f32 %v4561, %v4649
        %4651 = vmatmul.bf16.gmra.mxu0 %v1361
        %v4652 = vpop.f32.mrf.mxu0
        %v4653 = vadd.f32 %v4564, %v4652
        %v4654 = vpop.f32.mrf.mxu0
        %v4655 = vadd.f32 %v4566, %v4654
        %4656 = vmatmul.bf16.gmra.mxu0 %v1373
        %v4657 = vpop.f32.mrf.mxu0
        %v4658 = vadd.f32 %v4569, %v4657
        %v4659 = vpop.f32.mrf.mxu0
        %v4660 = vadd.f32 %v4571, %v4659
        %4661 = vdwg.mxu0
        %4662 = vst [vmem:[%s212] sm:$0xff] %v3515
        %4663 = vst [vmem:[%s212 + $0x8] sm:$0xff] %v4583
        %4664 = vst [vmem:[%s212 + $0x10] sm:$0xff] %v3517
        %4665 = vst [vmem:[%s212 + $0x18] sm:$0xff] %v4585
        %4666 = vst [vmem:[%s212 + $0x20] sm:$0xff] %v3520
        %4667 = vst [vmem:[%s212 + $0x28] sm:$0xff] %v4588
        %4668 = vst [vmem:[%s212 + $0x30] sm:$0xff] %v3522
        %4669 = vst [vmem:[%s212 + $0x38] sm:$0xff] %v4590
        %4670 = vst [vmem:[%s212 + $0x40] sm:$0xff] %v3525
        %4671 = vst [vmem:[%s212 + $0x48] sm:$0xff] %v4593
        %4672 = vst [vmem:[%s212 + $0x50] sm:$0xff] %v3527
        %4673 = vst [vmem:[%s212 + $0x58] sm:$0xff] %v4595
        %4674 = vst [vmem:[%s212 + $0x60] sm:$0xff] %v3530
        %4675 = vst [vmem:[%s212 + $0x68] sm:$0xff] %v4598
        %4676 = vst [vmem:[%s212 + $0x70] sm:$0xff] %v3532
        %4677 = vst [vmem:[%s212 + $0x78] sm:$0xff] %v4600
        %4678 = vst [vmem:[%s212 + $0x80] sm:$0xff] %v3535
        %4679 = vst [vmem:[%s212 + $0x88] sm:$0xff] %v4603
        %4680 = vst [vmem:[%s212 + $0x90] sm:$0xff] %v3537
        %4681 = vst [vmem:[%s212 + $0x98] sm:$0xff] %v4605
        %4682 = vst [vmem:[%s212 + $0xa0] sm:$0xff] %v3540
        %4683 = vst [vmem:[%s212 + $0xa8] sm:$0xff] %v4608
        %4684 = vst [vmem:[%s212 + $0xb0] sm:$0xff] %v3542
        %4685 = vst [vmem:[%s212 + $0xb8] sm:$0xff] %v4610
        %4686 = vst [vmem:[%s212 + $0xc0] sm:$0xff] %v3545
        %4687 = vst [vmem:[%s212 + $0xc8] sm:$0xff] %v4613
        %4688 = vst [vmem:[%s212 + $0xd0] sm:$0xff] %v3547
        %4689 = vst [vmem:[%s212 + $0xd8] sm:$0xff] %v4615
        %4690 = vst [vmem:[%s212 + $0xe0] sm:$0xff] %v3550
        %4691 = vst [vmem:[%s212 + $0xe8] sm:$0xff] %v4618
        %4692 = vst [vmem:[%s212 + $0xf0] sm:$0xff] %v3552
        %4693 = vst [vmem:[%s212 + $0xf8] sm:$0xff] %v4620
        %4694 = vst [vmem:[%s212 + $0x100] sm:$0xff] %v3555
        %4695 = vst [vmem:[%s212 + $0x108] sm:$0xff] %v4623
        %4696 = vst [vmem:[%s212 + $0x110] sm:$0xff] %v3557
        %4697 = vst [vmem:[%s212 + $0x118] sm:$0xff] %v4625
        %4698 = vst [vmem:[%s212 + $0x120] sm:$0xff] %v3560
        %4699 = vst [vmem:[%s212 + $0x128] sm:$0xff] %v4628
        %4700 = vst [vmem:[%s212 + $0x130] sm:$0xff] %v3562
        %4701 = vst [vmem:[%s212 + $0x138] sm:$0xff] %v4630
        %4702 = vst [vmem:[%s212 + $0x140] sm:$0xff] %v3565
        %4703 = vst [vmem:[%s212 + $0x148] sm:$0xff] %v4633
        %4704 = vst [vmem:[%s212 + $0x150] sm:$0xff] %v3567
        %4705 = vst [vmem:[%s212 + $0x158] sm:$0xff] %v4635
        %4706 = vst [vmem:[%s212 + $0x160] sm:$0xff] %v3570
        %4707 = vst [vmem:[%s212 + $0x168] sm:$0xff] %v4638
        %4708 = vst [vmem:[%s212 + $0x170] sm:$0xff] %v3572
        %4709 = vst [vmem:[%s212 + $0x178] sm:$0xff] %v4640
        %4710 = vst [vmem:[%s212 + $0x180] sm:$0xff] %v3575
        %4711 = vst [vmem:[%s212 + $0x188] sm:$0xff] %v4643
        %4712 = vst [vmem:[%s212 + $0x190] sm:$0xff] %v3577
        %4713 = vst [vmem:[%s212 + $0x198] sm:$0xff] %v4645
        %4714 = vst [vmem:[%s212 + $0x1a0] sm:$0xff] %v3580
        %4715 = vst [vmem:[%s212 + $0x1a8] sm:$0xff] %v4648
        %4716 = vst [vmem:[%s212 + $0x1b0] sm:$0xff] %v3582
        %4717 = vst [vmem:[%s212 + $0x1b8] sm:$0xff] %v4650
        %4718 = vst [vmem:[%s212 + $0x1c0] sm:$0xff] %v3585
        %4719 = vst [vmem:[%s212 + $0x1c8] sm:$0xff] %v4653
        %4720 = vst [vmem:[%s212 + $0x1d0] sm:$0xff] %v3587
        %4721 = vst [vmem:[%s212 + $0x1d8] sm:$0xff] %v4655
        %4722 = vst [vmem:[%s212 + $0x1e0] sm:$0xff] %v3590
        %4723 = vst [vmem:[%s212 + $0x1e8] sm:$0xff] %v4658
        %4724 = vst [vmem:[%s212 + $0x1f0] sm:$0xff] %v3592
        %4725 = vst [vmem:[%s212 + $0x1f8] sm:$0xff] %v4660
        %v4726 = vadd.f32 %v3515, %v3517
        %v4727 = vadd.f32 %v4726, %v3520
        %v4728 = vadd.f32 %v4727, %v3522
        %v4729 = vadd.f32 %v4728, %v3525
        %v4730 = vadd.f32 %v4729, %v3527
        %v4731 = vadd.f32 %v4730, %v3530
        %v4732 = vadd.f32 %v4731, %v3532
        %v4733 = vadd.f32 %v4732, %v3535
        %v4734 = vadd.f32 %v4733, %v3537
        %v4735 = vadd.f32 %v4734, %v3540
        %v4736 = vadd.f32 %v4735, %v3542
        %v4737 = vadd.f32 %v4736, %v3545
        %v4738 = vadd.f32 %v4737, %v3547
        %v4739 = vadd.f32 %v4738, %v3550
        %v4740 = vadd.f32 %v4739, %v3552
        %v4741 = vadd.f32 %v4740, %v3555
        %v4742 = vadd.f32 %v4741, %v3557
        %v4743 = vadd.f32 %v4742, %v3560
        %v4744 = vadd.f32 %v4743, %v3562
        %v4745 = vadd.f32 %v4744, %v3565
        %v4746 = vadd.f32 %v4745, %v3567
        %v4747 = vadd.f32 %v4746, %v3570
        %v4748 = vadd.f32 %v4747, %v3572
        %v4749 = vadd.f32 %v4748, %v3575
        %v4750 = vadd.f32 %v4749, %v3577
        %v4751 = vadd.f32 %v4750, %v3580
        %v4752 = vadd.f32 %v4751, %v3582
        %v4753 = vadd.f32 %v4752, %v3585
        %v4754 = vadd.f32 %v4753, %v3587
        %v4755 = vadd.f32 %v4754, %v3590
        %v4756 = vadd.f32 %v4755, %v3592
        %v4757 = vrot.slane %v4756, 4
        %v4758 = vadd.f32 %v4756, %v4757
        %v4759 = vrot.slane %v4758, 2
        %v4760 = vadd.f32 %v4758, %v4759
        %v4761 = vrot.slane %v4760, 1
        %v4762 = vadd.f32 %v4760, %v4761
        %v4763 = vadd.f32 %v4583, %v4585
        %v4764 = vadd.f32 %v4763, %v4588
        %v4765 = vadd.f32 %v4764, %v4590
        %v4766 = vadd.f32 %v4765, %v4593
        %v4767 = vadd.f32 %v4766, %v4595
        %v4768 = vadd.f32 %v4767, %v4598
        %v4769 = vadd.f32 %v4768, %v4600
        %v4770 = vadd.f32 %v4769, %v4603
        %v4771 = vadd.f32 %v4770, %v4605
        %v4772 = vadd.f32 %v4771, %v4608
        %v4773 = vadd.f32 %v4772, %v4610
        %v4774 = vadd.f32 %v4773, %v4613
        %v4775 = vadd.f32 %v4774, %v4615
        %v4776 = vadd.f32 %v4775, %v4618
        %v4777 = vadd.f32 %v4776, %v4620
        %v4778 = vadd.f32 %v4777, %v4623
        %v4779 = vadd.f32 %v4778, %v4625
        %v4780 = vadd.f32 %v4779, %v4628
        %v4781 = vadd.f32 %v4780, %v4630
        %v4782 = vadd.f32 %v4781, %v4633
        %v4783 = vadd.f32 %v4782, %v4635
        %v4784 = vadd.f32 %v4783, %v4638
        %v4785 = vadd.f32 %v4784, %v4640
        %v4786 = vadd.f32 %v4785, %v4643
        %v4787 = vadd.f32 %v4786, %v4645
        %v4788 = vadd.f32 %v4787, %v4648
        %v4789 = vadd.f32 %v4788, %v4650
        %v4790 = vadd.f32 %v4789, %v4653
        %v4791 = vadd.f32 %v4790, %v4655
        %v4792 = vadd.f32 %v4791, %v4658
        %v4793 = vadd.f32 %v4792, %v4660
        %v4794 = vrot.slane %v4793, 4
        %v4795 = vadd.f32 %v4793, %v4794
        %v4796 = vrot.slane %v4795, 2
        %v4797 = vadd.f32 %v4795, %v4796
        %v4798 = vrot.slane %v4797, 1
        %v4799 = vadd.f32 %v4797, %v4798
        %v4800 = vmul.f32 %v3515, %v3515
        %v4801 = vmul.f32 %v4583, %v4583
        %v4802 = vmul.f32 %v3517, %v3517
        %v4803 = vmul.f32 %v4585, %v4585
        %v4804 = vmul.f32 %v3520, %v3520
        %v4805 = vmul.f32 %v4588, %v4588
        %v4806 = vmul.f32 %v3522, %v3522
        %v4807 = vmul.f32 %v4590, %v4590
        %v4808 = vmul.f32 %v3525, %v3525
        %v4809 = vmul.f32 %v4593, %v4593
        %v4810 = vmul.f32 %v3527, %v3527
        %v4811 = vmul.f32 %v4595, %v4595
        %v4812 = vmul.f32 %v3530, %v3530
        %v4813 = vmul.f32 %v4598, %v4598
        %v4814 = vmul.f32 %v3532, %v3532
        %v4815 = vmul.f32 %v4600, %v4600
        %v4816 = vmul.f32 %v3535, %v3535
        %v4817 = vmul.f32 %v4603, %v4603
        %v4818 = vmul.f32 %v3537, %v3537
        %v4819 = vmul.f32 %v4605, %v4605
        %v4820 = vmul.f32 %v3540, %v3540
        %v4821 = vmul.f32 %v4608, %v4608
        %v4822 = vmul.f32 %v3542, %v3542
        %v4823 = vmul.f32 %v4610, %v4610
        %v4824 = vmul.f32 %v3545, %v3545
        %v4825 = vmul.f32 %v4613, %v4613
        %v4826 = vmul.f32 %v3547, %v3547
        %v4827 = vmul.f32 %v4615, %v4615
        %v4828 = vmul.f32 %v3550, %v3550
        %v4829 = vmul.f32 %v4618, %v4618
        %v4830 = vmul.f32 %v3552, %v3552
        %v4831 = vmul.f32 %v4620, %v4620
        %v4832 = vmul.f32 %v3555, %v3555
        %v4833 = vmul.f32 %v4623, %v4623
        %v4834 = vmul.f32 %v3557, %v3557
        %v4835 = vmul.f32 %v4625, %v4625
        %v4836 = vmul.f32 %v3560, %v3560
        %v4837 = vmul.f32 %v4628, %v4628
        %v4838 = vmul.f32 %v3562, %v3562
        %v4839 = vmul.f32 %v4630, %v4630
        %v4840 = vmul.f32 %v3565, %v3565
        %v4841 = vmul.f32 %v4633, %v4633
        %v4842 = vmul.f32 %v3567, %v3567
        %v4843 = vmul.f32 %v4635, %v4635
        %v4844 = vmul.f32 %v3570, %v3570
        %v4845 = vmul.f32 %v4638, %v4638
        %v4846 = vmul.f32 %v3572, %v3572
        %v4847 = vmul.f32 %v4640, %v4640
        %v4848 = vmul.f32 %v3575, %v3575
        %v4849 = vmul.f32 %v4643, %v4643
        %v4850 = vmul.f32 %v3577, %v3577
        %v4851 = vmul.f32 %v4645, %v4645
        %v4852 = vmul.f32 %v3580, %v3580
        %v4853 = vmul.f32 %v4648, %v4648
        %v4854 = vmul.f32 %v3582, %v3582
        %v4855 = vmul.f32 %v4650, %v4650
        %v4856 = vmul.f32 %v3585, %v3585
        %v4857 = vmul.f32 %v4653, %v4653
        %v4858 = vmul.f32 %v3587, %v3587
        %v4859 = vmul.f32 %v4655, %v4655
        %v4860 = vmul.f32 %v3590, %v3590
        %v4861 = vmul.f32 %v4658, %v4658
        %v4862 = vmul.f32 %v3592, %v3592
        %v4863 = vmul.f32 %v4660, %v4660
        %v4864 = vadd.f32 %v4800, %v4802
        %v4865 = vadd.f32 %v4864, %v4804
        %v4866 = vadd.f32 %v4865, %v4806
        %v4867 = vadd.f32 %v4866, %v4808
        %v4868 = vadd.f32 %v4867, %v4810
        %v4869 = vadd.f32 %v4868, %v4812
        %v4870 = vadd.f32 %v4869, %v4814
        %v4871 = vadd.f32 %v4870, %v4816
        %v4872 = vadd.f32 %v4871, %v4818
        %v4873 = vadd.f32 %v4872, %v4820
        %v4874 = vadd.f32 %v4873, %v4822
        %v4875 = vadd.f32 %v4874, %v4824
        %v4876 = vadd.f32 %v4875, %v4826
        %v4877 = vadd.f32 %v4876, %v4828
        %v4878 = vadd.f32 %v4877, %v4830
        %v4879 = vadd.f32 %v4878, %v4832
        %v4880 = vadd.f32 %v4879, %v4834
        %v4881 = vadd.f32 %v4880, %v4836
        %v4882 = vadd.f32 %v4881, %v4838
        %v4883 = vadd.f32 %v4882, %v4840
        %v4884 = vadd.f32 %v4883, %v4842
        %v4885 = vadd.f32 %v4884, %v4844
        %v4886 = vadd.f32 %v4885, %v4846
        %v4887 = vadd.f32 %v4886, %v4848
        %v4888 = vadd.f32 %v4887, %v4850
        %v4889 = vadd.f32 %v4888, %v4852
        %v4890 = vadd.f32 %v4889, %v4854
        %v4891 = vadd.f32 %v4890, %v4856
        %v4892 = vadd.f32 %v4891, %v4858
        %v4893 = vadd.f32 %v4892, %v4860
        %v4894 = vadd.f32 %v4893, %v4862
        %v4895 = vrot.slane %v4894, 4
        %v4896 = vadd.f32 %v4894, %v4895
        %v4897 = vrot.slane %v4896, 2
        %v4898 = vadd.f32 %v4896, %v4897
        %v4899 = vrot.slane %v4898, 1
        %v4900 = vadd.f32 %v4898, %v4899
        %v4901 = vadd.f32 %v4801, %v4803
        %v4902 = vadd.f32 %v4901, %v4805
        %v4903 = vadd.f32 %v4902, %v4807
        %v4904 = vadd.f32 %v4903, %v4809
        %v4905 = vadd.f32 %v4904, %v4811
        %v4906 = vadd.f32 %v4905, %v4813
        %v4907 = vadd.f32 %v4906, %v4815
        %v4908 = vadd.f32 %v4907, %v4817
        %v4909 = vadd.f32 %v4908, %v4819
        %v4910 = vadd.f32 %v4909, %v4821
        %v4911 = vadd.f32 %v4910, %v4823
        %v4912 = vadd.f32 %v4911, %v4825
        %v4913 = vadd.f32 %v4912, %v4827
        %v4914 = vadd.f32 %v4913, %v4829
        %v4915 = vadd.f32 %v4914, %v4831
        %v4916 = vadd.f32 %v4915, %v4833
        %v4917 = vadd.f32 %v4916, %v4835
        %v4918 = vadd.f32 %v4917, %v4837
        %v4919 = vadd.f32 %v4918, %v4839
        %v4920 = vadd.f32 %v4919, %v4841
        %v4921 = vadd.f32 %v4920, %v4843
        %v4922 = vadd.f32 %v4921, %v4845
        %v4923 = vadd.f32 %v4922, %v4847
        %v4924 = vadd.f32 %v4923, %v4849
        %v4925 = vadd.f32 %v4924, %v4851
        %v4926 = vadd.f32 %v4925, %v4853
        %v4927 = vadd.f32 %v4926, %v4855
        %v4928 = vadd.f32 %v4927, %v4857
        %v4929 = vadd.f32 %v4928, %v4859
        %v4930 = vadd.f32 %v4929, %v4861
        %v4931 = vadd.f32 %v4930, %v4863
        %v4932 = vrot.slane %v4931, 4
        %v4933 = vadd.f32 %v4931, %v4932
        %v4934 = vrot.slane %v4933, 2
        %v4935 = vadd.f32 %v4933, %v4934
        %v4936 = vrot.slane %v4935, 1
        %v4937 = vadd.f32 %v4935, %v4936
        %vm4938 = vcmask 1040384
        %v4939 = vsel %vm4938, %v4762, %v4900
        %v4940 = vsel %vm4938, %v4799, %v4937
        %v4943 = vrot.slane %v4940, 6
        %vm4944 = vcmask 1041408
        %v4945 = vsel %vm4944, %v4939, %v4943
        %4947 = vst [vmem:[%s219] sm:$0xf] %v4945
        %s4948 = sand.u32 %s80, 1
        %s4949 = scalar_lea.sflag [#allocation4], %s4948
        %s4950 = sand.u32 %s80, 1
        %s4951 = smul.addr %s4950, 512
        %s4952 = scalar_lea.vmem [#allocation7], %s4951
        %s4953 = sand.u32 %s106, 1
        %s4954 = scalar_lea.sflag [#allocation9], %s4953
        %s4955 = sand.u32 %s106, 1
        %s4956 = smul.addr %s4955, 4
        %s4957 = scalar_lea.vmem [#allocation8], %s4956
        // Predicated region
        $region37: #{tpu_custom_call.1} parent=27 // pred_check
          %p4958 = pneg %p90
        $region38: #{tpu_custom_call.1} parent=27 // pred_check_branch
          %4960 = sbr.rel (%p4958) target = $region40
        $region39: #{tpu_custom_call.1} parent=27 // pred_region
          %s4961 = smul.u32 32, %s25
          %4963 = vsyncadd %s4949, 0
          %s4964 = smul.addr %s4961, 2
          %s4965 = smul.addr %s4964, 8
          %s4966 = scalar_lea.hbm %s2, %s4965
          %s4967 = sshll.u32 %s4952, 4
          %s4968 = int_to_ptr.vmem [resolvable:$true] %s4967
          %s4969 = sshll.u32 %s4966, 4
          %s4970 = int_to_ptr.hbm [resolvable:$true] %s4969
          %4975 = dma.vmem_to_hbm [thread:$0]  %s4968, 8192, %s4970, %s4949, 256, 256, 16
        $region40: #{tpu_custom_call.1} parent=27 // pred_fallthru
          _
        // Predicated region
        $region41: #{tpu_custom_call.1} parent=27 // pred_check
          %p4976 = pneg %p116
        $region42: #{tpu_custom_call.1} parent=27 // pred_check_branch
          %4978 = sbr.rel (%p4976) target = $region44
        $region43: #{tpu_custom_call.1} parent=27 // pred_region
          %4980 = vsyncadd %s4954, 0
          %s4981 = smul.addr %s25, 2
          %s4982 = smul.addr %s4981, 2
          %s4983 = scalar_lea.hbm %s3, %s4982
          %s4985 = sshll.u32 %s4957, 4
          %s4986 = int_to_ptr.vmem [resolvable:$true] %s4985
          %s4987 = sshll.u32 %s4983, 4
          %s4988 = int_to_ptr.hbm [resolvable:$true] %s4987
          %4990 = dma.vmem_to_hbm [thread:$0]  %s4986, 64, %s4988, %s4954
        $region44: #{tpu_custom_call.1} parent=27 // pred_fallthru
          _
      $region28: #{tpu_custom_call.1} parent=5 // pred_fallthru
        _
      %p4991 = scmp.le.s32.totalorder 2, %s20
      // Predicated region
      $region45: #{tpu_custom_call.1} parent=5 // pred_check
        %p4992 = pneg %p4991
      $region46: #{tpu_custom_call.1} parent=5 // pred_check_branch
        %4994 = sbr.rel (%p4992) target = $region48
      $region47: #{tpu_custom_call.1} parent=5 // pred_region
        %s4995 = ssub.s32 %s20, 2
        // Predicated region
        $region49: #{tpu_custom_call.1} parent=47 // pred_check
          %p4996 = pneg %p96
        $region50: #{tpu_custom_call.1} parent=47 // pred_check_branch
          %4998 = sbr.rel (%p4996) target = $region52
        $region51: #{tpu_custom_call.1} parent=47 // pred_region
          %s4999 = sand.u32 %s81, 1
          %s5000 = scalar_lea.sflag [#allocation4], %s4999
          %s5001 = sand.u32 %s81, 1
          %s5002 = smul.addr %s5001, 512
          %s5003 = scalar_lea.vmem [#allocation7], %s5002
          %5005 = dma.done %s5000, 8192
        $region52: #{tpu_custom_call.1} parent=47 // pred_fallthru
          _
        // Predicated region
        $region53: #{tpu_custom_call.1} parent=47 // pred_check
          %p5006 = pneg %p122
        $region54: #{tpu_custom_call.1} parent=47 // pred_check_branch
          %5008 = sbr.rel (%p5006) target = $region56
        $region55: #{tpu_custom_call.1} parent=47 // pred_region
          %s5009 = sand.u32 %s107, 1
          %s5010 = scalar_lea.sflag [#allocation9], %s5009
          %s5011 = sand.u32 %s107, 1
          %s5012 = smul.addr %s5011, 4
          %s5013 = scalar_lea.vmem [#allocation8], %s5012
          %5015 = dma.done %s5010, 64
        $region56: #{tpu_custom_call.1} parent=47 // pred_fallthru
          _
      $region48: #{tpu_custom_call.1} parent=5 // pred_fallthru
        _
    $region6: #{tpu_custom_call.1} parent=1 // loop_footer
      %s24 = sadd.s32 1, %s20
    $region7: #{tpu_custom_call.1} parent=1 // loop_footer_branch
      %19 = sbr.rel target = $region3
    $region8: #{tpu_custom_call.1} parent=1 // loop_exit
      _
    %5016 = vsyncpa [#allocation3], 1
    %s5017 = scalar_lea.sflag [#allocation3], 1
    %5018 = vsyncpa %s5017, 1
    %5019 = vsyncpa [#allocation6], 1
    %5020 = vsyncpa [#allocation4], 1
    %s5021 = scalar_lea.sflag [#allocation4], 1
    %5022 = vsyncpa %s5021, 1
    %5023 = vsyncpa [#allocation9], 1
    %s5024 = scalar_lea.sflag [#allocation9], 1
    %5025 = vsyncpa %s5024, 1

</llo_original>
